<compile_context>
chip_gen: v6e
topology: v6e:2x2x1
jax: 0.10.0
libtpu: 0.0.40
codegen_flags: <defaults>
</compile_context>

<pallas_src>
import functools

import jax
import jax.numpy as jnp
from jax import lax
from jax.experimental import pallas as pl
from jax.experimental.pallas import tpu as pltpu

_BN_EPS = 1e-5


# ------------------------------ Pallas kernel ------------------------------ #

def _make_res_bottleneck_kernel(W, L, C1, pad):
    def kernel(x_ref, w1_ref, b1_ref, w2_ref, b2_ref, w3_ref, b3_ref,
               ml_ref, mr_ref, mt_ref, mb_ref, o_ref, z_ref, p_ref):
        # x_ref : (1, C, L)      input / residual, L = B*H*W on the lane axis (bf16)
        # w1_ref: (C1, C)        conv1 1x1 weight^T, BN1 scale folded in (bf16)
        # b1_ref: (C1, 1)        BN1 shift (f32)
        # w2_ref: (C1, 9*C1)     conv2 3x3 weight, im2col layout, BN2 folded (bf16)
        # b2_ref: (C1, 1)        BN2 shift (f32)
        # w3_ref: (C, C1)        conv3 1x1 weight^T, BN3 scale folded in (bf16)
        # b3_ref: (C, 1)         BN3 shift (f32)
        # ml/mr/mt/mb: (1, L)    0/1 boundary masks (left/right col, top/bottom row)
        # o_ref : (1, C, L)      output (lane-dense, bf16)
        # z_ref : (C1, L+2*pad)  VMEM scratch: padded stage-1 activation (bf16)
        # p_ref : (9*C1, L)      VMEM scratch: im2col patch matrix (bf16)

        # ---- stage 1: 1x1 conv + BN + ReLU (one bf16 MXU matmul, f32 accum) ----
        y1 = jnp.dot(w1_ref[...], x_ref[0], preferred_element_type=jnp.float32)
        y1 = jnp.maximum(y1 + b1_ref[...], 0.0)                    # (C1, L) f32

        # ---- stage 2: 3x3 conv (pad=1) as ONE im2col matmul, K = 9*C1 ----
        # zero only the halo lane blocks; the centre is fully overwritten below
        z_ref[:, :pad] = jnp.zeros((C1, pad), z_ref.dtype)
        z_ref[:, pad + L:pad + L + pad] = jnp.zeros((C1, pad), z_ref.dtype)
        z_ref[:, pad:pad + L] = y1.astype(z_ref.dtype)             # lane-aligned store

        ml = ml_ref[...]
        mr = mr_ref[...]
        mt = mt_ref[...]
        mb = mb_ref[...]
        for t in range(9):                                         # static unroll
            dy = t // 3 - 1
            dx = t % 3 - 1
            off = dy * W + dx
            v = z_ref[:, pad + off:pad + off + L]                  # shifted lane view
            if dy == -1:
                v = v * mt                                         # no across-image/row leak
            elif dy == 1:
                v = v * mb
            if dx == -1:
                v = v * ml
            elif dx == 1:
                v = v * mr
            p_ref[t * C1:(t + 1) * C1, :] = v                      # im2col row block
        y2 = jnp.dot(w2_ref[...], p_ref[...], preferred_element_type=jnp.float32)
        y2 = jnp.maximum(y2 + b2_ref[...], 0.0)                    # (C1, L) f32

        # ---- stage 3: 1x1 conv + BN, residual add, ReLU ----
        y3 = jnp.dot(w3_ref[...], y2.astype(w3_ref.dtype),
                     preferred_element_type=jnp.float32)
        out = jnp.maximum(y3 + b3_ref[...] + x_ref[0].astype(jnp.float32), 0.0)
        o_ref[0] = out.astype(o_ref.dtype)

    return kernel


def res_bottleneck_pallas(xb, H, W, w1t, b1, w2t, b2, w3t, b3, ml, mr, mt, mb):
    G, C, L = xb.shape
    C1 = w1t.shape[0]
    pad = max(128, ((W + 1 + 127) // 128) * 128)       # lane-aligned halo >= W+1
    kernel = _make_res_bottleneck_kernel(W, L, C1, pad)
    return pl.pallas_call(
        kernel,
        out_shape=jax.ShapeDtypeStruct((G, C, L), xb.dtype),
        grid_spec=pltpu.PrefetchScalarGridSpec(
            num_scalar_prefetch=0,
            grid=(G,),
            in_specs=[
                pl.BlockSpec((1, C, L), lambda g: (g, 0, 0)),
                pl.BlockSpec((C1, C), lambda g: (0, 0)),
                pl.BlockSpec((C1, 1), lambda g: (0, 0)),
                pl.BlockSpec((C1, 9 * C1), lambda g: (0, 0)),
                pl.BlockSpec((C1, 1), lambda g: (0, 0)),
                pl.BlockSpec((C, C1), lambda g: (0, 0)),
                pl.BlockSpec((C, 1), lambda g: (0, 0)),
                pl.BlockSpec((1, L), lambda g: (0, 0)),
                pl.BlockSpec((1, L), lambda g: (0, 0)),
                pl.BlockSpec((1, L), lambda g: (0, 0)),
                pl.BlockSpec((1, L), lambda g: (0, 0)),
            ],
            out_specs=pl.BlockSpec((1, C, L), lambda g: (g, 0, 0)),
            scratch_shapes=[
                pltpu.VMEM((C1, L + 2 * pad), xb.dtype),
                pltpu.VMEM((9 * C1, L), xb.dtype),
            ],
        ),
        compiler_params=pltpu.CompilerParams(
            dimension_semantics=("parallel",),
            vmem_limit_bytes=32 * 1024 * 1024),
    )(xb, w1t, b1, w2t, b2, w3t, b3, ml, mr, mt, mb)


# --------------------------- params & host wrapper --------------------------- #

def init_params(key, in_ch, out_ch, dtype=jnp.float32):
    exp_ch = out_ch * 4

    def bn_params(k, c):
        k1, k2, k3, k4 = jax.random.split(k, 4)
        gamma = 1.0 + 0.1 * jax.random.normal(k1, (c,), dtype)
        beta = 0.1 * jax.random.normal(k2, (c,), dtype)
        mean = 0.1 * jax.random.normal(k3, (c,), dtype)
        var = jax.random.uniform(k4, (c,), dtype, minval=0.5, maxval=1.5)
        return (gamma, beta, mean, var)

    ks = jax.random.split(key, 6)
    return {
        "w1": 0.05 * jax.random.normal(ks[0], (in_ch, out_ch), dtype),         # 1x1 (Cin,Cout)
        "bn1": bn_params(ks[1], out_ch),
        "w2": 0.05 * jax.random.normal(ks[2], (3, 3, out_ch, out_ch), dtype),  # 3x3 HWIO
        "bn2": bn_params(ks[3], out_ch),
        "w3": 0.05 * jax.random.normal(ks[4], (out_ch, exp_ch), dtype),        # 1x1 (Cin,Cout)
        "bn3": bn_params(ks[5], exp_ch),
    }


def _fold_bn(w, bn):
    # conv has bias=False, so BN(conv(x)) == conv(x) * scale + shift; fold scale into w.
    gamma, beta, mean, var = bn
    s = gamma * lax.rsqrt(var + _BN_EPS)
    return w * s, beta - mean * s


def _pick_batch_block(N, P, target_lanes=512):
    """Fold batch images onto the lane axis up to ~target_lanes per grid step while
    keeping the parallel grid extent >= 2 so both v7x TensorCores get work."""
    bb = max(1, min(N, target_lanes // max(P, 1)))
    while bb > 1 and (N // bb < 2 or N % bb != 0):
        bb -= 1
    return bb


def prepare_params(params, H, W, batch_block, compute_dtype=jnp.bfloat16):
    """One-time prep (do NOT run per forward): fold BN into conv weights, lay out
    for channels-on-sublanes, cast MXU operands to bf16, build boundary masks."""
    w1f, b1 = _fold_bn(params["w1"], params["bn1"])      # (C, C1), (C1,)
    w2f, b2 = _fold_bn(params["w2"], params["bn2"])      # (3,3,C1,C1), (C1,)
    w3f, b3 = _fold_bn(params["w3"], params["bn3"])      # (C1, C), (C,)
    C, C1 = w1f.shape
    assert w3f.shape[1] == C, "residual path needs in_ch == out_ch * expansion (downsample=None)"

    P = H * W
    L = batch_block * P
    w1t = w1f.T.astype(compute_dtype)                                        # (C1, C)
    w2t = (jnp.transpose(w2f.reshape(9, C1, C1), (2, 0, 1))
           .reshape(C1, 9 * C1).astype(compute_dtype))                       # (C1, 9*C1)
    w3t = w3f.T.astype(compute_dtype)                                        # (C, C1)

    q = jnp.arange(L, dtype=jnp.int32) % P
    col = q % W
    row = q // W
    mk = lambda m: m.astype(compute_dtype).reshape(1, L)
    return {
        "w1t": w1t, "b1": b1.reshape(C1, 1).astype(jnp.float32),
        "w2t": w2t, "b2": b2.reshape(C1, 1).astype(jnp.float32),
        "w3t": w3t, "b3": b3.reshape(C, 1).astype(jnp.float32),
        "ml": mk(col != 0), "mr": mk(col != W - 1),
        "mt": mk(row != 0), "mb": mk(row != H - 1),
    }


def res_bottleneck_forward(prep, x_nchw, *, batch_block):
    N, C, H, W = x_nchw.shape
    P = H * W
    B = batch_block
    assert N % B == 0
    G = N // B
    L = B * P
    cd = prep["w1t"].dtype
    # NCHW -> (G, C, B*H*W): batch sub-block folded onto the lane axis (layout plumbing)
    xb = (x_nchw.reshape(G, B, C, P).transpose(0, 2, 1, 3)
          .reshape(G, C, L).astype(cd))
    y = res_bottleneck_pallas(xb, H, W, prep["w1t"], prep["b1"], prep["w2t"],
                              prep["b2"], prep["w3t"], prep["b3"],
                              prep["ml"], prep["mr"], prep["mt"], prep["mb"])
    return (y.reshape(G, C, B, P).transpose(0, 2, 1, 3).reshape(N, C, H, W))


# --------------------------------- references --------------------------------- #

def res_bottleneck_matmul_reference(prep, x_nchw):
    """Plain-XLA mirror of the kernel math (same bf16 operand quantization, f32 accum)."""
    N, C, H, W = x_nchw.shape
    P = H * W
    cd = prep["w1t"].dtype
    C1 = prep["w1t"].shape[0]
    x = x_nchw.reshape(N, C, P).astype(cd)
    y1 = jnp.einsum("oc,ncp->nop", prep["w1t"], x, preferred_element_type=jnp.float32)
    y1 = jnp.maximum(y1 + prep["b1"][None], 0.0)
    y1 = y1.astype(cd).reshape(N, C1, H, W)
    y1p = jnp.pad(y1, ((0, 0), (0, 0), (1, 1), (1, 1)))
    taps = [y1p[:, :, dy:dy + H, dx:dx + W].reshape(N, C1, P)
            for dy in range(3) for dx in range(3)]
    patches = jnp.concatenate(taps, axis=1)                      # (N, 9*C1, P)
    y2 = jnp.einsum("ok,nkp->nop", prep["w2t"], patches, preferred_element_type=jnp.float32)
    y2 = jnp.maximum(y2 + prep["b2"][None], 0.0)
    y3 = jnp.einsum("oc,ncp->nop", prep["w3t"], y2.astype(cd),
                    preferred_element_type=jnp.float32)
    out = jnp.maximum(y3 + prep["b3"][None] + x.astype(jnp.float32), 0.0)
    return out.reshape(N, C, H, W)


def res_bottleneck_reference(params, x_nchw):
    """Full f32 reference matching the PyTorch module (inference-mode BN)."""
    x = jnp.transpose(x_nchw, (0, 2, 3, 1))          # NHWC

    def bn(y, p):
        gamma, beta, mean, var = p
        return (y - mean) * (gamma * lax.rsqrt(var + _BN_EPS)) + beta

    def conv(y, w, pad):
        return lax.conv_general_dilated(
            y, w, (1, 1), [(pad, pad), (pad, pad)],
            dimension_numbers=("NHWC", "HWIO", "NHWC"),
            precision=lax.Precision.HIGHEST)

    out = jnp.maximum(bn(conv(x, params["w1"][None, None], 0), params["bn1"]), 0.0)
    out = jnp.maximum(bn(conv(out, params["w2"], 1), params["bn2"]), 0.0)
    out = bn(conv(out, params["w3"][None, None], 0), params["bn3"])
    out = jnp.maximum(out + x, 0.0)                  # residual + ReLU
    return jnp.transpose(out, (0, 3, 1, 2))


# ------------------------------------ main ------------------------------------ #

if __name__ == "__main__":
    key = jax.random.PRNGKey(0)
    k_p, k_x = jax.random.split(key)

    out_ch = 32
    in_ch = out_ch * 4            # residual path needs in_ch == out_ch * expansion(=4)
    N, H, W = 4, 16, 16

    params = init_params(k_p, in_ch, out_ch)
    x = jax.random.normal(k_x, (N, in_ch, H, W), jnp.float32)   # NCHW

    bb = _pick_batch_block(N, H * W)                 # -> 2 here: grid=(2,), 512 lanes/step
    prep = prepare_params(params, H, W, bb)          # one-time weight/mask prep

    fwd = jax.jit(functools.partial(res_bottleneck_forward, batch_block=bb))
    out = jax.block_until_ready(fwd(prep, x))
    assert out.shape == (N, in_ch, H, W), out.shape
    out_f32 = out.astype(jnp.float32)

    # tight check vs a plain-XLA mirror with identical bf16 operand quantization
    ref_q = res_bottleneck_matmul_reference(prep, x)
    err_q = float(jnp.max(jnp.abs(out_f32 - ref_q)))
    assert jnp.allclose(out_f32, ref_q, atol=2e-2, rtol=2e-2), err_q

    # loose semantic check vs the full f32 module reference (bf16 operand path)
    ref_f = res_bottleneck_reference(params, x)
    err_f = float(jnp.max(jnp.abs(out_f32 - ref_f)))
    assert jnp.allclose(out_f32, ref_f, atol=1e-1, rtol=1e-1), err_f

    print("KERNEL_OK")
</pallas_src>

<mosaic_0001>
module attributes {stable_mosaic.version = 11 : i64} {
  func.func @kernel(%arg0: i32, %arg1: memref<1x128x512xbf16, #tpu.memory_space<vmem>>, %arg2: memref<32x128xbf16, #tpu.memory_space<vmem>>, %arg3: memref<32x1xf32, #tpu.memory_space<vmem>>, %arg4: memref<32x288xbf16, #tpu.memory_space<vmem>>, %arg5: memref<32x1xf32, #tpu.memory_space<vmem>>, %arg6: memref<128x32xbf16, #tpu.memory_space<vmem>>, %arg7: memref<128x1xf32, #tpu.memory_space<vmem>>, %arg8: memref<1x512xbf16, #tpu.memory_space<vmem>>, %arg9: memref<1x512xbf16, #tpu.memory_space<vmem>>, %arg10: memref<1x512xbf16, #tpu.memory_space<vmem>>, %arg11: memref<1x512xbf16, #tpu.memory_space<vmem>>, %arg12: memref<1x128x512xbf16, #tpu.memory_space<vmem>>, %arg13: memref<32x768xbf16, #tpu.memory_space<vmem>>, %arg14: memref<288x512xbf16, #tpu.memory_space<vmem>>) attributes {dimension_semantics = [#tpu.dimension_semantics<parallel>], iteration_bounds = array<i64: 2>, scalar_prefetch = 0 : i64, scratch_operands = 2 : i64, tpu.core_type = #tpu.core_type<tc>, window_params = [{transform_indices = @transform_0, window_bounds = array<i64: 1, 128, 512>}, {pipeline_mode = #tpu.pipeline_mode<synchronous>, transform_indices = @transform_1, window_bounds = array<i64: 32, 128>}, {pipeline_mode = #tpu.pipeline_mode<synchronous>, transform_indices = @transform_2, window_bounds = array<i64: 32, 1>}, {pipeline_mode = #tpu.pipeline_mode<synchronous>, transform_indices = @transform_3, window_bounds = array<i64: 32, 288>}, {pipeline_mode = #tpu.pipeline_mode<synchronous>, transform_indices = @transform_4, window_bounds = array<i64: 32, 1>}, {pipeline_mode = #tpu.pipeline_mode<synchronous>, transform_indices = @transform_5, window_bounds = array<i64: 128, 32>}, {pipeline_mode = #tpu.pipeline_mode<synchronous>, transform_indices = @transform_6, window_bounds = array<i64: 128, 1>}, {pipeline_mode = #tpu.pipeline_mode<synchronous>, transform_indices = @transform_7, window_bounds = array<i64: 1, 512>}, {pipeline_mode = #tpu.pipeline_mode<synchronous>, transform_indices = @transform_8, window_bounds = array<i64: 1, 512>}, {pipeline_mode = #tpu.pipeline_mode<synchronous>, transform_indices = @transform_9, window_bounds = array<i64: 1, 512>}, {pipeline_mode = #tpu.pipeline_mode<synchronous>, transform_indices = @transform_10, window_bounds = array<i64: 1, 512>}, {transform_indices = @transform_11, window_bounds = array<i64: 1, 128, 512>}]} {
    %c0 = arith.constant 0 : index
    %c0_0 = arith.constant 0 : index
    %0 = vector.load %arg2[%c0, %c0_0] : memref<32x128xbf16, #tpu.memory_space<vmem>>, vector<32x128xbf16>
    %c0_1 = arith.constant 0 : index
    %c0_2 = arith.constant 0 : index
    %c0_3 = arith.constant 0 : index
    %1 = vector.load %arg1[%c0_1, %c0_2, %c0_3] : memref<1x128x512xbf16, #tpu.memory_space<vmem>>, vector<1x128x512xbf16>
    %2 = vector.shape_cast %1 : vector<1x128x512xbf16> to vector<128x512xbf16>
    %cst = arith.constant dense<0.000000e+00> : vector<32x512xf32>
    %3 = tpu.matmul %0, %2, %cst {dimension_numbers = #tpu.dot_dimension_numbers<[1], [0], [0], [1], [0, 0, 1, 1], [], []>} : vector<32x128xbf16>, vector<128x512xbf16>, vector<32x512xf32> -> vector<32x512xf32>
    %c0_4 = arith.constant 0 : index
    %c0_5 = arith.constant 0 : index
    %4 = vector.load %arg3[%c0_4, %c0_5] : memref<32x1xf32, #tpu.memory_space<vmem>>, vector<32x1xf32>
    %5 = vector.broadcast %4 : vector<32x1xf32> to vector<32x512xf32>
    %6 = arith.addf %3, %5 : vector<32x512xf32>
    %cst_6 = arith.constant 0.000000e+00 : f32
    %7 = vector.broadcast %cst_6 : f32 to vector<32x512xf32>
    %8 = arith.maximumf %6, %7 : vector<32x512xf32>
    %cst_7 = arith.constant 0.000000e+00 : bf16
    %9 = vector.broadcast %cst_7 : bf16 to vector<32x128xbf16>
    %c0_8 = arith.constant 0 : index
    %c0_9 = arith.constant 0 : index
    %10 = vector.load %arg13[%c0_8, %c0_9] : memref<32x768xbf16, #tpu.memory_space<vmem>>, vector<32x128xbf16>
    tpu.vector_store %arg13[%c0_8, %c0_9], %9 {strides = array<i32>} : memref<32x768xbf16, #tpu.memory_space<vmem>>, vector<32x128xbf16>,
    %cst_10 = arith.constant 0.000000e+00 : bf16
    %11 = vector.broadcast %cst_10 : bf16 to vector<32x128xbf16>
    %c0_11 = arith.constant 0 : index
    %c640 = arith.constant 640 : index
    %12 = vector.load %arg13[%c0_11, %c640] : memref<32x768xbf16, #tpu.memory_space<vmem>>, vector<32x128xbf16>
    tpu.vector_store %arg13[%c0_11, %c640], %11 {strides = array<i32>} : memref<32x768xbf16, #tpu.memory_space<vmem>>, vector<32x128xbf16>,
    %13 = arith.truncf %8 : vector<32x512xf32> to vector<32x512xbf16>
    %c0_12 = arith.constant 0 : index
    %c128 = arith.constant 128 : index
    %14 = vector.load %arg13[%c0_12, %c128] : memref<32x768xbf16, #tpu.memory_space<vmem>>, vector<32x512xbf16>
    tpu.vector_store %arg13[%c0_12, %c128], %13 {strides = array<i32>} : memref<32x768xbf16, #tpu.memory_space<vmem>>, vector<32x512xbf16>,
    %c0_13 = arith.constant 0 : index
    %c0_14 = arith.constant 0 : index
    %15 = vector.load %arg8[%c0_13, %c0_14] : memref<1x512xbf16, #tpu.memory_space<vmem>>, vector<1x512xbf16>
    %c0_15 = arith.constant 0 : index
    %c0_16 = arith.constant 0 : index
    %16 = vector.load %arg9[%c0_15, %c0_16] : memref<1x512xbf16, #tpu.memory_space<vmem>>, vector<1x512xbf16>
    %c0_17 = arith.constant 0 : index
    %c0_18 = arith.constant 0 : index
    %17 = vector.load %arg10[%c0_17, %c0_18] : memref<1x512xbf16, #tpu.memory_space<vmem>>, vector<1x512xbf16>
    %c0_19 = arith.constant 0 : index
    %c0_20 = arith.constant 0 : index
    %18 = vector.load %arg11[%c0_19, %c0_20] : memref<1x512xbf16, #tpu.memory_space<vmem>>, vector<1x512xbf16>
    %c0_21 = arith.constant 0 : index
    %c111 = arith.constant 111 : index
    %19 = vector.load %arg13[%c0_21, %c111] : memref<32x768xbf16, #tpu.memory_space<vmem>>, vector<32x512xbf16>
    %20 = vector.broadcast %17 : vector<1x512xbf16> to vector<32x512xbf16>
    %21 = arith.mulf %19, %20 : vector<32x512xbf16>
    %22 = vector.broadcast %15 : vector<1x512xbf16> to vector<32x512xbf16>
    %23 = arith.mulf %21, %22 : vector<32x512xbf16>
    %c0_22 = arith.constant 0 : index
    %c0_23 = arith.constant 0 : index
    %24 = vector.load %arg14[%c0_22, %c0_23] : memref<288x512xbf16, #tpu.memory_space<vmem>>, vector<32x512xbf16>
    tpu.vector_store %arg14[%c0_22, %c0_23], %23 {strides = array<i32>} : memref<288x512xbf16, #tpu.memory_space<vmem>>, vector<32x512xbf16>,
    %c0_24 = arith.constant 0 : index
    %c112 = arith.constant 112 : index
    %25 = vector.load %arg13[%c0_24, %c112] : memref<32x768xbf16, #tpu.memory_space<vmem>>, vector<32x512xbf16>
    %26 = vector.broadcast %17 : vector<1x512xbf16> to vector<32x512xbf16>
    %27 = arith.mulf %25, %26 : vector<32x512xbf16>
    %c32 = arith.constant 32 : index
    %c0_25 = arith.constant 0 : index
    %28 = vector.load %arg14[%c32, %c0_25] : memref<288x512xbf16, #tpu.memory_space<vmem>>, vector<32x512xbf16>
    tpu.vector_store %arg14[%c32, %c0_25], %27 {strides = array<i32>} : memref<288x512xbf16, #tpu.memory_space<vmem>>, vector<32x512xbf16>,
    %c0_26 = arith.constant 0 : index
    %c113 = arith.constant 113 : index
    %29 = vector.load %arg13[%c0_26, %c113] : memref<32x768xbf16, #tpu.memory_space<vmem>>, vector<32x512xbf16>
    %30 = vector.broadcast %17 : vector<1x512xbf16> to vector<32x512xbf16>
    %31 = arith.mulf %29, %30 : vector<32x512xbf16>
    %32 = vector.broadcast %16 : vector<1x512xbf16> to vector<32x512xbf16>
    %33 = arith.mulf %31, %32 : vector<32x512xbf16>
    %c64 = arith.constant 64 : index
    %c0_27 = arith.constant 0 : index
    %34 = vector.load %arg14[%c64, %c0_27] : memref<288x512xbf16, #tpu.memory_space<vmem>>, vector<32x512xbf16>
    tpu.vector_store %arg14[%c64, %c0_27], %33 {strides = array<i32>} : memref<288x512xbf16, #tpu.memory_space<vmem>>, vector<32x512xbf16>,
    %c0_28 = arith.constant 0 : index
    %c127 = arith.constant 127 : index
    %35 = vector.load %arg13[%c0_28, %c127] : memref<32x768xbf16, #tpu.memory_space<vmem>>, vector<32x512xbf16>
    %36 = vector.broadcast %15 : vector<1x512xbf16> to vector<32x512xbf16>
    %37 = arith.mulf %35, %36 : vector<32x512xbf16>
    %c96 = arith.constant 96 : index
    %c0_29 = arith.constant 0 : index
    %38 = vector.load %arg14[%c96, %c0_29] : memref<288x512xbf16, #tpu.memory_space<vmem>>, vector<32x512xbf16>
    tpu.vector_store %arg14[%c96, %c0_29], %37 {strides = array<i32>} : memref<288x512xbf16, #tpu.memory_space<vmem>>, vector<32x512xbf16>,
    %c0_30 = arith.constant 0 : index
    %c128_31 = arith.constant 128 : index
    %39 = vector.load %arg13[%c0_30, %c128_31] : memref<32x768xbf16, #tpu.memory_space<vmem>>, vector<32x512xbf16>
    %c128_32 = arith.constant 128 : index
    %c0_33 = arith.constant 0 : index
    %40 = vector.load %arg14[%c128_32, %c0_33] : memref<288x512xbf16, #tpu.memory_space<vmem>>, vector<32x512xbf16>
    tpu.vector_store %arg14[%c128_32, %c0_33], %39 {strides = array<i32>} : memref<288x512xbf16, #tpu.memory_space<vmem>>, vector<32x512xbf16>,
    %c0_34 = arith.constant 0 : index
    %c129 = arith.constant 129 : index
    %41 = vector.load %arg13[%c0_34, %c129] : memref<32x768xbf16, #tpu.memory_space<vmem>>, vector<32x512xbf16>
    %42 = vector.broadcast %16 : vector<1x512xbf16> to vector<32x512xbf16>
    %43 = arith.mulf %41, %42 : vector<32x512xbf16>
    %c160 = arith.constant 160 : index
    %c0_35 = arith.constant 0 : index
    %44 = vector.load %arg14[%c160, %c0_35] : memref<288x512xbf16, #tpu.memory_space<vmem>>, vector<32x512xbf16>
    tpu.vector_store %arg14[%c160, %c0_35], %43 {strides = array<i32>} : memref<288x512xbf16, #tpu.memory_space<vmem>>, vector<32x512xbf16>,
    %c0_36 = arith.constant 0 : index
    %c143 = arith.constant 143 : index
    %45 = vector.load %arg13[%c0_36, %c143] : memref<32x768xbf16, #tpu.memory_space<vmem>>, vector<32x512xbf16>
    %46 = vector.broadcast %18 : vector<1x512xbf16> to vector<32x512xbf16>
    %47 = arith.mulf %45, %46 : vector<32x512xbf16>
    %48 = vector.broadcast %15 : vector<1x512xbf16> to vector<32x512xbf16>
    %49 = arith.mulf %47, %48 : vector<32x512xbf16>
    %c192 = arith.constant 192 : index
    %c0_37 = arith.constant 0 : index
    %50 = vector.load %arg14[%c192, %c0_37] : memref<288x512xbf16, #tpu.memory_space<vmem>>, vector<32x512xbf16>
    tpu.vector_store %arg14[%c192, %c0_37], %49 {strides = array<i32>} : memref<288x512xbf16, #tpu.memory_space<vmem>>, vector<32x512xbf16>,
    %c0_38 = arith.constant 0 : index
    %c144 = arith.constant 144 : index
    %51 = vector.load %arg13[%c0_38, %c144] : memref<32x768xbf16, #tpu.memory_space<vmem>>, vector<32x512xbf16>
    %52 = vector.broadcast %18 : vector<1x512xbf16> to vector<32x512xbf16>
    %53 = arith.mulf %51, %52 : vector<32x512xbf16>
    %c224 = arith.constant 224 : index
    %c0_39 = arith.constant 0 : index
    %54 = vector.load %arg14[%c224, %c0_39] : memref<288x512xbf16, #tpu.memory_space<vmem>>, vector<32x512xbf16>
    tpu.vector_store %arg14[%c224, %c0_39], %53 {strides = array<i32>} : memref<288x512xbf16, #tpu.memory_space<vmem>>, vector<32x512xbf16>,
    %c0_40 = arith.constant 0 : index
    %c145 = arith.constant 145 : index
    %55 = vector.load %arg13[%c0_40, %c145] : memref<32x768xbf16, #tpu.memory_space<vmem>>, vector<32x512xbf16>
    %56 = vector.broadcast %18 : vector<1x512xbf16> to vector<32x512xbf16>
    %57 = arith.mulf %55, %56 : vector<32x512xbf16>
    %58 = vector.broadcast %16 : vector<1x512xbf16> to vector<32x512xbf16>
    %59 = arith.mulf %57, %58 : vector<32x512xbf16>
    %c256 = arith.constant 256 : index
    %c0_41 = arith.constant 0 : index
    %60 = vector.load %arg14[%c256, %c0_41] : memref<288x512xbf16, #tpu.memory_space<vmem>>, vector<32x512xbf16>
    tpu.vector_store %arg14[%c256, %c0_41], %59 {strides = array<i32>} : memref<288x512xbf16, #tpu.memory_space<vmem>>, vector<32x512xbf16>,
    %c0_42 = arith.constant 0 : index
    %c0_43 = arith.constant 0 : index
    %61 = vector.load %arg4[%c0_42, %c0_43] : memref<32x288xbf16, #tpu.memory_space<vmem>>, vector<32x288xbf16>
    %c0_44 = arith.constant 0 : index
    %c0_45 = arith.constant 0 : index
    %62 = vector.load %arg14[%c0_44, %c0_45] : memref<288x512xbf16, #tpu.memory_space<vmem>>, vector<288x512xbf16>
    %cst_46 = arith.constant dense<0.000000e+00> : vector<32x512xf32>
    %63 = tpu.matmul %61, %62, %cst_46 {dimension_numbers = #tpu.dot_dimension_numbers<[1], [0], [0], [1], [0, 0, 1, 1], [], []>} : vector<32x288xbf16>, vector<288x512xbf16>, vector<32x512xf32> -> vector<32x512xf32>
    %c0_47 = arith.constant 0 : index
    %c0_48 = arith.constant 0 : index
    %64 = vector.load %arg5[%c0_47, %c0_48] : memref<32x1xf32, #tpu.memory_space<vmem>>, vector<32x1xf32>
    %65 = vector.broadcast %64 : vector<32x1xf32> to vector<32x512xf32>
    %66 = arith.addf %63, %65 : vector<32x512xf32>
    %cst_49 = arith.constant 0.000000e+00 : f32
    %67 = vector.broadcast %cst_49 : f32 to vector<32x512xf32>
    %68 = arith.maximumf %66, %67 : vector<32x512xf32>
    %c0_50 = arith.constant 0 : index
    %c0_51 = arith.constant 0 : index
    %69 = vector.load %arg6[%c0_50, %c0_51] : memref<128x32xbf16, #tpu.memory_space<vmem>>, vector<128x32xbf16>
    %70 = arith.truncf %68 : vector<32x512xf32> to vector<32x512xbf16>
    %cst_52 = arith.constant dense<0.000000e+00> : vector<128x512xf32>
    %71 = tpu.matmul %69, %70, %cst_52 {dimension_numbers = #tpu.dot_dimension_numbers<[1], [0], [0], [1], [0, 0, 1, 1], [], []>} : vector<128x32xbf16>, vector<32x512xbf16>, vector<128x512xf32> -> vector<128x512xf32>
    %c0_53 = arith.constant 0 : index
    %c0_54 = arith.constant 0 : index
    %72 = vector.load %arg7[%c0_53, %c0_54] : memref<128x1xf32, #tpu.memory_space<vmem>>, vector<128x1xf32>
    %73 = vector.broadcast %72 : vector<128x1xf32> to vector<128x512xf32>
    %74 = arith.addf %71, %73 : vector<128x512xf32>
    %c0_55 = arith.constant 0 : index
    %c0_56 = arith.constant 0 : index
    %c0_57 = arith.constant 0 : index
    %75 = vector.load %arg1[%c0_55, %c0_56, %c0_57] : memref<1x128x512xbf16, #tpu.memory_space<vmem>>, vector<1x128x512xbf16>
    %76 = vector.shape_cast %75 : vector<1x128x512xbf16> to vector<128x512xbf16>
    %77 = arith.extf %76 : vector<128x512xbf16> to vector<128x512xf32>
    %78 = arith.addf %74, %77 : vector<128x512xf32>
    %cst_58 = arith.constant 0.000000e+00 : f32
    %79 = vector.broadcast %cst_58 : f32 to vector<128x512xf32>
    %80 = arith.maximumf %78, %79 : vector<128x512xf32>
    %81 = arith.truncf %80 : vector<128x512xf32> to vector<128x512xbf16>
    %c0_59 = arith.constant 0 : index
    %c0_60 = arith.constant 0 : index
    %c0_61 = arith.constant 0 : index
    %82 = vector.load %arg12[%c0_59, %c0_60, %c0_61] : memref<1x128x512xbf16, #tpu.memory_space<vmem>>, vector<1x128x512xbf16>
    %83 = vector.shape_cast %82 : vector<1x128x512xbf16> to vector<128x512xbf16>
    %84 = vector.shape_cast %81 : vector<128x512xbf16> to vector<1x128x512xbf16>
    tpu.vector_store %arg12[%c0_59, %c0_60, %c0_61], %84 {strides = array<i32>} : memref<1x128x512xbf16, #tpu.memory_space<vmem>>, vector<1x128x512xbf16>,
    return
  }
  func.func @transform_0(%arg0: i32) -> (i32, i32, i32) {
    %c0_i32 = arith.constant 0 : i32
    %c0_i32_0 = arith.constant 0 : i32
    %c0_i32_1 = arith.constant 0 : i32
    return %arg0, %c0_i32, %c0_i32_0 : i32, i32, i32
  }
  func.func @transform_1(%arg0: i32) -> (i32, i32) {
    %c0_i32 = arith.constant 0 : i32
    %c0_i32_0 = arith.constant 0 : i32
    %c0_i32_1 = arith.constant 0 : i32
    return %c0_i32, %c0_i32_0 : i32, i32
  }
  func.func @transform_2(%arg0: i32) -> (i32, i32) {
    %c0_i32 = arith.constant 0 : i32
    %c0_i32_0 = arith.constant 0 : i32
    %c0_i32_1 = arith.constant 0 : i32
    return %c0_i32, %c0_i32_0 : i32, i32
  }
  func.func @transform_3(%arg0: i32) -> (i32, i32) {
    %c0_i32 = arith.constant 0 : i32
    %c0_i32_0 = arith.constant 0 : i32
    %c0_i32_1 = arith.constant 0 : i32
    return %c0_i32, %c0_i32_0 : i32, i32
  }
  func.func @transform_4(%arg0: i32) -> (i32, i32) {
    %c0_i32 = arith.constant 0 : i32
    %c0_i32_0 = arith.constant 0 : i32
    %c0_i32_1 = arith.constant 0 : i32
    return %c0_i32, %c0_i32_0 : i32, i32
  }
  func.func @transform_5(%arg0: i32) -> (i32, i32) {
    %c0_i32 = arith.constant 0 : i32
    %c0_i32_0 = arith.constant 0 : i32
    %c0_i32_1 = arith.constant 0 : i32
    return %c0_i32, %c0_i32_0 : i32, i32
  }
  func.func @transform_6(%arg0: i32) -> (i32, i32) {
    %c0_i32 = arith.constant 0 : i32
    %c0_i32_0 = arith.constant 0 : i32
    %c0_i32_1 = arith.constant 0 : i32
    return %c0_i32, %c0_i32_0 : i32, i32
  }
  func.func @transform_7(%arg0: i32) -> (i32, i32) {
    %c0_i32 = arith.constant 0 : i32
    %c0_i32_0 = arith.constant 0 : i32
    %c0_i32_1 = arith.constant 0 : i32
    return %c0_i32, %c0_i32_0 : i32, i32
  }
  func.func @transform_8(%arg0: i32) -> (i32, i32) {
    %c0_i32 = arith.constant 0 : i32
    %c0_i32_0 = arith.constant 0 : i32
    %c0_i32_1 = arith.constant 0 : i32
    return %c0_i32, %c0_i32_0 : i32, i32
  }
  func.func @transform_9(%arg0: i32) -> (i32, i32) {
    %c0_i32 = arith.constant 0 : i32
    %c0_i32_0 = arith.constant 0 : i32
    %c0_i32_1 = arith.constant 0 : i32
    return %c0_i32, %c0_i32_0 : i32, i32
  }
  func.func @transform_10(%arg0: i32) -> (i32, i32) {
    %c0_i32 = arith.constant 0 : i32
    %c0_i32_0 = arith.constant 0 : i32
    %c0_i32_1 = arith.constant 0 : i32
    return %c0_i32, %c0_i32_0 : i32, i32
  }
  func.func @transform_11(%arg0: i32) -> (i32, i32, i32) {
    %c0_i32 = arith.constant 0 : i32
    %c0_i32_0 = arith.constant 0 : i32
    %c0_i32_1 = arith.constant 0 : i32
    return %arg0, %c0_i32, %c0_i32_0 : i32, i32, i32
  }
}

</mosaic_0001>

<llo_original>
// kernel: res_bottleneck_forward.1
$region0: #{res_bottleneck_forward.1}
  #allocation0 [shape = 'u32[]', space=smem, size = 0x4, offset = 0x4, fixed_abs, tag = 'smem constant byte address 0x4 - core index']
  #allocation1 [shape = 'u32[144,128]{1,0:T(1,128)}', space=vmem, size = 0x12000, scoped, tag = 'internal scratch']
  #allocation2 [shape = 'bf16[32,768]{1,0:T(8,128)(2,1)}', space=vmem, size = 0xc000, scoped, tag = 'scratch operand']
  #allocation3 [shape = 'bf16[288,512]{1,0:T(8,128)(2,1)}', space=vmem, size = 0x48000, scoped, tag = 'scratch operand']
  %s0 = inlined_call_operand.vmem [shape: bf16[2,128,512], index: 0, kind: input, shape index: {}]
  %s1 = inlined_call_operand.vmem [shape: bf16[32,128], index: 1, kind: input, shape index: {}]
  %s2 = inlined_call_operand.vmem [shape: f32[32,1], index: 2, kind: input, shape index: {}]
  %s3 = inlined_call_operand.vmem [shape: bf16[32,288], index: 3, kind: input, shape index: {}]
  %s4 = inlined_call_operand.vmem [shape: f32[32,1], index: 4, kind: input, shape index: {}]
  %s5 = inlined_call_operand.vmem [shape: bf16[128,32], index: 5, kind: input, shape index: {}]
  %s6 = inlined_call_operand.vmem [shape: f32[128,1], index: 6, kind: input, shape index: {}]
  %s7 = inlined_call_operand.vmem [shape: bf16[1,512], index: 7, kind: input, shape index: {}]
  %s8 = inlined_call_operand.vmem [shape: bf16[1,512], index: 8, kind: input, shape index: {}]
  %s9 = inlined_call_operand.vmem [shape: bf16[1,512], index: 9, kind: input, shape index: {}]
  %s10 = inlined_call_operand.vmem [shape: bf16[1,512], index: 10, kind: input, shape index: {}]
  %s11 = inlined_call_operand.vmem [shape: bf16[2,128,512], index: 11, kind: output, shape index: {}]
  %s12 = sld [smem:[#allocation0]]
  $region77: #{res_bottleneck_forward.1} parent=0
    _
  %s14 = ssub.s32 1, %s12
  %s15 = scalar_select 0, %s14, %s12
  loop: start=0, step=1, limit=4
  $region2: #{res_bottleneck_forward.1} parent=0 // loop_pre_header
    _
  $region3: #{res_bottleneck_forward.1} parent=0 // loop_header
    %s17 = sphi 0, %s21
    %p18 = scmp.ge.s32.totalorder %s17, 4
    %s27 = sphi 0, %s29
    %s30 = sphi 0, %s27
    %s31 = sphi 0, %s30
    %s47 = sphi 0, %s31
    %s51 = sphi 0, %s51
    %s53 = sphi 0, %s51
    %s54 = sphi 0, %s53
    %s68 = sphi 0, %s54
    %s72 = sphi 0, %s72
    %s74 = sphi 0, %s72
    %s75 = sphi 0, %s74
    %s89 = sphi 0, %s75
    %s93 = sphi 0, %s93
    %s95 = sphi 0, %s93
    %s96 = sphi 0, %s95
    %s110 = sphi 0, %s96
    %s114 = sphi 0, %s114
    %s116 = sphi 0, %s114
    %s117 = sphi 0, %s116
    %s131 = sphi 0, %s117
    %s135 = sphi 0, %s135
    %s137 = sphi 0, %s135
    %s138 = sphi 0, %s137
    %s152 = sphi 0, %s138
    %s156 = sphi 0, %s156
    %s158 = sphi 0, %s156
    %s159 = sphi 0, %s158
    %s173 = sphi 0, %s159
    %s177 = sphi 0, %s177
    %s179 = sphi 0, %s177
    %s180 = sphi 0, %s179
    %s194 = sphi 0, %s180
    %s198 = sphi 0, %s198
    %s200 = sphi 0, %s198
    %s201 = sphi 0, %s200
    %s215 = sphi 0, %s201
    %s219 = sphi 0, %s219
    %s221 = sphi 0, %s219
    %s222 = sphi 0, %s221
    %s236 = sphi 0, %s222
    %s240 = sphi 0, %s240
    %s242 = sphi 0, %s240
    %s243 = sphi 0, %s242
    %s257 = sphi 0, %s243
    %s263 = sphi 0, %s265
    %s266 = sphi 0, %s263
    %s267 = sphi 0, %s266
    %s283 = sphi 0, %s267
  $region4: #{res_bottleneck_forward.1} parent=0 // loop_header_branch
    %20 = sbr.rel (%p18) target = $region8
  $region5: #{res_bottleneck_forward.1} parent=0 // loop_body
    %s22 = ssub.s32 %s17, 1
    %s23 = ssub.s32 %s17, 2
    %s24 = sadd.s32 %s17, 1
    %s25 = ssub.s32 %s17, %s24
    %p26 = scmp.eq.s32.totalorder %s25, 0
    %s28 = sadd.s32 %s27, 1
    %s29 = scalar_select %p26, %s27, %s28
    %p32 = pneg %p26
    %p33 = scmp.eq.s32.totalorder %s17, 1
    %p34 = por %p32, %p33
    %p35 = scmp.ne.s32.totalorder %s27, %s30
    %p36 = scmp.eq.s32.totalorder %s17, 0
    %p37 = por %p35, %p36
    %p38 = scmp.ne.s32.totalorder %s27, %s30
    %p39 = scmp.eq.s32.totalorder %s22, 1
    %p40 = por %p38, %p39
    %p41 = scmp.ne.s32.totalorder %s30, %s31
    %p42 = scmp.eq.s32.totalorder %s22, 0
    %p43 = por %p41, %p42
    %p44 = scmp.ne.s32.totalorder %s30, %s31
    %p45 = scmp.eq.s32.totalorder %s23, 1
    %p46 = por %p44, %p45
    %p48 = scmp.ne.s32.totalorder %s31, %s47
    %p49 = scmp.eq.s32.totalorder %s23, 0
    %p50 = por %p48, %p49
    %s52 = sadd.s32 %s51, 1
    %p55 = scmp.eq.s32.totalorder %s17, 1
    %p56 = scmp.ne.s32.totalorder %s51, %s53
    %p57 = scmp.eq.s32.totalorder %s17, 0
    %p58 = por %p56, %p57
    %p59 = scmp.ne.s32.totalorder %s51, %s53
    %p60 = scmp.eq.s32.totalorder %s22, 1
    %p61 = por %p59, %p60
    %p62 = scmp.ne.s32.totalorder %s53, %s54
    %p63 = scmp.eq.s32.totalorder %s22, 0
    %p64 = por %p62, %p63
    %p65 = scmp.ne.s32.totalorder %s53, %s54
    %p66 = scmp.eq.s32.totalorder %s23, 1
    %p67 = por %p65, %p66
    %p69 = scmp.ne.s32.totalorder %s54, %s68
    %p70 = scmp.eq.s32.totalorder %s23, 0
    %p71 = por %p69, %p70
    %s73 = sadd.s32 %s72, 1
    %p76 = scmp.eq.s32.totalorder %s17, 1
    %p77 = scmp.ne.s32.totalorder %s72, %s74
    %p78 = scmp.eq.s32.totalorder %s17, 0
    %p79 = por %p77, %p78
    %p80 = scmp.ne.s32.totalorder %s72, %s74
    %p81 = scmp.eq.s32.totalorder %s22, 1
    %p82 = por %p80, %p81
    %p83 = scmp.ne.s32.totalorder %s74, %s75
    %p84 = scmp.eq.s32.totalorder %s22, 0
    %p85 = por %p83, %p84
    %p86 = scmp.ne.s32.totalorder %s74, %s75
    %p87 = scmp.eq.s32.totalorder %s23, 1
    %p88 = por %p86, %p87
    %p90 = scmp.ne.s32.totalorder %s75, %s89
    %p91 = scmp.eq.s32.totalorder %s23, 0
    %p92 = por %p90, %p91
    %s94 = sadd.s32 %s93, 1
    %p97 = scmp.eq.s32.totalorder %s17, 1
    %p98 = scmp.ne.s32.totalorder %s93, %s95
    %p99 = scmp.eq.s32.totalorder %s17, 0
    %p100 = por %p98, %p99
    %p101 = scmp.ne.s32.totalorder %s93, %s95
    %p102 = scmp.eq.s32.totalorder %s22, 1
    %p103 = por %p101, %p102
    %p104 = scmp.ne.s32.totalorder %s95, %s96
    %p105 = scmp.eq.s32.totalorder %s22, 0
    %p106 = por %p104, %p105
    %p107 = scmp.ne.s32.totalorder %s95, %s96
    %p108 = scmp.eq.s32.totalorder %s23, 1
    %p109 = por %p107, %p108
    %p111 = scmp.ne.s32.totalorder %s96, %s110
    %p112 = scmp.eq.s32.totalorder %s23, 0
    %p113 = por %p111, %p112
    %s115 = sadd.s32 %s114, 1
    %p118 = scmp.eq.s32.totalorder %s17, 1
    %p119 = scmp.ne.s32.totalorder %s114, %s116
    %p120 = scmp.eq.s32.totalorder %s17, 0
    %p121 = por %p119, %p120
    %p122 = scmp.ne.s32.totalorder %s114, %s116
    %p123 = scmp.eq.s32.totalorder %s22, 1
    %p124 = por %p122, %p123
    %p125 = scmp.ne.s32.totalorder %s116, %s117
    %p126 = scmp.eq.s32.totalorder %s22, 0
    %p127 = por %p125, %p126
    %p128 = scmp.ne.s32.totalorder %s116, %s117
    %p129 = scmp.eq.s32.totalorder %s23, 1
    %p130 = por %p128, %p129
    %p132 = scmp.ne.s32.totalorder %s117, %s131
    %p133 = scmp.eq.s32.totalorder %s23, 0
    %p134 = por %p132, %p133
    %s136 = sadd.s32 %s135, 1
    %p139 = scmp.eq.s32.totalorder %s17, 1
    %p140 = scmp.ne.s32.totalorder %s135, %s137
    %p141 = scmp.eq.s32.totalorder %s17, 0
    %p142 = por %p140, %p141
    %p143 = scmp.ne.s32.totalorder %s135, %s137
    %p144 = scmp.eq.s32.totalorder %s22, 1
    %p145 = por %p143, %p144
    %p146 = scmp.ne.s32.totalorder %s137, %s138
    %p147 = scmp.eq.s32.totalorder %s22, 0
    %p148 = por %p146, %p147
    %p149 = scmp.ne.s32.totalorder %s137, %s138
    %p150 = scmp.eq.s32.totalorder %s23, 1
    %p151 = por %p149, %p150
    %p153 = scmp.ne.s32.totalorder %s138, %s152
    %p154 = scmp.eq.s32.totalorder %s23, 0
    %p155 = por %p153, %p154
    %s157 = sadd.s32 %s156, 1
    %p160 = scmp.eq.s32.totalorder %s17, 1
    %p161 = scmp.ne.s32.totalorder %s156, %s158
    %p162 = scmp.eq.s32.totalorder %s17, 0
    %p163 = por %p161, %p162
    %p164 = scmp.ne.s32.totalorder %s156, %s158
    %p165 = scmp.eq.s32.totalorder %s22, 1
    %p166 = por %p164, %p165
    %p167 = scmp.ne.s32.totalorder %s158, %s159
    %p168 = scmp.eq.s32.totalorder %s22, 0
    %p169 = por %p167, %p168
    %p170 = scmp.ne.s32.totalorder %s158, %s159
    %p171 = scmp.eq.s32.totalorder %s23, 1
    %p172 = por %p170, %p171
    %p174 = scmp.ne.s32.totalorder %s159, %s173
    %p175 = scmp.eq.s32.totalorder %s23, 0
    %p176 = por %p174, %p175
    %s178 = sadd.s32 %s177, 1
    %p181 = scmp.eq.s32.totalorder %s17, 1
    %p182 = scmp.ne.s32.totalorder %s177, %s179
    %p183 = scmp.eq.s32.totalorder %s17, 0
    %p184 = por %p182, %p183
    %p185 = scmp.ne.s32.totalorder %s177, %s179
    %p186 = scmp.eq.s32.totalorder %s22, 1
    %p187 = por %p185, %p186
    %p188 = scmp.ne.s32.totalorder %s179, %s180
    %p189 = scmp.eq.s32.totalorder %s22, 0
    %p190 = por %p188, %p189
    %p191 = scmp.ne.s32.totalorder %s179, %s180
    %p192 = scmp.eq.s32.totalorder %s23, 1
    %p193 = por %p191, %p192
    %p195 = scmp.ne.s32.totalorder %s180, %s194
    %p196 = scmp.eq.s32.totalorder %s23, 0
    %p197 = por %p195, %p196
    %s199 = sadd.s32 %s198, 1
    %p202 = scmp.eq.s32.totalorder %s17, 1
    %p203 = scmp.ne.s32.totalorder %s198, %s200
    %p204 = scmp.eq.s32.totalorder %s17, 0
    %p205 = por %p203, %p204
    %p206 = scmp.ne.s32.totalorder %s198, %s200
    %p207 = scmp.eq.s32.totalorder %s22, 1
    %p208 = por %p206, %p207
    %p209 = scmp.ne.s32.totalorder %s200, %s201
    %p210 = scmp.eq.s32.totalorder %s22, 0
    %p211 = por %p209, %p210
    %p212 = scmp.ne.s32.totalorder %s200, %s201
    %p213 = scmp.eq.s32.totalorder %s23, 1
    %p214 = por %p212, %p213
    %p216 = scmp.ne.s32.totalorder %s201, %s215
    %p217 = scmp.eq.s32.totalorder %s23, 0
    %p218 = por %p216, %p217
    %s220 = sadd.s32 %s219, 1
    %p223 = scmp.eq.s32.totalorder %s17, 1
    %p224 = scmp.ne.s32.totalorder %s219, %s221
    %p225 = scmp.eq.s32.totalorder %s17, 0
    %p226 = por %p224, %p225
    %p227 = scmp.ne.s32.totalorder %s219, %s221
    %p228 = scmp.eq.s32.totalorder %s22, 1
    %p229 = por %p227, %p228
    %p230 = scmp.ne.s32.totalorder %s221, %s222
    %p231 = scmp.eq.s32.totalorder %s22, 0
    %p232 = por %p230, %p231
    %p233 = scmp.ne.s32.totalorder %s221, %s222
    %p234 = scmp.eq.s32.totalorder %s23, 1
    %p235 = por %p233, %p234
    %p237 = scmp.ne.s32.totalorder %s222, %s236
    %p238 = scmp.eq.s32.totalorder %s23, 0
    %p239 = por %p237, %p238
    %s241 = sadd.s32 %s240, 1
    %p244 = scmp.eq.s32.totalorder %s17, 1
    %p245 = scmp.ne.s32.totalorder %s240, %s242
    %p246 = scmp.eq.s32.totalorder %s17, 0
    %p247 = por %p245, %p246
    %p248 = scmp.ne.s32.totalorder %s240, %s242
    %p249 = scmp.eq.s32.totalorder %s22, 1
    %p250 = por %p248, %p249
    %p251 = scmp.ne.s32.totalorder %s242, %s243
    %p252 = scmp.eq.s32.totalorder %s22, 0
    %p253 = por %p251, %p252
    %p254 = scmp.ne.s32.totalorder %s242, %s243
    %p255 = scmp.eq.s32.totalorder %s23, 1
    %p256 = por %p254, %p255
    %p258 = scmp.ne.s32.totalorder %s243, %s257
    %p259 = scmp.eq.s32.totalorder %s23, 0
    %p260 = por %p258, %p259
    %s261 = ssub.s32 %s17, %s24
    %p262 = scmp.eq.s32.totalorder %s261, 0
    %s264 = sadd.s32 %s263, 1
    %s265 = scalar_select %p262, %s263, %s264
    %p268 = pneg %p262
    %p269 = scmp.eq.s32.totalorder %s17, 1
    %p270 = por %p268, %p269
    %p271 = scmp.ne.s32.totalorder %s263, %s266
    %p272 = scmp.eq.s32.totalorder %s17, 0
    %p273 = por %p271, %p272
    %p274 = scmp.ne.s32.totalorder %s263, %s266
    %p275 = scmp.eq.s32.totalorder %s22, 1
    %p276 = por %p274, %p275
    %p277 = scmp.ne.s32.totalorder %s266, %s267
    %p278 = scmp.eq.s32.totalorder %s22, 0
    %p279 = por %p277, %p278
    %p280 = scmp.ne.s32.totalorder %s266, %s267
    %p281 = scmp.eq.s32.totalorder %s23, 1
    %p282 = por %p280, %p281
    %p284 = scmp.ne.s32.totalorder %s267, %s283
    %p285 = scmp.eq.s32.totalorder %s23, 0
    %p286 = por %p284, %p285
    %p287 = scmp.le.s32.totalorder 1, %s17
    %p288 = scmp.lt.s32.totalorder %s17, 3
    %p289 = pnand %p287, %p288
    %p290 = pneg %p289
    // Predicated region
    $region9: #{res_bottleneck_forward.1} parent=5 // pred_check
      _
    $region10: #{res_bottleneck_forward.1} parent=5 // pred_check_branch
      %292 = sbr.rel (%p289) target = $region12
    $region11: #{res_bottleneck_forward.1} parent=5 // pred_region
      %s293 = ssub.s32 %s17, 1
      // Predicated region
      $region13: #{res_bottleneck_forward.1} parent=11 // pred_check
        %p294 = pneg %p64
      $region14: #{res_bottleneck_forward.1} parent=11 // pred_check_branch
        %296 = sbr.rel (%p294) target = $region16
      $region15: #{res_bottleneck_forward.1} parent=11 // pred_region
        _
      $region16: #{res_bottleneck_forward.1} parent=11 // pred_fallthru
        _
      // Predicated region
      $region17: #{res_bottleneck_forward.1} parent=11 // pred_check
        %p297 = pneg %p85
      $region18: #{res_bottleneck_forward.1} parent=11 // pred_check_branch
        %299 = sbr.rel (%p297) target = $region20
      $region19: #{res_bottleneck_forward.1} parent=11 // pred_region
        _
      $region20: #{res_bottleneck_forward.1} parent=11 // pred_fallthru
        _
      // Predicated region
      $region21: #{res_bottleneck_forward.1} parent=11 // pred_check
        %p300 = pneg %p106
      $region22: #{res_bottleneck_forward.1} parent=11 // pred_check_branch
        %302 = sbr.rel (%p300) target = $region24
      $region23: #{res_bottleneck_forward.1} parent=11 // pred_region
        _
      $region24: #{res_bottleneck_forward.1} parent=11 // pred_fallthru
        _
      // Predicated region
      $region25: #{res_bottleneck_forward.1} parent=11 // pred_check
        %p303 = pneg %p127
      $region26: #{res_bottleneck_forward.1} parent=11 // pred_check_branch
        %305 = sbr.rel (%p303) target = $region28
      $region27: #{res_bottleneck_forward.1} parent=11 // pred_region
        _
      $region28: #{res_bottleneck_forward.1} parent=11 // pred_fallthru
        _
      // Predicated region
      $region29: #{res_bottleneck_forward.1} parent=11 // pred_check
        %p306 = pneg %p148
      $region30: #{res_bottleneck_forward.1} parent=11 // pred_check_branch
        %308 = sbr.rel (%p306) target = $region32
      $region31: #{res_bottleneck_forward.1} parent=11 // pred_region
        _
      $region32: #{res_bottleneck_forward.1} parent=11 // pred_fallthru
        _
      // Predicated region
      $region33: #{res_bottleneck_forward.1} parent=11 // pred_check
        %p309 = pneg %p169
      $region34: #{res_bottleneck_forward.1} parent=11 // pred_check_branch
        %311 = sbr.rel (%p309) target = $region36
      $region35: #{res_bottleneck_forward.1} parent=11 // pred_region
        _
      $region36: #{res_bottleneck_forward.1} parent=11 // pred_fallthru
        _
      // Predicated region
      $region37: #{res_bottleneck_forward.1} parent=11 // pred_check
        %p312 = pneg %p190
      $region38: #{res_bottleneck_forward.1} parent=11 // pred_check_branch
        %314 = sbr.rel (%p312) target = $region40
      $region39: #{res_bottleneck_forward.1} parent=11 // pred_region
        _
      $region40: #{res_bottleneck_forward.1} parent=11 // pred_fallthru
        _
      // Predicated region
      $region41: #{res_bottleneck_forward.1} parent=11 // pred_check
        %p315 = pneg %p211
      $region42: #{res_bottleneck_forward.1} parent=11 // pred_check_branch
        %317 = sbr.rel (%p315) target = $region44
      $region43: #{res_bottleneck_forward.1} parent=11 // pred_region
        _
      $region44: #{res_bottleneck_forward.1} parent=11 // pred_fallthru
        _
      // Predicated region
      $region45: #{res_bottleneck_forward.1} parent=11 // pred_check
        %p318 = pneg %p232
      $region46: #{res_bottleneck_forward.1} parent=11 // pred_check_branch
        %320 = sbr.rel (%p318) target = $region48
      $region47: #{res_bottleneck_forward.1} parent=11 // pred_region
        _
      $region48: #{res_bottleneck_forward.1} parent=11 // pred_fallthru
        _
      // Predicated region
      $region49: #{res_bottleneck_forward.1} parent=11 // pred_check
        %p321 = pneg %p253
      $region50: #{res_bottleneck_forward.1} parent=11 // pred_check_branch
        %323 = sbr.rel (%p321) target = $region52
      $region51: #{res_bottleneck_forward.1} parent=11 // pred_region
        _
      $region52: #{res_bottleneck_forward.1} parent=11 // pred_fallthru
        _
    $region12: #{res_bottleneck_forward.1} parent=5 // pred_fallthru
      _
    %p324 = scmp.lt.s32.totalorder %s17, 2
    // Predicated region
    $region53: #{res_bottleneck_forward.1} parent=5 // pred_check
      %p325 = pneg %p324
    $region54: #{res_bottleneck_forward.1} parent=5 // pred_check_branch
      %327 = sbr.rel (%p325) target = $region56
    $region55: #{res_bottleneck_forward.1} parent=5 // pred_region
      // Predicated region
      $region57: #{res_bottleneck_forward.1} parent=55 // pred_check
        %p328 = pneg %p37
      $region58: #{res_bottleneck_forward.1} parent=55 // pred_check_branch
        %330 = sbr.rel (%p328) target = $region60
      $region59: #{res_bottleneck_forward.1} parent=55 // pred_region
        %p331 = scmp.lt.s32.totalorder %s17, 1
        %s332 = scalar_select %p331, %s17, 1
        %s333 = smul.addr %s332, 64
        %s334 = smul.addr %s333, 4
        %s335 = scalar_lea.vmem %s0, %s334
      $region60: #{res_bottleneck_forward.1} parent=55 // pred_fallthru
        _
    $region56: #{res_bottleneck_forward.1} parent=5 // pred_fallthru
      _
    %p336 = scmp.le.s32.totalorder 1, %s17
    %p337 = scmp.lt.s32.totalorder %s17, 3
    %p338 = pnand %p336, %p337
    %p339 = pneg %p338
    // Predicated region
    $region61: #{res_bottleneck_forward.1} parent=5 // pred_check
      _
    $region62: #{res_bottleneck_forward.1} parent=5 // pred_check_branch
      %341 = sbr.rel (%p338) target = $region64
    $region63: #{res_bottleneck_forward.1} parent=5 // pred_region
      %s342 = ssub.s32 %s17, 1
      %p343 = scmp.lt.s32.totalorder %s22, 1
      %s344 = scalar_select %p343, %s22, 1
      %s345 = smul.addr %s344, 64
      %s346 = smul.addr %s345, 4
      %s347 = scalar_lea.vmem %s0, %s346
      %p348 = pneg %p43
      %p349 = pneg %p40
      %p350 = pneg %p64
      %p351 = pneg %p61
      %p352 = pneg %p85
      %p353 = pneg %p82
      %p354 = pneg %p106
      %p355 = pneg %p103
      %p356 = pneg %p127
      %p357 = pneg %p124
      %p358 = pneg %p148
      %p359 = pneg %p145
      %p360 = pneg %p169
      %p361 = pneg %p166
      %p362 = pneg %p190
      %p363 = pneg %p187
      %p364 = pneg %p211
      %p365 = pneg %p208
      %p366 = pneg %p232
      %p367 = pneg %p229
      %p368 = pneg %p253
      %p369 = pneg %p250
      %p370 = pneg %p279
      %p371 = pneg %p276
      %p372 = scmp.lt.s32.totalorder %s22, 1
      %s373 = scalar_select %p372, %s22, 1
      %s374 = smul.addr %s373, 64
      %s375 = smul.addr %s374, 4
      %s376 = scalar_lea.vmem %s11, %s375
      %p377 = scmp.lt.s32.totalorder %s22, 1
      %s378 = scalar_select %p377, %s22, 1
      %s379 = smul.addr %s378, 64
      %s380 = smul.addr %s379, 4
      %s381 = scalar_lea.vmem %s0, %s380
      %p382 = scmp.lt.s32.totalorder %s22, 1
      %s383 = scalar_select %p382, %s22, 1
      %s384 = smul.addr %s383, 64
      %s385 = smul.addr %s384, 4
      %s386 = scalar_lea.vmem %s11, %s385
      %v388 = vld [vmem:[%s1] sm:$0xf]
      %v389 = vld [vmem:[%s1 + $0x4] sm:$0xf]
      %v390 = vld [vmem:[%s1 + $0x8] sm:$0xf]
      %v391 = vld [vmem:[%s1 + $0xc] sm:$0xf]
      %v392 = vld [vmem:[%s381] sm:$0xff]
      %v393 = vld [vmem:[%s381 + $0x8] sm:$0xff]
      %v394 = vld [vmem:[%s381 + $0x10] sm:$0xff]
      %v395 = vld [vmem:[%s381 + $0x18] sm:$0xff]
      %v396 = vld [vmem:[%s381 + $0x20] sm:$0xff]
      %v397 = vld [vmem:[%s381 + $0x28] sm:$0xff]
      %v398 = vld [vmem:[%s381 + $0x30] sm:$0xff]
      %v399 = vld [vmem:[%s381 + $0x38] sm:$0xff]
      %v400 = vld [vmem:[%s381 + $0x40] sm:$0xff]
      %v401 = vld [vmem:[%s381 + $0x48] sm:$0xff]
      %v402 = vld [vmem:[%s381 + $0x50] sm:$0xff]
      %v403 = vld [vmem:[%s381 + $0x58] sm:$0xff]
      %v404 = vld [vmem:[%s381 + $0x60] sm:$0xff]
      %v405 = vld [vmem:[%s381 + $0x68] sm:$0xff]
      %v406 = vld [vmem:[%s381 + $0x70] sm:$0xff]
      %v407 = vld [vmem:[%s381 + $0x78] sm:$0xff]
      %v408 = vld [vmem:[%s381 + $0x80] sm:$0xff]
      %v409 = vld [vmem:[%s381 + $0x88] sm:$0xff]
      %v410 = vld [vmem:[%s381 + $0x90] sm:$0xff]
      %v411 = vld [vmem:[%s381 + $0x98] sm:$0xff]
      %v412 = vld [vmem:[%s381 + $0xa0] sm:$0xff]
      %v413 = vld [vmem:[%s381 + $0xa8] sm:$0xff]
      %v414 = vld [vmem:[%s381 + $0xb0] sm:$0xff]
      %v415 = vld [vmem:[%s381 + $0xb8] sm:$0xff]
      %v416 = vld [vmem:[%s381 + $0xc0] sm:$0xff]
      %v417 = vld [vmem:[%s381 + $0xc8] sm:$0xff]
      %v418 = vld [vmem:[%s381 + $0xd0] sm:$0xff]
      %v419 = vld [vmem:[%s381 + $0xd8] sm:$0xff]
      %v420 = vld [vmem:[%s381 + $0xe0] sm:$0xff]
      %v421 = vld [vmem:[%s381 + $0xe8] sm:$0xff]
      %v422 = vld [vmem:[%s381 + $0xf0] sm:$0xff]
      %v423 = vld [vmem:[%s381 + $0xf8] sm:$0xff]
      %v424 = vld [vmem:[%s2] sm:$0xff]
      %v425 = vld [vmem:[%s2 + $0x8] sm:$0xff]
      %v426 = vld [vmem:[%s2 + $0x10] sm:$0xff]
      %v427 = vld [vmem:[%s2 + $0x18] sm:$0xff]
      %429 = vset.pattern.permute.xlu0 0
      %430 = vperm.xlu0 %429, %v424
      %v431 = vpop.permute.xlu0 %430
      %434 = vset.pattern.permute.xlu0 0
      %435 = vperm.xlu0 %434, %v425
      %v436 = vpop.permute.xlu0 %435
      %439 = vset.pattern.permute.xlu0 0
      %440 = vperm.xlu0 %439, %v426
      %v441 = vpop.permute.xlu0 %440
      %444 = vset.pattern.permute.xlu0 0
      %445 = vperm.xlu0 %444, %v427
      %v446 = vpop.permute.xlu0 %445
      %v452 = vunpack.c.l.b16 %v388
      %v453 = vunpack.c.l.b16 %v389
      %v454 = vunpack.c.l.b16 %v390
      %v455 = vunpack.c.l.b16 %v391
      %v456 = vpack.c.b16 %v453, %v452
      %v457 = vpack.c.b16 %v455, %v454
      %v492 = vunpack.c.l.b16 %v392
      %v493 = vunpack.c.h.b16 %v392
      %v494 = vunpack.c.l.b16 %v393
      %v495 = vunpack.c.h.b16 %v393
      %v496 = vunpack.c.l.b16 %v394
      %v497 = vunpack.c.h.b16 %v394
      %v498 = vunpack.c.l.b16 %v395
      %v499 = vunpack.c.h.b16 %v395
      %v500 = vunpack.c.l.b16 %v396
      %v501 = vunpack.c.h.b16 %v396
      %v502 = vunpack.c.l.b16 %v397
      %v503 = vunpack.c.h.b16 %v397
      %v504 = vunpack.c.l.b16 %v398
      %v505 = vunpack.c.h.b16 %v398
      %v506 = vunpack.c.l.b16 %v399
      %v507 = vunpack.c.h.b16 %v399
      %v508 = vunpack.c.l.b16 %v400
      %v509 = vunpack.c.h.b16 %v400
      %v510 = vunpack.c.l.b16 %v401
      %v511 = vunpack.c.h.b16 %v401
      %v512 = vunpack.c.l.b16 %v402
      %v513 = vunpack.c.h.b16 %v402
      %v514 = vunpack.c.l.b16 %v403
      %v515 = vunpack.c.h.b16 %v403
      %v516 = vunpack.c.l.b16 %v404
      %v517 = vunpack.c.h.b16 %v404
      %v518 = vunpack.c.l.b16 %v405
      %v519 = vunpack.c.h.b16 %v405
      %v520 = vunpack.c.l.b16 %v406
      %v521 = vunpack.c.h.b16 %v406
      %v522 = vunpack.c.l.b16 %v407
      %v523 = vunpack.c.h.b16 %v407
      %v524 = vunpack.c.l.b16 %v408
      %v525 = vunpack.c.h.b16 %v408
      %v526 = vunpack.c.l.b16 %v409
      %v527 = vunpack.c.h.b16 %v409
      %v528 = vunpack.c.l.b16 %v410
      %v529 = vunpack.c.h.b16 %v410
      %v530 = vunpack.c.l.b16 %v411
      %v531 = vunpack.c.h.b16 %v411
      %v532 = vunpack.c.l.b16 %v412
      %v533 = vunpack.c.h.b16 %v412
      %v534 = vunpack.c.l.b16 %v413
      %v535 = vunpack.c.h.b16 %v413
      %v536 = vunpack.c.l.b16 %v414
      %v537 = vunpack.c.h.b16 %v414
      %v538 = vunpack.c.l.b16 %v415
      %v539 = vunpack.c.h.b16 %v415
      %v540 = vunpack.c.l.b16 %v416
      %v541 = vunpack.c.h.b16 %v416
      %v542 = vunpack.c.l.b16 %v417
      %v543 = vunpack.c.h.b16 %v417
      %v544 = vunpack.c.l.b16 %v418
      %v545 = vunpack.c.h.b16 %v418
      %v546 = vunpack.c.l.b16 %v419
      %v547 = vunpack.c.h.b16 %v419
      %v548 = vunpack.c.l.b16 %v420
      %v549 = vunpack.c.h.b16 %v420
      %v550 = vunpack.c.l.b16 %v421
      %v551 = vunpack.c.h.b16 %v421
      %v552 = vunpack.c.l.b16 %v422
      %v553 = vunpack.c.h.b16 %v422
      %v554 = vunpack.c.l.b16 %v423
      %v555 = vunpack.c.h.b16 %v423
      %v556 = vpack.c.b16 %v496, %v492
      %v557 = vpack.c.b16 %v497, %v493
      %v558 = vpack.c.b16 %v498, %v494
      %v559 = vpack.c.b16 %v499, %v495
      %v560 = vpack.c.b16 %v504, %v500
      %v561 = vpack.c.b16 %v505, %v501
      %v562 = vpack.c.b16 %v506, %v502
      %v563 = vpack.c.b16 %v507, %v503
      %v564 = vpack.c.b16 %v512, %v508
      %v565 = vpack.c.b16 %v513, %v509
      %v566 = vpack.c.b16 %v514, %v510
      %v567 = vpack.c.b16 %v515, %v511
      %v568 = vpack.c.b16 %v520, %v516
      %v569 = vpack.c.b16 %v521, %v517
      %v570 = vpack.c.b16 %v522, %v518
      %v571 = vpack.c.b16 %v523, %v519
      %v572 = vpack.c.b16 %v528, %v524
      %v573 = vpack.c.b16 %v529, %v525
      %v574 = vpack.c.b16 %v530, %v526
      %v575 = vpack.c.b16 %v531, %v527
      %v576 = vpack.c.b16 %v536, %v532
      %v577 = vpack.c.b16 %v537, %v533
      %v578 = vpack.c.b16 %v538, %v534
      %v579 = vpack.c.b16 %v539, %v535
      %v580 = vpack.c.b16 %v544, %v540
      %v581 = vpack.c.b16 %v545, %v541
      %v582 = vpack.c.b16 %v546, %v542
      %v583 = vpack.c.b16 %v547, %v543
      %v584 = vpack.c.b16 %v552, %v548
      %v585 = vpack.c.b16 %v553, %v549
      %v586 = vpack.c.b16 %v554, %v550
      %v587 = vpack.c.b16 %v555, %v551
      %620 = vmatprep.subr.bf16.mxu0 %v585
      %621 = vmatpush1.bf16.msra.mxu0 %v584
      %622 = vmatprep.subr.bf16.mxu0 %v581
      %623 = vmatpush1.bf16.msra.mxu0 %v580
      %624 = vmatprep.subr.bf16.mxu0 %v577
      %625 = vmatpush1.bf16.msra.mxu0 %v576
      %626 = vmatprep.subr.bf16.mxu0 %v573
      %627 = vmatpush1.bf16.msra.mxu0 %v572
      %628 = vmatprep.subr.bf16.mxu0 %v569
      %629 = vmatpush1.bf16.msra.mxu0 %v568
      %630 = vmatprep.subr.bf16.mxu0 %v565
      %631 = vmatpush1.bf16.msra.mxu0 %v564
      %632 = vmatprep.subr.bf16.mxu0 %v561
      %633 = vmatpush1.bf16.msra.mxu0 %v560
      %634 = vmatprep.subr.bf16.mxu0 %v557
      %635 = vmatpush1.bf16.msra.mxu0 %v556
      %636 = vmatprep.subr.bf16.mxu0 0
      %637 = vmatpush2.bf16.msra.mxu0 0
      %638 = vmatprep.subr.bf16.mxu0 0
      %639 = vmatpush2.bf16.msra.mxu0 0
      %640 = vmatprep.subr.bf16.mxu0 0
      %641 = vmatpush2.bf16.msra.mxu0 0
      %642 = vmatprep.subr.bf16.mxu0 0
      %643 = vmatpush2.bf16.msra.mxu0 0
      %644 = vmatprep.subr.bf16.mxu0 0
      %645 = vmatpush2.bf16.msra.mxu0 0
      %646 = vmatprep.subr.bf16.mxu0 0
      %647 = vmatpush2.bf16.msra.mxu0 0
      %648 = vmatprep.subr.bf16.mxu0 0
      %649 = vmatpush2.bf16.msra.mxu0 0
      %650 = vmatprep.subr.bf16.mxu0 0
      %651 = vmatpush2.bf16.msra.mxu0 0
      %652 = vmatprep.mubr.bf16.mxu0 0
      %653 = vmatmul.mubr.bf16.gmra.mxu0 %v456
      %v654 = vpop.f32.mrf.mxu0
      %v655 = vadd.f32 %v431, %v654
      %v656 = vpop.f32.mrf.mxu0
      %v657 = vadd.f32 %v431, %v656
      %v658 = vpop.f32.mrf.mxu0
      %v659 = vadd.f32 %v436, %v658
      %v660 = vpop.f32.mrf.mxu0
      %v661 = vadd.f32 %v436, %v660
      %662 = vmatprep.mubr.bf16.mxu0 0
      %663 = vmatmul.mubr.bf16.gmra.mxu0 %v457
      %v664 = vpop.f32.mrf.mxu0
      %v665 = vadd.f32 %v441, %v664
      %v666 = vpop.f32.mrf.mxu0
      %v667 = vadd.f32 %v441, %v666
      %v668 = vpop.f32.mrf.mxu0
      %v669 = vadd.f32 %v446, %v668
      %v670 = vpop.f32.mrf.mxu0
      %v671 = vadd.f32 %v446, %v670
      %672 = vdwg.mxu0
      %673 = vmatprep.subr.bf16.mxu0 %v587
      %674 = vmatpush1.bf16.msra.mxu0 %v586
      %675 = vmatprep.subr.bf16.mxu0 %v583
      %676 = vmatpush1.bf16.msra.mxu0 %v582
      %677 = vmatprep.subr.bf16.mxu0 %v579
      %678 = vmatpush1.bf16.msra.mxu0 %v578
      %679 = vmatprep.subr.bf16.mxu0 %v575
      %680 = vmatpush1.bf16.msra.mxu0 %v574
      %681 = vmatprep.subr.bf16.mxu0 %v571
      %682 = vmatpush1.bf16.msra.mxu0 %v570
      %683 = vmatprep.subr.bf16.mxu0 %v567
      %684 = vmatpush1.bf16.msra.mxu0 %v566
      %685 = vmatprep.subr.bf16.mxu0 %v563
      %686 = vmatpush1.bf16.msra.mxu0 %v562
      %687 = vmatprep.subr.bf16.mxu0 %v559
      %688 = vmatpush1.bf16.msra.mxu0 %v558
      %689 = vmatprep.subr.bf16.mxu0 0
      %690 = vmatpush2.bf16.msra.mxu0 0
      %691 = vmatprep.subr.bf16.mxu0 0
      %692 = vmatpush2.bf16.msra.mxu0 0
      %693 = vmatprep.subr.bf16.mxu0 0
      %694 = vmatpush2.bf16.msra.mxu0 0
      %695 = vmatprep.subr.bf16.mxu0 0
      %696 = vmatpush2.bf16.msra.mxu0 0
      %697 = vmatprep.subr.bf16.mxu0 0
      %698 = vmatpush2.bf16.msra.mxu0 0
      %699 = vmatprep.subr.bf16.mxu0 0
      %700 = vmatpush2.bf16.msra.mxu0 0
      %701 = vmatprep.subr.bf16.mxu0 0
      %702 = vmatpush2.bf16.msra.mxu0 0
      %703 = vmatprep.subr.bf16.mxu0 0
      %704 = vmatpush2.bf16.msra.mxu0 0
      %705 = vmatprep.mubr.bf16.mxu0 0
      %706 = vmatmul.mubr.bf16.gmra.mxu0 %v456
      %v707 = vpop.f32.mrf.mxu0
      %v708 = vadd.f32 %v431, %v707
      %v709 = vpop.f32.mrf.mxu0
      %v710 = vadd.f32 %v431, %v709
      %v711 = vpop.f32.mrf.mxu0
      %v712 = vadd.f32 %v436, %v711
      %v713 = vpop.f32.mrf.mxu0
      %v714 = vadd.f32 %v436, %v713
      %715 = vmatprep.mubr.bf16.mxu0 0
      %716 = vmatmul.mubr.bf16.gmra.mxu0 %v457
      %v717 = vpop.f32.mrf.mxu0
      %v718 = vadd.f32 %v441, %v717
      %v719 = vpop.f32.mrf.mxu0
      %v720 = vadd.f32 %v441, %v719
      %v721 = vpop.f32.mrf.mxu0
      %v722 = vadd.f32 %v446, %v721
      %v723 = vpop.f32.mrf.mxu0
      %v724 = vadd.f32 %v446, %v723
      %725 = vdwg.mxu0
      %v726 = vmax.f32 %v655, 0.0
      %v727 = vmax.f32 %v657, 0.0
      %v728 = vmax.f32 %v708, 0.0
      %v729 = vmax.f32 %v710, 0.0
      %v730 = vmax.f32 %v659, 0.0
      %v731 = vmax.f32 %v661, 0.0
      %v732 = vmax.f32 %v712, 0.0
      %v733 = vmax.f32 %v714, 0.0
      %v734 = vmax.f32 %v665, 0.0
      %v735 = vmax.f32 %v667, 0.0
      %v736 = vmax.f32 %v718, 0.0
      %v737 = vmax.f32 %v720, 0.0
      %v738 = vmax.f32 %v669, 0.0
      %v739 = vmax.f32 %v671, 0.0
      %v740 = vmax.f32 %v722, 0.0
      %v741 = vmax.f32 %v724, 0.0
      %742 = vst [vmem:[#allocation2] sm:$0xf] 0
      %743 = vst [vmem:[#allocation2 + $0x18] sm:$0xf] 0
      %744 = vst [vmem:[#allocation2 + $0x30] sm:$0xf] 0
      %745 = vst [vmem:[#allocation2 + $0x48] sm:$0xf] 0
      %746 = vst [vmem:[#allocation2 + $0x14] sm:$0xf] 0
      %747 = vst [vmem:[#allocation2 + $0x2c] sm:$0xf] 0
      %748 = vst [vmem:[#allocation2 + $0x44] sm:$0xf] 0
      %749 = vst [vmem:[#allocation2 + $0x5c] sm:$0xf] 0
      %v750 = vpack.c.bf16 %v730, %v726
      %v751 = vpack.c.bf16 %v731, %v727
      %v752 = vpack.c.bf16 %v732, %v728
      %v753 = vpack.c.bf16 %v733, %v729
      %v754 = vpack.c.bf16 %v738, %v734
      %v755 = vpack.c.bf16 %v739, %v735
      %v756 = vpack.c.bf16 %v740, %v736
      %v757 = vpack.c.bf16 %v741, %v737
      %v766 = vunpack.c.l.b16 %v750
      %v767 = vunpack.c.l.b16 %v751
      %v768 = vunpack.c.l.b16 %v752
      %v769 = vunpack.c.l.b16 %v753
      %v770 = vunpack.c.h.b16 %v750
      %v771 = vunpack.c.h.b16 %v751
      %v772 = vunpack.c.h.b16 %v752
      %v773 = vunpack.c.h.b16 %v753
      %v774 = vunpack.c.l.b16 %v754
      %v775 = vunpack.c.l.b16 %v755
      %v776 = vunpack.c.l.b16 %v756
      %v777 = vunpack.c.l.b16 %v757
      %v778 = vunpack.c.h.b16 %v754
      %v779 = vunpack.c.h.b16 %v755
      %v780 = vunpack.c.h.b16 %v756
      %v781 = vunpack.c.h.b16 %v757
      %v782 = vpack.c.b16 %v767, %v766
      %v783 = vpack.c.b16 %v769, %v768
      %v784 = vpack.c.b16 %v771, %v770
      %v785 = vpack.c.b16 %v773, %v772
      %v786 = vpack.c.b16 %v775, %v774
      %v787 = vpack.c.b16 %v777, %v776
      %v788 = vpack.c.b16 %v779, %v778
      %v789 = vpack.c.b16 %v781, %v780
      %798 = vst [vmem:[#allocation2 + $0x4] sm:$0xff] %v782
      %799 = vst [vmem:[#allocation2 + $0xc] sm:$0xff] %v783
      %800 = vst [vmem:[#allocation2 + $0x1c] sm:$0xff] %v784
      %801 = vst [vmem:[#allocation2 + $0x24] sm:$0xff] %v785
      %802 = vst [vmem:[#allocation2 + $0x34] sm:$0xff] %v786
      %803 = vst [vmem:[#allocation2 + $0x3c] sm:$0xff] %v787
      %804 = vst [vmem:[#allocation2 + $0x4c] sm:$0xff] %v788
      %805 = vst [vmem:[#allocation2 + $0x54] sm:$0xff] %v789
      %v806 = vld [vmem:[%s7] sm:$0xf]
      %v807 = vld [vmem:[%s8] sm:$0xf]
      %v808 = vld [vmem:[%s9] sm:$0xf]
      %v809 = vld [vmem:[%s10] sm:$0xf]
      %v810 = vld [vmem:[#allocation2] sm:$0xff]
      %v811 = vld [vmem:[#allocation2 + $0x8] sm:$0xff]
      %v812 = vld [vmem:[#allocation2 + $0x10] sm:$0xf]
      %v813 = vld [vmem:[#allocation2 + $0x18] sm:$0xff]
      %v814 = vld [vmem:[#allocation2 + $0x20] sm:$0xff]
      %v815 = vld [vmem:[#allocation2 + $0x28] sm:$0xf]
      %v816 = vld [vmem:[#allocation2 + $0x30] sm:$0xff]
      %v817 = vld [vmem:[#allocation2 + $0x38] sm:$0xff]
      %v818 = vld [vmem:[#allocation2 + $0x40] sm:$0xf]
      %v819 = vld [vmem:[#allocation2 + $0x48] sm:$0xff]
      %v820 = vld [vmem:[#allocation2 + $0x50] sm:$0xff]
      %v821 = vld [vmem:[#allocation2 + $0x58] sm:$0xf]
      %v824 = vunpack.c.l.s4 1966171168
      %v825 = vunpack.c.0.s8 %v824
      %v826 = vlaneseq
      %v827 = vshrl.u32 %v826, 7
      %v828 = vsub.s32 %v825, %v827
      %v829 = vrot.slane %v808, %v828
      %v830 = vcombine.high %v829, %v829
      %v832 = vunpack.c.l.s4 1966171168
      %v833 = vunpack.c.0.s8 %v832
      %v834 = vlaneseq
      %v835 = vshrl.u32 %v834, 7
      %v836 = vsub.s32 %v833, %v835
      %v837 = vrot.slane %v829, %v836
      %v839 = vunpack.c.l.s4 1966171168
      %v840 = vunpack.c.0.s8 %v839
      %v841 = vlaneseq
      %v842 = vshrl.u32 %v841, 7
      %v843 = vsub.s32 %v840, %v842
      %v844 = vrot.slane %v830, %v843
      %v845 = vcombine.high %v837, %v837
      %v846 = vcombine.high %v844, %v844
      %v848 = vpack.i.b16 %v837, %v837
      %v850 = vlaneseq
      %v851 = vshrl.u32 %v850, 7
      %v852 = vsub.s32 0, %v851
      %v853 = vrot.slane %v848, %v852
      %v855 = vpack.i.b16 %v844, %v844
      %v857 = vlaneseq
      %v858 = vshrl.u32 %v857, 7
      %v859 = vsub.s32 0, %v858
      %v860 = vrot.slane %v855, %v859
      %v862 = vpack.i.b16 %v845, %v845
      %v864 = vlaneseq
      %v865 = vshrl.u32 %v864, 7
      %v866 = vsub.s32 0, %v865
      %v867 = vrot.slane %v862, %v866
      %v869 = vpack.i.b16 %v846, %v846
      %v871 = vlaneseq
      %v872 = vshrl.u32 %v871, 7
      %v873 = vsub.s32 0, %v872
      %v874 = vrot.slane %v869, %v873
      %v879 = vunpack.c.l.b16 %v853
      %v880 = vunpack.c.l.b16 %v860
      %v881 = vunpack.c.l.b16 %v867
      %v882 = vunpack.c.l.b16 %v874
      %v883 = vpack.c.b16 %v880, %v879
      %v884 = vpack.c.b16 %v882, %v881
      %885 = vrot.lane.b32.xlu0 %v883, 111
      %v886 = vpop.permute.xlu0 %885
      %887 = vrot.lane.b32.xlu0 %v884, 111
      %v888 = vpop.permute.xlu0 %887
      %v889 = vrot.slane %v886, 4
      %v890 = vrot.slane %v888, 4
      %vm891 = vcmask 908288
      %v892 = vsel %vm891, %v889, %v886
      %vm893 = vcmask 1043456
      %v894 = vsel %vm893, %v889, %v890
      %v895 = vsel %vm891, %v894, %v888
      %v899 = vmul.bf16 %v810, %v892
      %v900 = vmul.bf16 %v811, %v895
      %v901 = vmul.bf16 %v812, %v890
      %v902 = vmul.bf16 %v813, %v892
      %v903 = vmul.bf16 %v814, %v895
      %v904 = vmul.bf16 %v815, %v890
      %v905 = vmul.bf16 %v816, %v892
      %v906 = vmul.bf16 %v817, %v895
      %v907 = vmul.bf16 %v818, %v890
      %v908 = vmul.bf16 %v819, %v892
      %v909 = vmul.bf16 %v820, %v895
      %v910 = vmul.bf16 %v821, %v890
      %v913 = vunpack.c.l.s4 1966171168
      %v914 = vunpack.c.0.s8 %v913
      %v915 = vlaneseq
      %v916 = vshrl.u32 %v915, 7
      %v917 = vsub.s32 %v914, %v916
      %v918 = vrot.slane %v806, %v917
      %v919 = vcombine.high %v918, %v918
      %v921 = vunpack.c.l.s4 1966171168
      %v922 = vunpack.c.0.s8 %v921
      %v923 = vlaneseq
      %v924 = vshrl.u32 %v923, 7
      %v925 = vsub.s32 %v922, %v924
      %v926 = vrot.slane %v918, %v925
      %v928 = vunpack.c.l.s4 1966171168
      %v929 = vunpack.c.0.s8 %v928
      %v930 = vlaneseq
      %v931 = vshrl.u32 %v930, 7
      %v932 = vsub.s32 %v929, %v931
      %v933 = vrot.slane %v919, %v932
      %v934 = vcombine.high %v926, %v926
      %v935 = vcombine.high %v933, %v933
      %v937 = vpack.i.b16 %v926, %v926
      %v939 = vlaneseq
      %v940 = vshrl.u32 %v939, 7
      %v941 = vsub.s32 0, %v940
      %v942 = vrot.slane %v937, %v941
      %v944 = vpack.i.b16 %v933, %v933
      %v946 = vlaneseq
      %v947 = vshrl.u32 %v946, 7
      %v948 = vsub.s32 0, %v947
      %v949 = vrot.slane %v944, %v948
      %v951 = vpack.i.b16 %v934, %v934
      %v953 = vlaneseq
      %v954 = vshrl.u32 %v953, 7
      %v955 = vsub.s32 0, %v954
      %v956 = vrot.slane %v951, %v955
      %v958 = vpack.i.b16 %v935, %v935
      %v960 = vlaneseq
      %v961 = vshrl.u32 %v960, 7
      %v962 = vsub.s32 0, %v961
      %v963 = vrot.slane %v958, %v962
      %v968 = vunpack.c.l.b16 %v942
      %v969 = vunpack.c.l.b16 %v949
      %v970 = vunpack.c.l.b16 %v956
      %v971 = vunpack.c.l.b16 %v963
      %v972 = vpack.c.b16 %v969, %v968
      %v973 = vpack.c.b16 %v971, %v970
      %974 = vrot.lane.b32.xlu0 %v972, 111
      %v975 = vpop.permute.xlu0 %974
      %976 = vrot.lane.b32.xlu0 %v973, 111
      %v977 = vpop.permute.xlu0 %976
      %v978 = vrot.slane %v975, 4
      %v979 = vrot.slane %v977, 4
      %v980 = vsel %vm891, %v978, %v975
      %v981 = vsel %vm893, %v978, %v979
      %v982 = vsel %vm891, %v981, %v977
      %v986 = vmul.bf16 %v899, %v980
      %v987 = vmul.bf16 %v900, %v982
      %v988 = vmul.bf16 %v901, %v979
      %v989 = vmul.bf16 %v902, %v980
      %v990 = vmul.bf16 %v903, %v982
      %v991 = vmul.bf16 %v904, %v979
      %v992 = vmul.bf16 %v905, %v980
      %v993 = vmul.bf16 %v906, %v982
      %v994 = vmul.bf16 %v907, %v979
      %v995 = vmul.bf16 %v908, %v980
      %v996 = vmul.bf16 %v909, %v982
      %v997 = vmul.bf16 %v910, %v979
      %1010 = vrot.lane.b32.xlu0 %v986, 17
      %v1011 = vpop.permute.xlu0 %1010
      %1012 = vrot.lane.b32.xlu0 %v987, 17
      %v1013 = vpop.permute.xlu0 %1012
      %1014 = vrot.lane.b32.xlu0 %v988, 17
      %v1015 = vpop.permute.xlu0 %1014
      %1016 = vrot.lane.b32.xlu0 %v989, 17
      %v1017 = vpop.permute.xlu0 %1016
      %1018 = vrot.lane.b32.xlu0 %v990, 17
      %v1019 = vpop.permute.xlu0 %1018
      %1020 = vrot.lane.b32.xlu0 %v991, 17
      %v1021 = vpop.permute.xlu0 %1020
      %1022 = vrot.lane.b32.xlu0 %v992, 17
      %v1023 = vpop.permute.xlu0 %1022
      %1024 = vrot.lane.b32.xlu0 %v993, 17
      %v1025 = vpop.permute.xlu0 %1024
      %1026 = vrot.lane.b32.xlu0 %v994, 17
      %v1027 = vpop.permute.xlu0 %1026
      %1028 = vrot.lane.b32.xlu0 %v995, 17
      %v1029 = vpop.permute.xlu0 %1028
      %1030 = vrot.lane.b32.xlu0 %v996, 17
      %v1031 = vpop.permute.xlu0 %1030
      %1032 = vrot.lane.b32.xlu0 %v997, 17
      %v1033 = vpop.permute.xlu0 %1032
      %v1034 = vrot.slane %v1011, 4
      %v1035 = vrot.slane %v1013, 4
      %v1036 = vrot.slane %v1015, 4
      %v1037 = vrot.slane %v1017, 4
      %v1038 = vrot.slane %v1019, 4
      %v1039 = vrot.slane %v1021, 4
      %v1040 = vrot.slane %v1023, 4
      %v1041 = vrot.slane %v1025, 4
      %v1042 = vrot.slane %v1027, 4
      %v1043 = vrot.slane %v1029, 4
      %v1044 = vrot.slane %v1031, 4
      %v1045 = vrot.slane %v1033, 4
      %v1046 = vsel %vm893, %v1034, %v1035
      %vm1047 = vcmask 138240
      %v1048 = vsel %vm1047, %v1011, %v1046
      %v1049 = vsel %vm893, %v1035, %v1036
      %v1050 = vsel %vm1047, %v1013, %v1049
      %v1051 = vsel %vm893, %v1037, %v1038
      %v1052 = vsel %vm1047, %v1017, %v1051
      %v1053 = vsel %vm893, %v1038, %v1039
      %v1054 = vsel %vm1047, %v1019, %v1053
      %v1055 = vsel %vm893, %v1040, %v1041
      %v1056 = vsel %vm1047, %v1023, %v1055
      %v1057 = vsel %vm893, %v1041, %v1042
      %v1058 = vsel %vm1047, %v1025, %v1057
      %v1059 = vsel %vm893, %v1043, %v1044
      %v1060 = vsel %vm1047, %v1029, %v1059
      %v1061 = vsel %vm893, %v1044, %v1045
      %v1062 = vsel %vm1047, %v1031, %v1061
      %1071 = vst [vmem:[#allocation3] sm:$0xff] %v1048
      %1072 = vst [vmem:[#allocation3 + $0x8] sm:$0xff] %v1050
      %1073 = vst [vmem:[#allocation3 + $0x10] sm:$0xff] %v1052
      %1074 = vst [vmem:[#allocation3 + $0x18] sm:$0xff] %v1054
      %1075 = vst [vmem:[#allocation3 + $0x20] sm:$0xff] %v1056
      %1076 = vst [vmem:[#allocation3 + $0x28] sm:$0xff] %v1058
      %1077 = vst [vmem:[#allocation3 + $0x30] sm:$0xff] %v1060
      %1078 = vst [vmem:[#allocation3 + $0x38] sm:$0xff] %v1062
      %v1079 = vld [vmem:[#allocation2] sm:$0xff]
      %v1080 = vld [vmem:[#allocation2 + $0x8] sm:$0xff]
      %v1081 = vld [vmem:[#allocation2 + $0x10] sm:$0xf]
      %v1082 = vld [vmem:[#allocation2 + $0x18] sm:$0xff]
      %v1083 = vld [vmem:[#allocation2 + $0x20] sm:$0xff]
      %v1084 = vld [vmem:[#allocation2 + $0x28] sm:$0xf]
      %v1085 = vld [vmem:[#allocation2 + $0x30] sm:$0xff]
      %v1086 = vld [vmem:[#allocation2 + $0x38] sm:$0xff]
      %v1087 = vld [vmem:[#allocation2 + $0x40] sm:$0xf]
      %v1088 = vld [vmem:[#allocation2 + $0x48] sm:$0xff]
      %v1089 = vld [vmem:[#allocation2 + $0x50] sm:$0xff]
      %v1090 = vld [vmem:[#allocation2 + $0x58] sm:$0xf]
      %1091 = vrot.lane.b32.xlu0 %v883, 112
      %v1092 = vpop.permute.xlu0 %1091
      %1093 = vrot.lane.b32.xlu0 %v884, 112
      %v1094 = vpop.permute.xlu0 %1093
      %v1095 = vrot.slane %v1092, 4
      %v1096 = vrot.slane %v1094, 4
      %vm1097 = vcmask 916480
      %v1098 = vsel %vm1097, %v1095, %v1092
      %v1099 = vsel %vm893, %v1095, %v1096
      %v1100 = vsel %vm1097, %v1099, %v1094
      %v1104 = vmul.bf16 %v1079, %v1098
      %v1105 = vmul.bf16 %v1080, %v1100
      %v1106 = vmul.bf16 %v1081, %v1096
      %v1107 = vmul.bf16 %v1082, %v1098
      %v1108 = vmul.bf16 %v1083, %v1100
      %v1109 = vmul.bf16 %v1084, %v1096
      %v1110 = vmul.bf16 %v1085, %v1098
      %v1111 = vmul.bf16 %v1086, %v1100
      %v1112 = vmul.bf16 %v1087, %v1096
      %v1113 = vmul.bf16 %v1088, %v1098
      %v1114 = vmul.bf16 %v1089, %v1100
      %v1115 = vmul.bf16 %v1090, %v1096
      %1128 = vrot.lane.b32.xlu0 %v1104, 16
      %v1129 = vpop.permute.xlu0 %1128
      %1130 = vrot.lane.b32.xlu0 %v1105, 16
      %v1131 = vpop.permute.xlu0 %1130
      %1132 = vrot.lane.b32.xlu0 %v1106, 16
      %v1133 = vpop.permute.xlu0 %1132
      %1134 = vrot.lane.b32.xlu0 %v1107, 16
      %v1135 = vpop.permute.xlu0 %1134
      %1136 = vrot.lane.b32.xlu0 %v1108, 16
      %v1137 = vpop.permute.xlu0 %1136
      %1138 = vrot.lane.b32.xlu0 %v1109, 16
      %v1139 = vpop.permute.xlu0 %1138
      %1140 = vrot.lane.b32.xlu0 %v1110, 16
      %v1141 = vpop.permute.xlu0 %1140
      %1142 = vrot.lane.b32.xlu0 %v1111, 16
      %v1143 = vpop.permute.xlu0 %1142
      %1144 = vrot.lane.b32.xlu0 %v1112, 16
      %v1145 = vpop.permute.xlu0 %1144
      %1146 = vrot.lane.b32.xlu0 %v1113, 16
      %v1147 = vpop.permute.xlu0 %1146
      %1148 = vrot.lane.b32.xlu0 %v1114, 16
      %v1149 = vpop.permute.xlu0 %1148
      %1150 = vrot.lane.b32.xlu0 %v1115, 16
      %v1151 = vpop.permute.xlu0 %1150
      %v1152 = vrot.slane %v1129, 4
      %v1153 = vrot.slane %v1131, 4
      %v1154 = vrot.slane %v1133, 4
      %v1155 = vrot.slane %v1135, 4
      %v1156 = vrot.slane %v1137, 4
      %v1157 = vrot.slane %v1139, 4
      %v1158 = vrot.slane %v1141, 4
      %v1159 = vrot.slane %v1143, 4
      %v1160 = vrot.slane %v1145, 4
      %v1161 = vrot.slane %v1147, 4
      %v1162 = vrot.slane %v1149, 4
      %v1163 = vrot.slane %v1151, 4
      %v1164 = vsel %vm893, %v1152, %v1153
      %vm1165 = vcmask 130048
      %v1166 = vsel %vm1165, %v1129, %v1164
      %v1167 = vsel %vm893, %v1153, %v1154
      %v1168 = vsel %vm1165, %v1131, %v1167
      %v1169 = vsel %vm893, %v1155, %v1156
      %v1170 = vsel %vm1165, %v1135, %v1169
      %v1171 = vsel %vm893, %v1156, %v1157
      %v1172 = vsel %vm1165, %v1137, %v1171
      %v1173 = vsel %vm893, %v1158, %v1159
      %v1174 = vsel %vm1165, %v1141, %v1173
      %v1175 = vsel %vm893, %v1159, %v1160
      %v1176 = vsel %vm1165, %v1143, %v1175
      %v1177 = vsel %vm893, %v1161, %v1162
      %v1178 = vsel %vm1165, %v1147, %v1177
      %v1179 = vsel %vm893, %v1162, %v1163
      %v1180 = vsel %vm1165, %v1149, %v1179
      %1189 = vst [vmem:[#allocation3 + $0x40] sm:$0xff] %v1166
      %1190 = vst [vmem:[#allocation3 + $0x48] sm:$0xff] %v1168
      %1191 = vst [vmem:[#allocation3 + $0x50] sm:$0xff] %v1170
      %1192 = vst [vmem:[#allocation3 + $0x58] sm:$0xff] %v1172
      %1193 = vst [vmem:[#allocation3 + $0x60] sm:$0xff] %v1174
      %1194 = vst [vmem:[#allocation3 + $0x68] sm:$0xff] %v1176
      %1195 = vst [vmem:[#allocation3 + $0x70] sm:$0xff] %v1178
      %1196 = vst [vmem:[#allocation3 + $0x78] sm:$0xff] %v1180
      %v1197 = vld [vmem:[#allocation2] sm:$0xff]
      %v1198 = vld [vmem:[#allocation2 + $0x8] sm:$0xff]
      %v1199 = vld [vmem:[#allocation2 + $0x10] sm:$0xf]
      %v1200 = vld [vmem:[#allocation2 + $0x18] sm:$0xff]
      %v1201 = vld [vmem:[#allocation2 + $0x20] sm:$0xff]
      %v1202 = vld [vmem:[#allocation2 + $0x28] sm:$0xf]
      %v1203 = vld [vmem:[#allocation2 + $0x30] sm:$0xff]
      %v1204 = vld [vmem:[#allocation2 + $0x38] sm:$0xff]
      %v1205 = vld [vmem:[#allocation2 + $0x40] sm:$0xf]
      %v1206 = vld [vmem:[#allocation2 + $0x48] sm:$0xff]
      %v1207 = vld [vmem:[#allocation2 + $0x50] sm:$0xff]
      %v1208 = vld [vmem:[#allocation2 + $0x58] sm:$0xf]
      %1209 = vrot.lane.b32.xlu0 %v883, 113
      %v1210 = vpop.permute.xlu0 %1209
      %1211 = vrot.lane.b32.xlu0 %v884, 113
      %v1212 = vpop.permute.xlu0 %1211
      %v1213 = vrot.slane %v1210, 4
      %v1214 = vrot.slane %v1212, 4
      %vm1215 = vcmask 924672
      %v1216 = vsel %vm1215, %v1213, %v1210
      %v1217 = vsel %vm893, %v1213, %v1214
      %v1218 = vsel %vm1215, %v1217, %v1212
      %v1222 = vmul.bf16 %v1197, %v1216
      %v1223 = vmul.bf16 %v1198, %v1218
      %v1224 = vmul.bf16 %v1199, %v1214
      %v1225 = vmul.bf16 %v1200, %v1216
      %v1226 = vmul.bf16 %v1201, %v1218
      %v1227 = vmul.bf16 %v1202, %v1214
      %v1228 = vmul.bf16 %v1203, %v1216
      %v1229 = vmul.bf16 %v1204, %v1218
      %v1230 = vmul.bf16 %v1205, %v1214
      %v1231 = vmul.bf16 %v1206, %v1216
      %v1232 = vmul.bf16 %v1207, %v1218
      %v1233 = vmul.bf16 %v1208, %v1214
      %v1236 = vunpack.c.l.s4 1966171168
      %v1237 = vunpack.c.0.s8 %v1236
      %v1238 = vlaneseq
      %v1239 = vshrl.u32 %v1238, 7
      %v1240 = vsub.s32 %v1237, %v1239
      %v1241 = vrot.slane %v807, %v1240
      %v1242 = vcombine.high %v1241, %v1241
      %v1244 = vunpack.c.l.s4 1966171168
      %v1245 = vunpack.c.0.s8 %v1244
      %v1246 = vlaneseq
      %v1247 = vshrl.u32 %v1246, 7
      %v1248 = vsub.s32 %v1245, %v1247
      %v1249 = vrot.slane %v1241, %v1248
      %v1251 = vunpack.c.l.s4 1966171168
      %v1252 = vunpack.c.0.s8 %v1251
      %v1253 = vlaneseq
      %v1254 = vshrl.u32 %v1253, 7
      %v1255 = vsub.s32 %v1252, %v1254
      %v1256 = vrot.slane %v1242, %v1255
      %v1257 = vcombine.high %v1249, %v1249
      %v1258 = vcombine.high %v1256, %v1256
      %v1260 = vpack.i.b16 %v1249, %v1249
      %v1262 = vlaneseq
      %v1263 = vshrl.u32 %v1262, 7
      %v1264 = vsub.s32 0, %v1263
      %v1265 = vrot.slane %v1260, %v1264
      %v1267 = vpack.i.b16 %v1256, %v1256
      %v1269 = vlaneseq
      %v1270 = vshrl.u32 %v1269, 7
      %v1271 = vsub.s32 0, %v1270
      %v1272 = vrot.slane %v1267, %v1271
      %v1274 = vpack.i.b16 %v1257, %v1257
      %v1276 = vlaneseq
      %v1277 = vshrl.u32 %v1276, 7
      %v1278 = vsub.s32 0, %v1277
      %v1279 = vrot.slane %v1274, %v1278
      %v1281 = vpack.i.b16 %v1258, %v1258
      %v1283 = vlaneseq
      %v1284 = vshrl.u32 %v1283, 7
      %v1285 = vsub.s32 0, %v1284
      %v1286 = vrot.slane %v1281, %v1285
      %v1291 = vunpack.c.l.b16 %v1265
      %v1292 = vunpack.c.l.b16 %v1272
      %v1293 = vunpack.c.l.b16 %v1279
      %v1294 = vunpack.c.l.b16 %v1286
      %v1295 = vpack.c.b16 %v1292, %v1291
      %v1296 = vpack.c.b16 %v1294, %v1293
      %1297 = vrot.lane.b32.xlu0 %v1295, 113
      %v1298 = vpop.permute.xlu0 %1297
      %1299 = vrot.lane.b32.xlu0 %v1296, 113
      %v1300 = vpop.permute.xlu0 %1299
      %v1301 = vrot.slane %v1298, 4
      %v1302 = vrot.slane %v1300, 4
      %v1303 = vsel %vm1215, %v1301, %v1298
      %v1304 = vsel %vm893, %v1301, %v1302
      %v1305 = vsel %vm1215, %v1304, %v1300
      %v1309 = vmul.bf16 %v1222, %v1303
      %v1310 = vmul.bf16 %v1223, %v1305
      %v1311 = vmul.bf16 %v1224, %v1302
      %v1312 = vmul.bf16 %v1225, %v1303
      %v1313 = vmul.bf16 %v1226, %v1305
      %v1314 = vmul.bf16 %v1227, %v1302
      %v1315 = vmul.bf16 %v1228, %v1303
      %v1316 = vmul.bf16 %v1229, %v1305
      %v1317 = vmul.bf16 %v1230, %v1302
      %v1318 = vmul.bf16 %v1231, %v1303
      %v1319 = vmul.bf16 %v1232, %v1305
      %v1320 = vmul.bf16 %v1233, %v1302
      %1333 = vrot.lane.b32.xlu0 %v1309, 15
      %v1334 = vpop.permute.xlu0 %1333
      %1335 = vrot.lane.b32.xlu0 %v1310, 15
      %v1336 = vpop.permute.xlu0 %1335
      %1337 = vrot.lane.b32.xlu0 %v1311, 15
      %v1338 = vpop.permute.xlu0 %1337
      %1339 = vrot.lane.b32.xlu0 %v1312, 15
      %v1340 = vpop.permute.xlu0 %1339
      %1341 = vrot.lane.b32.xlu0 %v1313, 15
      %v1342 = vpop.permute.xlu0 %1341
      %1343 = vrot.lane.b32.xlu0 %v1314, 15
      %v1344 = vpop.permute.xlu0 %1343
      %1345 = vrot.lane.b32.xlu0 %v1315, 15
      %v1346 = vpop.permute.xlu0 %1345
      %1347 = vrot.lane.b32.xlu0 %v1316, 15
      %v1348 = vpop.permute.xlu0 %1347
      %1349 = vrot.lane.b32.xlu0 %v1317, 15
      %v1350 = vpop.permute.xlu0 %1349
      %1351 = vrot.lane.b32.xlu0 %v1318, 15
      %v1352 = vpop.permute.xlu0 %1351
      %1353 = vrot.lane.b32.xlu0 %v1319, 15
      %v1354 = vpop.permute.xlu0 %1353
      %1355 = vrot.lane.b32.xlu0 %v1320, 15
      %v1356 = vpop.permute.xlu0 %1355
      %v1357 = vrot.slane %v1334, 4
      %v1358 = vrot.slane %v1336, 4
      %v1359 = vrot.slane %v1338, 4
      %v1360 = vrot.slane %v1340, 4
      %v1361 = vrot.slane %v1342, 4
      %v1362 = vrot.slane %v1344, 4
      %v1363 = vrot.slane %v1346, 4
      %v1364 = vrot.slane %v1348, 4
      %v1365 = vrot.slane %v1350, 4
      %v1366 = vrot.slane %v1352, 4
      %v1367 = vrot.slane %v1354, 4
      %v1368 = vrot.slane %v1356, 4
      %v1369 = vsel %vm893, %v1357, %v1358
      %vm1370 = vcmask 121856
      %v1371 = vsel %vm1370, %v1334, %v1369
      %v1372 = vsel %vm893, %v1358, %v1359
      %v1373 = vsel %vm1370, %v1336, %v1372
      %v1374 = vsel %vm893, %v1360, %v1361
      %v1375 = vsel %vm1370, %v1340, %v1374
      %v1376 = vsel %vm893, %v1361, %v1362
      %v1377 = vsel %vm1370, %v1342, %v1376
      %v1378 = vsel %vm893, %v1363, %v1364
      %v1379 = vsel %vm1370, %v1346, %v1378
      %v1380 = vsel %vm893, %v1364, %v1365
      %v1381 = vsel %vm1370, %v1348, %v1380
      %v1382 = vsel %vm893, %v1366, %v1367
      %v1383 = vsel %vm1370, %v1352, %v1382
      %v1384 = vsel %vm893, %v1367, %v1368
      %v1385 = vsel %vm1370, %v1354, %v1384
      %1394 = vst [vmem:[#allocation3 + $0x80] sm:$0xff] %v1371
      %1395 = vst [vmem:[#allocation3 + $0x88] sm:$0xff] %v1373
      %1396 = vst [vmem:[#allocation3 + $0x90] sm:$0xff] %v1375
      %1397 = vst [vmem:[#allocation3 + $0x98] sm:$0xff] %v1377
      %1398 = vst [vmem:[#allocation3 + $0xa0] sm:$0xff] %v1379
      %1399 = vst [vmem:[#allocation3 + $0xa8] sm:$0xff] %v1381
      %1400 = vst [vmem:[#allocation3 + $0xb0] sm:$0xff] %v1383
      %1401 = vst [vmem:[#allocation3 + $0xb8] sm:$0xff] %v1385
      %v1402 = vld [vmem:[#allocation2] sm:$0xff]
      %v1403 = vld [vmem:[#allocation2 + $0x8] sm:$0xff]
      %v1404 = vld [vmem:[#allocation2 + $0x10] sm:$0xf]
      %v1405 = vld [vmem:[#allocation2 + $0x18] sm:$0xff]
      %v1406 = vld [vmem:[#allocation2 + $0x20] sm:$0xff]
      %v1407 = vld [vmem:[#allocation2 + $0x28] sm:$0xf]
      %v1408 = vld [vmem:[#allocation2 + $0x30] sm:$0xff]
      %v1409 = vld [vmem:[#allocation2 + $0x38] sm:$0xff]
      %v1410 = vld [vmem:[#allocation2 + $0x40] sm:$0xf]
      %v1411 = vld [vmem:[#allocation2 + $0x48] sm:$0xff]
      %v1412 = vld [vmem:[#allocation2 + $0x50] sm:$0xff]
      %v1413 = vld [vmem:[#allocation2 + $0x58] sm:$0xf]
      %1414 = vrot.lane.b32.xlu0 %v972, 127
      %v1415 = vpop.permute.xlu0 %1414
      %1416 = vrot.lane.b32.xlu0 %v973, 127
      %v1417 = vpop.permute.xlu0 %1416
      %v1418 = vrot.slane %v1415, 4
      %v1419 = vrot.slane %v1417, 4
      %vm1420 = vcmask 1039360
      %v1421 = vsel %vm1420, %v1418, %v1415
      %v1422 = vsel %vm893, %v1418, %v1419
      %v1423 = vsel %vm1420, %v1422, %v1417
      %v1427 = vmul.bf16 %v1402, %v1421
      %v1428 = vmul.bf16 %v1403, %v1423
      %v1429 = vmul.bf16 %v1404, %v1419
      %v1430 = vmul.bf16 %v1405, %v1421
      %v1431 = vmul.bf16 %v1406, %v1423
      %v1432 = vmul.bf16 %v1407, %v1419
      %v1433 = vmul.bf16 %v1408, %v1421
      %v1434 = vmul.bf16 %v1409, %v1423
      %v1435 = vmul.bf16 %v1410, %v1419
      %v1436 = vmul.bf16 %v1411, %v1421
      %v1437 = vmul.bf16 %v1412, %v1423
      %v1438 = vmul.bf16 %v1413, %v1419
      %1451 = vrot.lane.b32.xlu0 %v1427, 1
      %v1452 = vpop.permute.xlu0 %1451
      %1453 = vrot.lane.b32.xlu0 %v1428, 1
      %v1454 = vpop.permute.xlu0 %1453
      %1455 = vrot.lane.b32.xlu0 %v1429, 1
      %v1456 = vpop.permute.xlu0 %1455
      %1457 = vrot.lane.b32.xlu0 %v1430, 1
      %v1458 = vpop.permute.xlu0 %1457
      %1459 = vrot.lane.b32.xlu0 %v1431, 1
      %v1460 = vpop.permute.xlu0 %1459
      %1461 = vrot.lane.b32.xlu0 %v1432, 1
      %v1462 = vpop.permute.xlu0 %1461
      %1463 = vrot.lane.b32.xlu0 %v1433, 1
      %v1464 = vpop.permute.xlu0 %1463
      %1465 = vrot.lane.b32.xlu0 %v1434, 1
      %v1466 = vpop.permute.xlu0 %1465
      %1467 = vrot.lane.b32.xlu0 %v1435, 1
      %v1468 = vpop.permute.xlu0 %1467
      %1469 = vrot.lane.b32.xlu0 %v1436, 1
      %v1470 = vpop.permute.xlu0 %1469
      %1471 = vrot.lane.b32.xlu0 %v1437, 1
      %v1472 = vpop.permute.xlu0 %1471
      %1473 = vrot.lane.b32.xlu0 %v1438, 1
      %v1474 = vpop.permute.xlu0 %1473
      %v1475 = vrot.slane %v1452, 4
      %v1476 = vrot.slane %v1454, 4
      %v1477 = vrot.slane %v1456, 4
      %v1478 = vrot.slane %v1458, 4
      %v1479 = vrot.slane %v1460, 4
      %v1480 = vrot.slane %v1462, 4
      %v1481 = vrot.slane %v1464, 4
      %v1482 = vrot.slane %v1466, 4
      %v1483 = vrot.slane %v1468, 4
      %v1484 = vrot.slane %v1470, 4
      %v1485 = vrot.slane %v1472, 4
      %v1486 = vrot.slane %v1474, 4
      %v1487 = vsel %vm893, %v1475, %v1476
      %vm1488 = vcmask 7168
      %v1489 = vsel %vm1488, %v1452, %v1487
      %v1490 = vsel %vm893, %v1476, %v1477
      %v1491 = vsel %vm1488, %v1454, %v1490
      %v1492 = vsel %vm893, %v1478, %v1479
      %v1493 = vsel %vm1488, %v1458, %v1492
      %v1494 = vsel %vm893, %v1479, %v1480
      %v1495 = vsel %vm1488, %v1460, %v1494
      %v1496 = vsel %vm893, %v1481, %v1482
      %v1497 = vsel %vm1488, %v1464, %v1496
      %v1498 = vsel %vm893, %v1482, %v1483
      %v1499 = vsel %vm1488, %v1466, %v1498
      %v1500 = vsel %vm893, %v1484, %v1485
      %v1501 = vsel %vm1488, %v1470, %v1500
      %v1502 = vsel %vm893, %v1485, %v1486
      %v1503 = vsel %vm1488, %v1472, %v1502
      %1512 = vst [vmem:[#allocation3 + $0xc0] sm:$0xff] %v1489
      %1513 = vst [vmem:[#allocation3 + $0xc8] sm:$0xff] %v1491
      %1514 = vst [vmem:[#allocation3 + $0xd0] sm:$0xff] %v1493
      %1515 = vst [vmem:[#allocation3 + $0xd8] sm:$0xff] %v1495
      %1516 = vst [vmem:[#allocation3 + $0xe0] sm:$0xff] %v1497
      %1517 = vst [vmem:[#allocation3 + $0xe8] sm:$0xff] %v1499
      %1518 = vst [vmem:[#allocation3 + $0xf0] sm:$0xff] %v1501
      %1519 = vst [vmem:[#allocation3 + $0xf8] sm:$0xff] %v1503
      %v1520 = vld [vmem:[#allocation2 + $0x4] sm:$0xff]
      %v1521 = vld [vmem:[#allocation2 + $0xc] sm:$0xff]
      %v1522 = vld [vmem:[#allocation2 + $0x1c] sm:$0xff]
      %v1523 = vld [vmem:[#allocation2 + $0x24] sm:$0xff]
      %v1524 = vld [vmem:[#allocation2 + $0x34] sm:$0xff]
      %v1525 = vld [vmem:[#allocation2 + $0x3c] sm:$0xff]
      %v1526 = vld [vmem:[#allocation2 + $0x4c] sm:$0xff]
      %v1527 = vld [vmem:[#allocation2 + $0x54] sm:$0xff]
      %1528 = vst [vmem:[#allocation3 + $0x100] sm:$0xff] %v1520
      %1529 = vst [vmem:[#allocation3 + $0x108] sm:$0xff] %v1521
      %1530 = vst [vmem:[#allocation3 + $0x110] sm:$0xff] %v1522
      %1531 = vst [vmem:[#allocation3 + $0x118] sm:$0xff] %v1523
      %1532 = vst [vmem:[#allocation3 + $0x120] sm:$0xff] %v1524
      %1533 = vst [vmem:[#allocation3 + $0x128] sm:$0xff] %v1525
      %1534 = vst [vmem:[#allocation3 + $0x130] sm:$0xff] %v1526
      %1535 = vst [vmem:[#allocation3 + $0x138] sm:$0xff] %v1527
      %v1536 = vld [vmem:[#allocation2 + $0x4] sm:$0xff]
      %v1537 = vld [vmem:[#allocation2 + $0xc] sm:$0xff]
      %v1538 = vld [vmem:[#allocation2 + $0x14] sm:$0xf]
      %v1539 = vld [vmem:[#allocation2 + $0x1c] sm:$0xff]
      %v1540 = vld [vmem:[#allocation2 + $0x24] sm:$0xff]
      %v1541 = vld [vmem:[#allocation2 + $0x2c] sm:$0xf]
      %v1542 = vld [vmem:[#allocation2 + $0x34] sm:$0xff]
      %v1543 = vld [vmem:[#allocation2 + $0x3c] sm:$0xff]
      %v1544 = vld [vmem:[#allocation2 + $0x44] sm:$0xf]
      %v1545 = vld [vmem:[#allocation2 + $0x4c] sm:$0xff]
      %v1546 = vld [vmem:[#allocation2 + $0x54] sm:$0xff]
      %v1547 = vld [vmem:[#allocation2 + $0x5c] sm:$0xf]
      %1548 = vrot.lane.b32.xlu0 %v1295, 1
      %v1549 = vpop.permute.xlu0 %1548
      %1550 = vrot.lane.b32.xlu0 %v1296, 1
      %v1551 = vpop.permute.xlu0 %1550
      %v1552 = vrot.slane %v1549, 4
      %v1553 = vrot.slane %v1551, 4
      %v1554 = vsel %vm1488, %v1552, %v1549
      %v1555 = vsel %vm893, %v1552, %v1553
      %v1556 = vsel %vm1488, %v1555, %v1551
      %v1560 = vmul.bf16 %v1536, %v1554
      %v1561 = vmul.bf16 %v1537, %v1556
      %v1562 = vmul.bf16 %v1538, %v1553
      %v1563 = vmul.bf16 %v1539, %v1554
      %v1564 = vmul.bf16 %v1540, %v1556
      %v1565 = vmul.bf16 %v1541, %v1553
      %v1566 = vmul.bf16 %v1542, %v1554
      %v1567 = vmul.bf16 %v1543, %v1556
      %v1568 = vmul.bf16 %v1544, %v1553
      %v1569 = vmul.bf16 %v1545, %v1554
      %v1570 = vmul.bf16 %v1546, %v1556
      %v1571 = vmul.bf16 %v1547, %v1553
      %1584 = vrot.lane.b32.xlu0 %v1560, 127
      %v1585 = vpop.permute.xlu0 %1584
      %1586 = vrot.lane.b32.xlu0 %v1561, 127
      %v1587 = vpop.permute.xlu0 %1586
      %1588 = vrot.lane.b32.xlu0 %v1562, 127
      %v1589 = vpop.permute.xlu0 %1588
      %1590 = vrot.lane.b32.xlu0 %v1563, 127
      %v1591 = vpop.permute.xlu0 %1590
      %1592 = vrot.lane.b32.xlu0 %v1564, 127
      %v1593 = vpop.permute.xlu0 %1592
      %1594 = vrot.lane.b32.xlu0 %v1565, 127
      %v1595 = vpop.permute.xlu0 %1594
      %1596 = vrot.lane.b32.xlu0 %v1566, 127
      %v1597 = vpop.permute.xlu0 %1596
      %1598 = vrot.lane.b32.xlu0 %v1567, 127
      %v1599 = vpop.permute.xlu0 %1598
      %1600 = vrot.lane.b32.xlu0 %v1568, 127
      %v1601 = vpop.permute.xlu0 %1600
      %1602 = vrot.lane.b32.xlu0 %v1569, 127
      %v1603 = vpop.permute.xlu0 %1602
      %1604 = vrot.lane.b32.xlu0 %v1570, 127
      %v1605 = vpop.permute.xlu0 %1604
      %1606 = vrot.lane.b32.xlu0 %v1571, 127
      %v1607 = vpop.permute.xlu0 %1606
      %v1608 = vrot.slane %v1585, 4
      %v1609 = vrot.slane %v1587, 4
      %v1610 = vrot.slane %v1589, 4
      %v1611 = vrot.slane %v1591, 4
      %v1612 = vrot.slane %v1593, 4
      %v1613 = vrot.slane %v1595, 4
      %v1614 = vrot.slane %v1597, 4
      %v1615 = vrot.slane %v1599, 4
      %v1616 = vrot.slane %v1601, 4
      %v1617 = vrot.slane %v1603, 4
      %v1618 = vrot.slane %v1605, 4
      %v1619 = vrot.slane %v1607, 4
      %v1620 = vsel %vm893, %v1608, %v1609
      %v1621 = vsel %vm1420, %v1585, %v1620
      %v1622 = vsel %vm893, %v1609, %v1610
      %v1623 = vsel %vm1420, %v1587, %v1622
      %v1624 = vsel %vm893, %v1611, %v1612
      %v1625 = vsel %vm1420, %v1591, %v1624
      %v1626 = vsel %vm893, %v1612, %v1613
      %v1627 = vsel %vm1420, %v1593, %v1626
      %v1628 = vsel %vm893, %v1614, %v1615
      %v1629 = vsel %vm1420, %v1597, %v1628
      %v1630 = vsel %vm893, %v1615, %v1616
      %v1631 = vsel %vm1420, %v1599, %v1630
      %v1632 = vsel %vm893, %v1617, %v1618
      %v1633 = vsel %vm1420, %v1603, %v1632
      %v1634 = vsel %vm893, %v1618, %v1619
      %v1635 = vsel %vm1420, %v1605, %v1634
      %1644 = vst [vmem:[#allocation3 + $0x140] sm:$0xff] %v1621
      %1645 = vst [vmem:[#allocation3 + $0x148] sm:$0xff] %v1623
      %1646 = vst [vmem:[#allocation3 + $0x150] sm:$0xff] %v1625
      %1647 = vst [vmem:[#allocation3 + $0x158] sm:$0xff] %v1627
      %1648 = vst [vmem:[#allocation3 + $0x160] sm:$0xff] %v1629
      %1649 = vst [vmem:[#allocation3 + $0x168] sm:$0xff] %v1631
      %1650 = vst [vmem:[#allocation3 + $0x170] sm:$0xff] %v1633
      %1651 = vst [vmem:[#allocation3 + $0x178] sm:$0xff] %v1635
      %v1652 = vld [vmem:[#allocation2 + $0x4] sm:$0xff]
      %v1653 = vld [vmem:[#allocation2 + $0xc] sm:$0xff]
      %v1654 = vld [vmem:[#allocation2 + $0x14] sm:$0xf]
      %v1655 = vld [vmem:[#allocation2 + $0x1c] sm:$0xff]
      %v1656 = vld [vmem:[#allocation2 + $0x24] sm:$0xff]
      %v1657 = vld [vmem:[#allocation2 + $0x2c] sm:$0xf]
      %v1658 = vld [vmem:[#allocation2 + $0x34] sm:$0xff]
      %v1659 = vld [vmem:[#allocation2 + $0x3c] sm:$0xff]
      %v1660 = vld [vmem:[#allocation2 + $0x44] sm:$0xf]
      %v1661 = vld [vmem:[#allocation2 + $0x4c] sm:$0xff]
      %v1662 = vld [vmem:[#allocation2 + $0x54] sm:$0xff]
      %v1663 = vld [vmem:[#allocation2 + $0x5c] sm:$0xf]
      %v1666 = vunpack.c.l.s4 1966171168
      %v1667 = vunpack.c.0.s8 %v1666
      %v1668 = vlaneseq
      %v1669 = vshrl.u32 %v1668, 7
      %v1670 = vsub.s32 %v1667, %v1669
      %v1671 = vrot.slane %v809, %v1670
      %v1672 = vcombine.high %v1671, %v1671
      %v1674 = vunpack.c.l.s4 1966171168
      %v1675 = vunpack.c.0.s8 %v1674
      %v1676 = vlaneseq
      %v1677 = vshrl.u32 %v1676, 7
      %v1678 = vsub.s32 %v1675, %v1677
      %v1679 = vrot.slane %v1671, %v1678
      %v1681 = vunpack.c.l.s4 1966171168
      %v1682 = vunpack.c.0.s8 %v1681
      %v1683 = vlaneseq
      %v1684 = vshrl.u32 %v1683, 7
      %v1685 = vsub.s32 %v1682, %v1684
      %v1686 = vrot.slane %v1672, %v1685
      %v1687 = vcombine.high %v1679, %v1679
      %v1688 = vcombine.high %v1686, %v1686
      %v1690 = vpack.i.b16 %v1679, %v1679
      %v1692 = vlaneseq
      %v1693 = vshrl.u32 %v1692, 7
      %v1694 = vsub.s32 0, %v1693
      %v1695 = vrot.slane %v1690, %v1694
      %v1697 = vpack.i.b16 %v1686, %v1686
      %v1699 = vlaneseq
      %v1700 = vshrl.u32 %v1699, 7
      %v1701 = vsub.s32 0, %v1700
      %v1702 = vrot.slane %v1697, %v1701
      %v1704 = vpack.i.b16 %v1687, %v1687
      %v1706 = vlaneseq
      %v1707 = vshrl.u32 %v1706, 7
      %v1708 = vsub.s32 0, %v1707
      %v1709 = vrot.slane %v1704, %v1708
      %v1711 = vpack.i.b16 %v1688, %v1688
      %v1713 = vlaneseq
      %v1714 = vshrl.u32 %v1713, 7
      %v1715 = vsub.s32 0, %v1714
      %v1716 = vrot.slane %v1711, %v1715
      %v1721 = vunpack.c.l.b16 %v1695
      %v1722 = vunpack.c.l.b16 %v1702
      %v1723 = vunpack.c.l.b16 %v1709
      %v1724 = vunpack.c.l.b16 %v1716
      %v1725 = vpack.c.b16 %v1722, %v1721
      %v1726 = vpack.c.b16 %v1724, %v1723
      %1727 = vrot.lane.b32.xlu0 %v1725, 15
      %v1728 = vpop.permute.xlu0 %1727
      %1729 = vrot.lane.b32.xlu0 %v1726, 15
      %v1730 = vpop.permute.xlu0 %1729
      %v1731 = vrot.slane %v1728, 4
      %v1732 = vrot.slane %v1730, 4
      %v1733 = vsel %vm1370, %v1731, %v1728
      %v1734 = vsel %vm893, %v1731, %v1732
      %v1735 = vsel %vm1370, %v1734, %v1730
      %v1739 = vmul.bf16 %v1652, %v1733
      %v1740 = vmul.bf16 %v1653, %v1735
      %v1741 = vmul.bf16 %v1654, %v1732
      %v1742 = vmul.bf16 %v1655, %v1733
      %v1743 = vmul.bf16 %v1656, %v1735
      %v1744 = vmul.bf16 %v1657, %v1732
      %v1745 = vmul.bf16 %v1658, %v1733
      %v1746 = vmul.bf16 %v1659, %v1735
      %v1747 = vmul.bf16 %v1660, %v1732
      %v1748 = vmul.bf16 %v1661, %v1733
      %v1749 = vmul.bf16 %v1662, %v1735
      %v1750 = vmul.bf16 %v1663, %v1732
      %1751 = vrot.lane.b32.xlu0 %v972, 15
      %v1752 = vpop.permute.xlu0 %1751
      %1753 = vrot.lane.b32.xlu0 %v973, 15
      %v1754 = vpop.permute.xlu0 %1753
      %v1755 = vrot.slane %v1752, 4
      %v1756 = vrot.slane %v1754, 4
      %v1757 = vsel %vm1370, %v1755, %v1752
      %v1758 = vsel %vm893, %v1755, %v1756
      %v1759 = vsel %vm1370, %v1758, %v1754
      %v1763 = vmul.bf16 %v1739, %v1757
      %v1764 = vmul.bf16 %v1740, %v1759
      %v1765 = vmul.bf16 %v1741, %v1756
      %v1766 = vmul.bf16 %v1742, %v1757
      %v1767 = vmul.bf16 %v1743, %v1759
      %v1768 = vmul.bf16 %v1744, %v1756
      %v1769 = vmul.bf16 %v1745, %v1757
      %v1770 = vmul.bf16 %v1746, %v1759
      %v1771 = vmul.bf16 %v1747, %v1756
      %v1772 = vmul.bf16 %v1748, %v1757
      %v1773 = vmul.bf16 %v1749, %v1759
      %v1774 = vmul.bf16 %v1750, %v1756
      %1787 = vrot.lane.b32.xlu0 %v1763, 113
      %v1788 = vpop.permute.xlu0 %1787
      %1789 = vrot.lane.b32.xlu0 %v1764, 113
      %v1790 = vpop.permute.xlu0 %1789
      %1791 = vrot.lane.b32.xlu0 %v1765, 113
      %v1792 = vpop.permute.xlu0 %1791
      %1793 = vrot.lane.b32.xlu0 %v1766, 113
      %v1794 = vpop.permute.xlu0 %1793
      %1795 = vrot.lane.b32.xlu0 %v1767, 113
      %v1796 = vpop.permute.xlu0 %1795
      %1797 = vrot.lane.b32.xlu0 %v1768, 113
      %v1798 = vpop.permute.xlu0 %1797
      %1799 = vrot.lane.b32.xlu0 %v1769, 113
      %v1800 = vpop.permute.xlu0 %1799
      %1801 = vrot.lane.b32.xlu0 %v1770, 113
      %v1802 = vpop.permute.xlu0 %1801
      %1803 = vrot.lane.b32.xlu0 %v1771, 113
      %v1804 = vpop.permute.xlu0 %1803
      %1805 = vrot.lane.b32.xlu0 %v1772, 113
      %v1806 = vpop.permute.xlu0 %1805
      %1807 = vrot.lane.b32.xlu0 %v1773, 113
      %v1808 = vpop.permute.xlu0 %1807
      %1809 = vrot.lane.b32.xlu0 %v1774, 113
      %v1810 = vpop.permute.xlu0 %1809
      %v1811 = vrot.slane %v1788, 4
      %v1812 = vrot.slane %v1790, 4
      %v1813 = vrot.slane %v1792, 4
      %v1814 = vrot.slane %v1794, 4
      %v1815 = vrot.slane %v1796, 4
      %v1816 = vrot.slane %v1798, 4
      %v1817 = vrot.slane %v1800, 4
      %v1818 = vrot.slane %v1802, 4
      %v1819 = vrot.slane %v1804, 4
      %v1820 = vrot.slane %v1806, 4
      %v1821 = vrot.slane %v1808, 4
      %v1822 = vrot.slane %v1810, 4
      %v1823 = vsel %vm893, %v1811, %v1812
      %v1824 = vsel %vm1215, %v1788, %v1823
      %v1825 = vsel %vm893, %v1812, %v1813
      %v1826 = vsel %vm1215, %v1790, %v1825
      %v1827 = vsel %vm893, %v1814, %v1815
      %v1828 = vsel %vm1215, %v1794, %v1827
      %v1829 = vsel %vm893, %v1815, %v1816
      %v1830 = vsel %vm1215, %v1796, %v1829
      %v1831 = vsel %vm893, %v1817, %v1818
      %v1832 = vsel %vm1215, %v1800, %v1831
      %v1833 = vsel %vm893, %v1818, %v1819
      %v1834 = vsel %vm1215, %v1802, %v1833
      %v1835 = vsel %vm893, %v1820, %v1821
      %v1836 = vsel %vm1215, %v1806, %v1835
      %v1837 = vsel %vm893, %v1821, %v1822
      %v1838 = vsel %vm1215, %v1808, %v1837
      %1847 = vst [vmem:[#allocation3 + $0x180] sm:$0xff] %v1824
      %1848 = vst [vmem:[#allocation3 + $0x188] sm:$0xff] %v1826
      %1849 = vst [vmem:[#allocation3 + $0x190] sm:$0xff] %v1828
      %1850 = vst [vmem:[#allocation3 + $0x198] sm:$0xff] %v1830
      %1851 = vst [vmem:[#allocation3 + $0x1a0] sm:$0xff] %v1832
      %1852 = vst [vmem:[#allocation3 + $0x1a8] sm:$0xff] %v1834
      %1853 = vst [vmem:[#allocation3 + $0x1b0] sm:$0xff] %v1836
      %1854 = vst [vmem:[#allocation3 + $0x1b8] sm:$0xff] %v1838
      %v1855 = vld [vmem:[#allocation2 + $0x4] sm:$0xff]
      %v1856 = vld [vmem:[#allocation2 + $0xc] sm:$0xff]
      %v1857 = vld [vmem:[#allocation2 + $0x14] sm:$0xf]
      %v1858 = vld [vmem:[#allocation2 + $0x1c] sm:$0xff]
      %v1859 = vld [vmem:[#allocation2 + $0x24] sm:$0xff]
      %v1860 = vld [vmem:[#allocation2 + $0x2c] sm:$0xf]
      %v1861 = vld [vmem:[#allocation2 + $0x34] sm:$0xff]
      %v1862 = vld [vmem:[#allocation2 + $0x3c] sm:$0xff]
      %v1863 = vld [vmem:[#allocation2 + $0x44] sm:$0xf]
      %v1864 = vld [vmem:[#allocation2 + $0x4c] sm:$0xff]
      %v1865 = vld [vmem:[#allocation2 + $0x54] sm:$0xff]
      %v1866 = vld [vmem:[#allocation2 + $0x5c] sm:$0xf]
      %1867 = vrot.lane.b32.xlu0 %v1725, 16
      %v1868 = vpop.permute.xlu0 %1867
      %1869 = vrot.lane.b32.xlu0 %v1726, 16
      %v1870 = vpop.permute.xlu0 %1869
      %v1871 = vrot.slane %v1868, 4
      %v1872 = vrot.slane %v1870, 4
      %v1873 = vsel %vm1165, %v1871, %v1868
      %v1874 = vsel %vm893, %v1871, %v1872
      %v1875 = vsel %vm1165, %v1874, %v1870
      %v1879 = vmul.bf16 %v1855, %v1873
      %v1880 = vmul.bf16 %v1856, %v1875
      %v1881 = vmul.bf16 %v1857, %v1872
      %v1882 = vmul.bf16 %v1858, %v1873
      %v1883 = vmul.bf16 %v1859, %v1875
      %v1884 = vmul.bf16 %v1860, %v1872
      %v1885 = vmul.bf16 %v1861, %v1873
      %v1886 = vmul.bf16 %v1862, %v1875
      %v1887 = vmul.bf16 %v1863, %v1872
      %v1888 = vmul.bf16 %v1864, %v1873
      %v1889 = vmul.bf16 %v1865, %v1875
      %v1890 = vmul.bf16 %v1866, %v1872
      %1903 = vrot.lane.b32.xlu0 %v1879, 112
      %v1904 = vpop.permute.xlu0 %1903
      %1905 = vrot.lane.b32.xlu0 %v1880, 112
      %v1906 = vpop.permute.xlu0 %1905
      %1907 = vrot.lane.b32.xlu0 %v1881, 112
      %v1908 = vpop.permute.xlu0 %1907
      %1909 = vrot.lane.b32.xlu0 %v1882, 112
      %v1910 = vpop.permute.xlu0 %1909
      %1911 = vrot.lane.b32.xlu0 %v1883, 112
      %v1912 = vpop.permute.xlu0 %1911
      %1913 = vrot.lane.b32.xlu0 %v1884, 112
      %v1914 = vpop.permute.xlu0 %1913
      %1915 = vrot.lane.b32.xlu0 %v1885, 112
      %v1916 = vpop.permute.xlu0 %1915
      %1917 = vrot.lane.b32.xlu0 %v1886, 112
      %v1918 = vpop.permute.xlu0 %1917
      %1919 = vrot.lane.b32.xlu0 %v1887, 112
      %v1920 = vpop.permute.xlu0 %1919
      %1921 = vrot.lane.b32.xlu0 %v1888, 112
      %v1922 = vpop.permute.xlu0 %1921
      %1923 = vrot.lane.b32.xlu0 %v1889, 112
      %v1924 = vpop.permute.xlu0 %1923
      %1925 = vrot.lane.b32.xlu0 %v1890, 112
      %v1926 = vpop.permute.xlu0 %1925
      %v1927 = vrot.slane %v1904, 4
      %v1928 = vrot.slane %v1906, 4
      %v1929 = vrot.slane %v1908, 4
      %v1930 = vrot.slane %v1910, 4
      %v1931 = vrot.slane %v1912, 4
      %v1932 = vrot.slane %v1914, 4
      %v1933 = vrot.slane %v1916, 4
      %v1934 = vrot.slane %v1918, 4
      %v1935 = vrot.slane %v1920, 4
      %v1936 = vrot.slane %v1922, 4
      %v1937 = vrot.slane %v1924, 4
      %v1938 = vrot.slane %v1926, 4
      %v1939 = vsel %vm893, %v1927, %v1928
      %v1940 = vsel %vm1097, %v1904, %v1939
      %v1941 = vsel %vm893, %v1928, %v1929
      %v1942 = vsel %vm1097, %v1906, %v1941
      %v1943 = vsel %vm893, %v1930, %v1931
      %v1944 = vsel %vm1097, %v1910, %v1943
      %v1945 = vsel %vm893, %v1931, %v1932
      %v1946 = vsel %vm1097, %v1912, %v1945
      %v1947 = vsel %vm893, %v1933, %v1934
      %v1948 = vsel %vm1097, %v1916, %v1947
      %v1949 = vsel %vm893, %v1934, %v1935
      %v1950 = vsel %vm1097, %v1918, %v1949
      %v1951 = vsel %vm893, %v1936, %v1937
      %v1952 = vsel %vm1097, %v1922, %v1951
      %v1953 = vsel %vm893, %v1937, %v1938
      %v1954 = vsel %vm1097, %v1924, %v1953
      %1963 = vst [vmem:[#allocation3 + $0x1c0] sm:$0xff] %v1940
      %1964 = vst [vmem:[#allocation3 + $0x1c8] sm:$0xff] %v1942
      %1965 = vst [vmem:[#allocation3 + $0x1d0] sm:$0xff] %v1944
      %1966 = vst [vmem:[#allocation3 + $0x1d8] sm:$0xff] %v1946
      %1967 = vst [vmem:[#allocation3 + $0x1e0] sm:$0xff] %v1948
      %1968 = vst [vmem:[#allocation3 + $0x1e8] sm:$0xff] %v1950
      %1969 = vst [vmem:[#allocation3 + $0x1f0] sm:$0xff] %v1952
      %1970 = vst [vmem:[#allocation3 + $0x1f8] sm:$0xff] %v1954
      %v1971 = vld [vmem:[#allocation2 + $0x4] sm:$0xff]
      %v1972 = vld [vmem:[#allocation2 + $0xc] sm:$0xff]
      %v1973 = vld [vmem:[#allocation2 + $0x14] sm:$0xf]
      %v1974 = vld [vmem:[#allocation2 + $0x1c] sm:$0xff]
      %v1975 = vld [vmem:[#allocation2 + $0x24] sm:$0xff]
      %v1976 = vld [vmem:[#allocation2 + $0x2c] sm:$0xf]
      %v1977 = vld [vmem:[#allocation2 + $0x34] sm:$0xff]
      %v1978 = vld [vmem:[#allocation2 + $0x3c] sm:$0xff]
      %v1979 = vld [vmem:[#allocation2 + $0x44] sm:$0xf]
      %v1980 = vld [vmem:[#allocation2 + $0x4c] sm:$0xff]
      %v1981 = vld [vmem:[#allocation2 + $0x54] sm:$0xff]
      %v1982 = vld [vmem:[#allocation2 + $0x5c] sm:$0xf]
      %1983 = vrot.lane.b32.xlu0 %v1725, 17
      %v1984 = vpop.permute.xlu0 %1983
      %1985 = vrot.lane.b32.xlu0 %v1726, 17
      %v1986 = vpop.permute.xlu0 %1985
      %v1987 = vrot.slane %v1984, 4
      %v1988 = vrot.slane %v1986, 4
      %v1989 = vsel %vm1047, %v1987, %v1984
      %v1990 = vsel %vm893, %v1987, %v1988
      %v1991 = vsel %vm1047, %v1990, %v1986
      %v1995 = vmul.bf16 %v1971, %v1989
      %v1996 = vmul.bf16 %v1972, %v1991
      %v1997 = vmul.bf16 %v1973, %v1988
      %v1998 = vmul.bf16 %v1974, %v1989
      %v1999 = vmul.bf16 %v1975, %v1991
      %v2000 = vmul.bf16 %v1976, %v1988
      %v2001 = vmul.bf16 %v1977, %v1989
      %v2002 = vmul.bf16 %v1978, %v1991
      %v2003 = vmul.bf16 %v1979, %v1988
      %v2004 = vmul.bf16 %v1980, %v1989
      %v2005 = vmul.bf16 %v1981, %v1991
      %v2006 = vmul.bf16 %v1982, %v1988
      %2007 = vrot.lane.b32.xlu0 %v1295, 17
      %v2008 = vpop.permute.xlu0 %2007
      %2009 = vrot.lane.b32.xlu0 %v1296, 17
      %v2010 = vpop.permute.xlu0 %2009
      %v2011 = vrot.slane %v2008, 4
      %v2012 = vrot.slane %v2010, 4
      %v2013 = vsel %vm1047, %v2011, %v2008
      %v2014 = vsel %vm893, %v2011, %v2012
      %v2015 = vsel %vm1047, %v2014, %v2010
      %v2019 = vmul.bf16 %v1995, %v2013
      %v2020 = vmul.bf16 %v1996, %v2015
      %v2021 = vmul.bf16 %v1997, %v2012
      %v2022 = vmul.bf16 %v1998, %v2013
      %v2023 = vmul.bf16 %v1999, %v2015
      %v2024 = vmul.bf16 %v2000, %v2012
      %v2025 = vmul.bf16 %v2001, %v2013
      %v2026 = vmul.bf16 %v2002, %v2015
      %v2027 = vmul.bf16 %v2003, %v2012
      %v2028 = vmul.bf16 %v2004, %v2013
      %v2029 = vmul.bf16 %v2005, %v2015
      %v2030 = vmul.bf16 %v2006, %v2012
      %2043 = vrot.lane.b32.xlu0 %v2019, 111
      %v2044 = vpop.permute.xlu0 %2043
      %2045 = vrot.lane.b32.xlu0 %v2020, 111
      %v2046 = vpop.permute.xlu0 %2045
      %2047 = vrot.lane.b32.xlu0 %v2021, 111
      %v2048 = vpop.permute.xlu0 %2047
      %2049 = vrot.lane.b32.xlu0 %v2022, 111
      %v2050 = vpop.permute.xlu0 %2049
      %2051 = vrot.lane.b32.xlu0 %v2023, 111
      %v2052 = vpop.permute.xlu0 %2051
      %2053 = vrot.lane.b32.xlu0 %v2024, 111
      %v2054 = vpop.permute.xlu0 %2053
      %2055 = vrot.lane.b32.xlu0 %v2025, 111
      %v2056 = vpop.permute.xlu0 %2055
      %2057 = vrot.lane.b32.xlu0 %v2026, 111
      %v2058 = vpop.permute.xlu0 %2057
      %2059 = vrot.lane.b32.xlu0 %v2027, 111
      %v2060 = vpop.permute.xlu0 %2059
      %2061 = vrot.lane.b32.xlu0 %v2028, 111
      %v2062 = vpop.permute.xlu0 %2061
      %2063 = vrot.lane.b32.xlu0 %v2029, 111
      %v2064 = vpop.permute.xlu0 %2063
      %2065 = vrot.lane.b32.xlu0 %v2030, 111
      %v2066 = vpop.permute.xlu0 %2065
      %v2067 = vrot.slane %v2044, 4
      %v2068 = vrot.slane %v2046, 4
      %v2069 = vrot.slane %v2048, 4
      %v2070 = vrot.slane %v2050, 4
      %v2071 = vrot.slane %v2052, 4
      %v2072 = vrot.slane %v2054, 4
      %v2073 = vrot.slane %v2056, 4
      %v2074 = vrot.slane %v2058, 4
      %v2075 = vrot.slane %v2060, 4
      %v2076 = vrot.slane %v2062, 4
      %v2077 = vrot.slane %v2064, 4
      %v2078 = vrot.slane %v2066, 4
      %v2079 = vsel %vm893, %v2067, %v2068
      %v2080 = vsel %vm891, %v2044, %v2079
      %v2081 = vsel %vm893, %v2068, %v2069
      %v2082 = vsel %vm891, %v2046, %v2081
      %v2083 = vsel %vm893, %v2070, %v2071
      %v2084 = vsel %vm891, %v2050, %v2083
      %v2085 = vsel %vm893, %v2071, %v2072
      %v2086 = vsel %vm891, %v2052, %v2085
      %v2087 = vsel %vm893, %v2073, %v2074
      %v2088 = vsel %vm891, %v2056, %v2087
      %v2089 = vsel %vm893, %v2074, %v2075
      %v2090 = vsel %vm891, %v2058, %v2089
      %v2091 = vsel %vm893, %v2076, %v2077
      %v2092 = vsel %vm891, %v2062, %v2091
      %v2093 = vsel %vm893, %v2077, %v2078
      %v2094 = vsel %vm891, %v2064, %v2093
      %2103 = vst [vmem:[#allocation3 + $0x200] sm:$0xff] %v2080
      %2104 = vst [vmem:[#allocation3 + $0x208] sm:$0xff] %v2082
      %2105 = vst [vmem:[#allocation3 + $0x210] sm:$0xff] %v2084
      %2106 = vst [vmem:[#allocation3 + $0x218] sm:$0xff] %v2086
      %2107 = vst [vmem:[#allocation3 + $0x220] sm:$0xff] %v2088
      %2108 = vst [vmem:[#allocation3 + $0x228] sm:$0xff] %v2090
      %2109 = vst [vmem:[#allocation3 + $0x230] sm:$0xff] %v2092
      %2110 = vst [vmem:[#allocation3 + $0x238] sm:$0xff] %v2094
      %v2111 = vld [vmem:[%s3] sm:$0xff]
      %v2112 = vld [vmem:[%s3 + $0x8] sm:$0xf]
      %v2113 = vld [vmem:[%s3 + $0xc] sm:$0xff]
      %v2114 = vld [vmem:[%s3 + $0x14] sm:$0xf]
      %v2115 = vld [vmem:[%s3 + $0x18] sm:$0xff]
      %v2116 = vld [vmem:[%s3 + $0x20] sm:$0xf]
      %v2117 = vld [vmem:[%s3 + $0x24] sm:$0xff]
      %v2118 = vld [vmem:[%s3 + $0x2c] sm:$0xf]
      %v2119 = vld [vmem:[#allocation3] sm:$0xff]
      %v2120 = vld [vmem:[#allocation3 + $0x8] sm:$0xff]
      %v2121 = vld [vmem:[#allocation3 + $0x10] sm:$0xff]
      %v2122 = vld [vmem:[#allocation3 + $0x18] sm:$0xff]
      %v2123 = vld [vmem:[#allocation3 + $0x20] sm:$0xff]
      %v2124 = vld [vmem:[#allocation3 + $0x28] sm:$0xff]
      %v2125 = vld [vmem:[#allocation3 + $0x30] sm:$0xff]
      %v2126 = vld [vmem:[#allocation3 + $0x38] sm:$0xff]
      %v2127 = vld [vmem:[#allocation3 + $0x40] sm:$0xff]
      %v2128 = vld [vmem:[#allocation3 + $0x48] sm:$0xff]
      %v2129 = vld [vmem:[#allocation3 + $0x50] sm:$0xff]
      %v2130 = vld [vmem:[#allocation3 + $0x58] sm:$0xff]
      %v2131 = vld [vmem:[#allocation3 + $0x60] sm:$0xff]
      %v2132 = vld [vmem:[#allocation3 + $0x68] sm:$0xff]
      %v2133 = vld [vmem:[#allocation3 + $0x70] sm:$0xff]
      %v2134 = vld [vmem:[#allocation3 + $0x78] sm:$0xff]
      %v2135 = vld [vmem:[#allocation3 + $0x80] sm:$0xff]
      %v2136 = vld [vmem:[#allocation3 + $0x88] sm:$0xff]
      %v2137 = vld [vmem:[#allocation3 + $0x90] sm:$0xff]
      %v2138 = vld [vmem:[#allocation3 + $0x98] sm:$0xff]
      %v2139 = vld [vmem:[#allocation3 + $0xa0] sm:$0xff]
      %v2140 = vld [vmem:[#allocation3 + $0xa8] sm:$0xff]
      %v2141 = vld [vmem:[#allocation3 + $0xb0] sm:$0xff]
      %v2142 = vld [vmem:[#allocation3 + $0xb8] sm:$0xff]
      %v2143 = vld [vmem:[#allocation3 + $0xc0] sm:$0xff]
      %v2144 = vld [vmem:[#allocation3 + $0xc8] sm:$0xff]
      %v2145 = vld [vmem:[#allocation3 + $0xd0] sm:$0xff]
      %v2146 = vld [vmem:[#allocation3 + $0xd8] sm:$0xff]
      %v2147 = vld [vmem:[#allocation3 + $0xe0] sm:$0xff]
      %v2148 = vld [vmem:[#allocation3 + $0xe8] sm:$0xff]
      %v2149 = vld [vmem:[#allocation3 + $0xf0] sm:$0xff]
      %v2150 = vld [vmem:[#allocation3 + $0xf8] sm:$0xff]
      %v2151 = vld [vmem:[#allocation3 + $0x100] sm:$0xff]
      %v2152 = vld [vmem:[#allocation3 + $0x108] sm:$0xff]
      %v2153 = vld [vmem:[#allocation3 + $0x110] sm:$0xff]
      %v2154 = vld [vmem:[#allocation3 + $0x118] sm:$0xff]
      %v2155 = vld [vmem:[#allocation3 + $0x120] sm:$0xff]
      %v2156 = vld [vmem:[#allocation3 + $0x128] sm:$0xff]
      %v2157 = vld [vmem:[#allocation3 + $0x130] sm:$0xff]
      %v2158 = vld [vmem:[#allocation3 + $0x138] sm:$0xff]
      %v2159 = vld [vmem:[#allocation3 + $0x140] sm:$0xff]
      %v2160 = vld [vmem:[#allocation3 + $0x148] sm:$0xff]
      %v2161 = vld [vmem:[#allocation3 + $0x150] sm:$0xff]
      %v2162 = vld [vmem:[#allocation3 + $0x158] sm:$0xff]
      %v2163 = vld [vmem:[#allocation3 + $0x160] sm:$0xff]
      %v2164 = vld [vmem:[#allocation3 + $0x168] sm:$0xff]
      %v2165 = vld [vmem:[#allocation3 + $0x170] sm:$0xff]
      %v2166 = vld [vmem:[#allocation3 + $0x178] sm:$0xff]
      %v2167 = vld [vmem:[#allocation3 + $0x180] sm:$0xff]
      %v2168 = vld [vmem:[#allocation3 + $0x188] sm:$0xff]
      %v2169 = vld [vmem:[#allocation3 + $0x190] sm:$0xff]
      %v2170 = vld [vmem:[#allocation3 + $0x198] sm:$0xff]
      %v2171 = vld [vmem:[#allocation3 + $0x1a0] sm:$0xff]
      %v2172 = vld [vmem:[#allocation3 + $0x1a8] sm:$0xff]
      %v2173 = vld [vmem:[#allocation3 + $0x1b0] sm:$0xff]
      %v2174 = vld [vmem:[#allocation3 + $0x1b8] sm:$0xff]
      %v2175 = vld [vmem:[#allocation3 + $0x1c0] sm:$0xff]
      %v2176 = vld [vmem:[#allocation3 + $0x1c8] sm:$0xff]
      %v2177 = vld [vmem:[#allocation3 + $0x1d0] sm:$0xff]
      %v2178 = vld [vmem:[#allocation3 + $0x1d8] sm:$0xff]
      %v2179 = vld [vmem:[#allocation3 + $0x1e0] sm:$0xff]
      %v2180 = vld [vmem:[#allocation3 + $0x1e8] sm:$0xff]
      %v2181 = vld [vmem:[#allocation3 + $0x1f0] sm:$0xff]
      %v2182 = vld [vmem:[#allocation3 + $0x1f8] sm:$0xff]
      %v2183 = vld [vmem:[#allocation3 + $0x200] sm:$0xff]
      %v2184 = vld [vmem:[#allocation3 + $0x208] sm:$0xff]
      %v2185 = vld [vmem:[#allocation3 + $0x210] sm:$0xff]
      %v2186 = vld [vmem:[#allocation3 + $0x218] sm:$0xff]
      %v2187 = vld [vmem:[#allocation3 + $0x220] sm:$0xff]
      %v2188 = vld [vmem:[#allocation3 + $0x228] sm:$0xff]
      %v2189 = vld [vmem:[#allocation3 + $0x230] sm:$0xff]
      %v2190 = vld [vmem:[#allocation3 + $0x238] sm:$0xff]
      %v2191 = vld [vmem:[%s4] sm:$0xff]
      %v2192 = vld [vmem:[%s4 + $0x8] sm:$0xff]
      %v2193 = vld [vmem:[%s4 + $0x10] sm:$0xff]
      %v2194 = vld [vmem:[%s4 + $0x18] sm:$0xff]
      %2196 = vset.pattern.permute.xlu0 0
      %2197 = vperm.xlu0 %2196, %v2191
      %v2198 = vpop.permute.xlu0 %2197
      %2201 = vset.pattern.permute.xlu0 0
      %2202 = vperm.xlu0 %2201, %v2192
      %v2203 = vpop.permute.xlu0 %2202
      %2206 = vset.pattern.permute.xlu0 0
      %2207 = vperm.xlu0 %2206, %v2193
      %v2208 = vpop.permute.xlu0 %2207
      %2211 = vset.pattern.permute.xlu0 0
      %2212 = vperm.xlu0 %2211, %v2194
      %v2213 = vpop.permute.xlu0 %2212
      %v2223 = vunpack.c.l.b16 %v2111
      %v2224 = vunpack.c.h.b16 %v2111
      %v2225 = vunpack.c.l.b16 %v2112
      %v2226 = vunpack.c.l.b16 %v2113
      %v2227 = vunpack.c.h.b16 %v2113
      %v2228 = vunpack.c.l.b16 %v2114
      %v2229 = vunpack.c.l.b16 %v2115
      %v2230 = vunpack.c.h.b16 %v2115
      %v2231 = vunpack.c.l.b16 %v2116
      %v2232 = vunpack.c.l.b16 %v2117
      %v2233 = vunpack.c.h.b16 %v2117
      %v2234 = vunpack.c.l.b16 %v2118
      %v2235 = vpack.c.b16 %v2226, %v2223
      %v2236 = vpack.c.b16 %v2227, %v2224
      %v2237 = vpack.c.b16 %v2228, %v2225
      %v2238 = vpack.c.b16 %v2232, %v2229
      %v2239 = vpack.c.b16 %v2233, %v2230
      %v2240 = vpack.c.b16 %v2234, %v2231
      %v2317 = vunpack.c.l.b16 %v2119
      %v2318 = vunpack.c.h.b16 %v2119
      %v2319 = vunpack.c.l.b16 %v2120
      %v2320 = vunpack.c.h.b16 %v2120
      %v2321 = vunpack.c.l.b16 %v2121
      %v2322 = vunpack.c.h.b16 %v2121
      %v2323 = vunpack.c.l.b16 %v2122
      %v2324 = vunpack.c.h.b16 %v2122
      %v2325 = vunpack.c.l.b16 %v2123
      %v2326 = vunpack.c.h.b16 %v2123
      %v2327 = vunpack.c.l.b16 %v2124
      %v2328 = vunpack.c.h.b16 %v2124
      %v2329 = vunpack.c.l.b16 %v2125
      %v2330 = vunpack.c.h.b16 %v2125
      %v2331 = vunpack.c.l.b16 %v2126
      %v2332 = vunpack.c.h.b16 %v2126
      %v2333 = vunpack.c.l.b16 %v2127
      %v2334 = vunpack.c.h.b16 %v2127
      %v2335 = vunpack.c.l.b16 %v2128
      %v2336 = vunpack.c.h.b16 %v2128
      %v2337 = vunpack.c.l.b16 %v2129
      %v2338 = vunpack.c.h.b16 %v2129
      %v2339 = vunpack.c.l.b16 %v2130
      %v2340 = vunpack.c.h.b16 %v2130
      %v2341 = vunpack.c.l.b16 %v2131
      %v2342 = vunpack.c.h.b16 %v2131
      %v2343 = vunpack.c.l.b16 %v2132
      %v2344 = vunpack.c.h.b16 %v2132
      %v2345 = vunpack.c.l.b16 %v2133
      %v2346 = vunpack.c.h.b16 %v2133
      %v2347 = vunpack.c.l.b16 %v2134
      %v2348 = vunpack.c.h.b16 %v2134
      %v2349 = vunpack.c.l.b16 %v2135
      %v2350 = vunpack.c.h.b16 %v2135
      %v2351 = vunpack.c.l.b16 %v2136
      %v2352 = vunpack.c.h.b16 %v2136
      %v2353 = vunpack.c.l.b16 %v2137
      %v2354 = vunpack.c.h.b16 %v2137
      %v2355 = vunpack.c.l.b16 %v2138
      %v2356 = vunpack.c.h.b16 %v2138
      %v2357 = vunpack.c.l.b16 %v2139
      %v2358 = vunpack.c.h.b16 %v2139
      %v2359 = vunpack.c.l.b16 %v2140
      %v2360 = vunpack.c.h.b16 %v2140
      %v2361 = vunpack.c.l.b16 %v2141
      %v2362 = vunpack.c.h.b16 %v2141
      %v2363 = vunpack.c.l.b16 %v2142
      %v2364 = vunpack.c.h.b16 %v2142
      %v2365 = vunpack.c.l.b16 %v2143
      %v2366 = vunpack.c.h.b16 %v2143
      %v2367 = vunpack.c.l.b16 %v2144
      %v2368 = vunpack.c.h.b16 %v2144
      %v2369 = vunpack.c.l.b16 %v2145
      %v2370 = vunpack.c.h.b16 %v2145
      %v2371 = vunpack.c.l.b16 %v2146
      %v2372 = vunpack.c.h.b16 %v2146
      %v2373 = vunpack.c.l.b16 %v2147
      %v2374 = vunpack.c.h.b16 %v2147
      %v2375 = vunpack.c.l.b16 %v2148
      %v2376 = vunpack.c.h.b16 %v2148
      %v2377 = vunpack.c.l.b16 %v2149
      %v2378 = vunpack.c.h.b16 %v2149
      %v2379 = vunpack.c.l.b16 %v2150
      %v2380 = vunpack.c.h.b16 %v2150
      %v2381 = vunpack.c.l.b16 %v2151
      %v2382 = vunpack.c.h.b16 %v2151
      %v2383 = vunpack.c.l.b16 %v2152
      %v2384 = vunpack.c.h.b16 %v2152
      %v2385 = vunpack.c.l.b16 %v2153
      %v2386 = vunpack.c.h.b16 %v2153
      %v2387 = vunpack.c.l.b16 %v2154
      %v2388 = vunpack.c.h.b16 %v2154
      %v2389 = vunpack.c.l.b16 %v2155
      %v2390 = vunpack.c.h.b16 %v2155
      %v2391 = vunpack.c.l.b16 %v2156
      %v2392 = vunpack.c.h.b16 %v2156
      %v2393 = vunpack.c.l.b16 %v2157
      %v2394 = vunpack.c.h.b16 %v2157
      %v2395 = vunpack.c.l.b16 %v2158
      %v2396 = vunpack.c.h.b16 %v2158
      %v2397 = vunpack.c.l.b16 %v2159
      %v2398 = vunpack.c.h.b16 %v2159
      %v2399 = vunpack.c.l.b16 %v2160
      %v2400 = vunpack.c.h.b16 %v2160
      %v2401 = vunpack.c.l.b16 %v2161
      %v2402 = vunpack.c.h.b16 %v2161
      %v2403 = vunpack.c.l.b16 %v2162
      %v2404 = vunpack.c.h.b16 %v2162
      %v2405 = vunpack.c.l.b16 %v2163
      %v2406 = vunpack.c.h.b16 %v2163
      %v2407 = vunpack.c.l.b16 %v2164
      %v2408 = vunpack.c.h.b16 %v2164
      %v2409 = vunpack.c.l.b16 %v2165
      %v2410 = vunpack.c.h.b16 %v2165
      %v2411 = vunpack.c.l.b16 %v2166
      %v2412 = vunpack.c.h.b16 %v2166
      %v2413 = vunpack.c.l.b16 %v2167
      %v2414 = vunpack.c.h.b16 %v2167
      %v2415 = vunpack.c.l.b16 %v2168
      %v2416 = vunpack.c.h.b16 %v2168
      %v2417 = vunpack.c.l.b16 %v2169
      %v2418 = vunpack.c.h.b16 %v2169
      %v2419 = vunpack.c.l.b16 %v2170
      %v2420 = vunpack.c.h.b16 %v2170
      %v2421 = vunpack.c.l.b16 %v2171
      %v2422 = vunpack.c.h.b16 %v2171
      %v2423 = vunpack.c.l.b16 %v2172
      %v2424 = vunpack.c.h.b16 %v2172
      %v2425 = vunpack.c.l.b16 %v2173
      %v2426 = vunpack.c.h.b16 %v2173
      %v2427 = vunpack.c.l.b16 %v2174
      %v2428 = vunpack.c.h.b16 %v2174
      %v2429 = vunpack.c.l.b16 %v2175
      %v2430 = vunpack.c.h.b16 %v2175
      %v2431 = vunpack.c.l.b16 %v2176
      %v2432 = vunpack.c.h.b16 %v2176
      %v2433 = vunpack.c.l.b16 %v2177
      %v2434 = vunpack.c.h.b16 %v2177
      %v2435 = vunpack.c.l.b16 %v2178
      %v2436 = vunpack.c.h.b16 %v2178
      %v2437 = vunpack.c.l.b16 %v2179
      %v2438 = vunpack.c.h.b16 %v2179
      %v2439 = vunpack.c.l.b16 %v2180
      %v2440 = vunpack.c.h.b16 %v2180
      %v2441 = vunpack.c.l.b16 %v2181
      %v2442 = vunpack.c.h.b16 %v2181
      %v2443 = vunpack.c.l.b16 %v2182
      %v2444 = vunpack.c.h.b16 %v2182
      %v2445 = vunpack.c.l.b16 %v2183
      %v2446 = vunpack.c.h.b16 %v2183
      %v2447 = vunpack.c.l.b16 %v2184
      %v2448 = vunpack.c.h.b16 %v2184
      %v2449 = vunpack.c.l.b16 %v2185
      %v2450 = vunpack.c.h.b16 %v2185
      %v2451 = vunpack.c.l.b16 %v2186
      %v2452 = vunpack.c.h.b16 %v2186
      %v2453 = vunpack.c.l.b16 %v2187
      %v2454 = vunpack.c.h.b16 %v2187
      %v2455 = vunpack.c.l.b16 %v2188
      %v2456 = vunpack.c.h.b16 %v2188
      %v2457 = vunpack.c.l.b16 %v2189
      %v2458 = vunpack.c.h.b16 %v2189
      %v2459 = vunpack.c.l.b16 %v2190
      %v2460 = vunpack.c.h.b16 %v2190
      %v2461 = vpack.c.b16 %v2321, %v2317
      %v2462 = vpack.c.b16 %v2322, %v2318
      %v2463 = vpack.c.b16 %v2323, %v2319
      %v2464 = vpack.c.b16 %v2324, %v2320
      %v2465 = vpack.c.b16 %v2329, %v2325
      %v2466 = vpack.c.b16 %v2330, %v2326
      %v2467 = vpack.c.b16 %v2331, %v2327
      %v2468 = vpack.c.b16 %v2332, %v2328
      %v2469 = vpack.c.b16 %v2337, %v2333
      %v2470 = vpack.c.b16 %v2338, %v2334
      %v2471 = vpack.c.b16 %v2339, %v2335
      %v2472 = vpack.c.b16 %v2340, %v2336
      %v2473 = vpack.c.b16 %v2345, %v2341
      %v2474 = vpack.c.b16 %v2346, %v2342
      %v2475 = vpack.c.b16 %v2347, %v2343
      %v2476 = vpack.c.b16 %v2348, %v2344
      %v2477 = vpack.c.b16 %v2353, %v2349
      %v2478 = vpack.c.b16 %v2354, %v2350
      %v2479 = vpack.c.b16 %v2355, %v2351
      %v2480 = vpack.c.b16 %v2356, %v2352
      %v2481 = vpack.c.b16 %v2361, %v2357
      %v2482 = vpack.c.b16 %v2362, %v2358
      %v2483 = vpack.c.b16 %v2363, %v2359
      %v2484 = vpack.c.b16 %v2364, %v2360
      %v2485 = vpack.c.b16 %v2369, %v2365
      %v2486 = vpack.c.b16 %v2370, %v2366
      %v2487 = vpack.c.b16 %v2371, %v2367
      %v2488 = vpack.c.b16 %v2372, %v2368
      %v2489 = vpack.c.b16 %v2377, %v2373
      %v2490 = vpack.c.b16 %v2378, %v2374
      %v2491 = vpack.c.b16 %v2379, %v2375
      %v2492 = vpack.c.b16 %v2380, %v2376
      %v2493 = vpack.c.b16 %v2385, %v2381
      %v2494 = vpack.c.b16 %v2386, %v2382
      %v2495 = vpack.c.b16 %v2387, %v2383
      %v2496 = vpack.c.b16 %v2388, %v2384
      %v2497 = vpack.c.b16 %v2393, %v2389
      %v2498 = vpack.c.b16 %v2394, %v2390
      %v2499 = vpack.c.b16 %v2395, %v2391
      %v2500 = vpack.c.b16 %v2396, %v2392
      %v2501 = vpack.c.b16 %v2401, %v2397
      %v2502 = vpack.c.b16 %v2402, %v2398
      %v2503 = vpack.c.b16 %v2403, %v2399
      %v2504 = vpack.c.b16 %v2404, %v2400
      %v2505 = vpack.c.b16 %v2409, %v2405
      %v2506 = vpack.c.b16 %v2410, %v2406
      %v2507 = vpack.c.b16 %v2411, %v2407
      %v2508 = vpack.c.b16 %v2412, %v2408
      %v2509 = vpack.c.b16 %v2417, %v2413
      %v2510 = vpack.c.b16 %v2418, %v2414
      %v2511 = vpack.c.b16 %v2419, %v2415
      %v2512 = vpack.c.b16 %v2420, %v2416
      %v2513 = vpack.c.b16 %v2425, %v2421
      %v2514 = vpack.c.b16 %v2426, %v2422
      %v2515 = vpack.c.b16 %v2427, %v2423
      %v2516 = vpack.c.b16 %v2428, %v2424
      %v2517 = vpack.c.b16 %v2433, %v2429
      %v2518 = vpack.c.b16 %v2434, %v2430
      %v2519 = vpack.c.b16 %v2435, %v2431
      %v2520 = vpack.c.b16 %v2436, %v2432
      %v2521 = vpack.c.b16 %v2441, %v2437
      %v2522 = vpack.c.b16 %v2442, %v2438
      %v2523 = vpack.c.b16 %v2443, %v2439
      %v2524 = vpack.c.b16 %v2444, %v2440
      %v2525 = vpack.c.b16 %v2449, %v2445
      %v2526 = vpack.c.b16 %v2450, %v2446
      %v2527 = vpack.c.b16 %v2451, %v2447
      %v2528 = vpack.c.b16 %v2452, %v2448
      %v2529 = vpack.c.b16 %v2457, %v2453
      %v2530 = vpack.c.b16 %v2458, %v2454
      %v2531 = vpack.c.b16 %v2459, %v2455
      %v2532 = vpack.c.b16 %v2460, %v2456
      %vm2605 = vcmask 261120
      %v2607 = vsel %vm2605, %v2237, 0
      %v2610 = vsel %vm2605, %v2240, 0
      %2612 = vmatprep.subr.bf16.mxu0 %v2490
      %2613 = vmatpush1.bf16.msra.mxu0 %v2489
      %2614 = vmatprep.subr.bf16.mxu0 %v2486
      %2615 = vmatpush1.bf16.msra.mxu0 %v2485
      %2616 = vmatprep.subr.bf16.mxu0 %v2482
      %2617 = vmatpush1.bf16.msra.mxu0 %v2481
      %2618 = vmatprep.subr.bf16.mxu0 %v2478
      %2619 = vmatpush1.bf16.msra.mxu0 %v2477
      %2620 = vmatprep.subr.bf16.mxu0 %v2474
      %2621 = vmatpush1.bf16.msra.mxu0 %v2473
      %2622 = vmatprep.subr.bf16.mxu0 %v2470
      %2623 = vmatpush1.bf16.msra.mxu0 %v2469
      %2624 = vmatprep.subr.bf16.mxu0 %v2466
      %2625 = vmatpush1.bf16.msra.mxu0 %v2465
      %2626 = vmatprep.subr.bf16.mxu0 %v2462
      %2627 = vmatpush1.bf16.msra.mxu0 %v2461
      %2628 = vmatprep.subr.bf16.mxu0 %v2522
      %2629 = vmatpush2.bf16.msra.mxu0 %v2521
      %2630 = vmatprep.subr.bf16.mxu0 %v2518
      %2631 = vmatpush2.bf16.msra.mxu0 %v2517
      %2632 = vmatprep.subr.bf16.mxu0 %v2514
      %2633 = vmatpush2.bf16.msra.mxu0 %v2513
      %2634 = vmatprep.subr.bf16.mxu0 %v2510
      %2635 = vmatpush2.bf16.msra.mxu0 %v2509
      %2636 = vmatprep.subr.bf16.mxu0 %v2506
      %2637 = vmatpush2.bf16.msra.mxu0 %v2505
      %2638 = vmatprep.subr.bf16.mxu0 %v2502
      %2639 = vmatpush2.bf16.msra.mxu0 %v2501
      %2640 = vmatprep.subr.bf16.mxu0 %v2498
      %2641 = vmatpush2.bf16.msra.mxu0 %v2497
      %2642 = vmatprep.subr.bf16.mxu0 %v2494
      %2643 = vmatpush2.bf16.msra.mxu0 %v2493
      %2644 = vmatprep.mubr.bf16.mxu0 %v2236
      %2645 = vmatmul.mubr.bf16.gmra.mxu0 %v2235
      %v2646 = vpop.f32.mrf.mxu0
      %v2647 = vadd.f32 %v2198, %v2646
      %v2648 = vpop.f32.mrf.mxu0
      %v2649 = vadd.f32 %v2198, %v2648
      %v2650 = vpop.f32.mrf.mxu0
      %v2651 = vadd.f32 %v2203, %v2650
      %v2652 = vpop.f32.mrf.mxu0
      %v2653 = vadd.f32 %v2203, %v2652
      %2654 = vmatprep.mubr.bf16.mxu0 %v2239
      %2655 = vmatmul.mubr.bf16.gmra.mxu0 %v2238
      %v2656 = vpop.f32.mrf.mxu0
      %v2657 = vadd.f32 %v2208, %v2656
      %v2658 = vpop.f32.mrf.mxu0
      %v2659 = vadd.f32 %v2208, %v2658
      %v2660 = vpop.f32.mrf.mxu0
      %v2661 = vadd.f32 %v2213, %v2660
      %v2662 = vpop.f32.mrf.mxu0
      %v2663 = vadd.f32 %v2213, %v2662
      %2664 = vdwg.mxu0
      %2665 = vmatprep.subr.bf16.mxu0 0
      %2666 = vmatpush1.bf16.msra.mxu0 0
      %2667 = vmatprep.subr.bf16.mxu0 0
      %2668 = vmatpush1.bf16.msra.mxu0 0
      %2669 = vmatprep.subr.bf16.mxu0 0
      %2670 = vmatpush1.bf16.msra.mxu0 0
      %2671 = vmatprep.subr.bf16.mxu0 0
      %2672 = vmatpush1.bf16.msra.mxu0 0
      %2673 = vmatprep.subr.bf16.mxu0 0
      %2674 = vmatpush1.bf16.msra.mxu0 0
      %2675 = vmatprep.subr.bf16.mxu0 0
      %2676 = vmatpush1.bf16.msra.mxu0 0
      %2677 = vmatprep.subr.bf16.mxu0 %v2530
      %2678 = vmatpush1.bf16.msra.mxu0 %v2529
      %2679 = vmatprep.subr.bf16.mxu0 %v2526
      %2680 = vmatpush1.bf16.msra.mxu0 %v2525
      %2681 = vmatprep.subr.bf16.mxu0 0
      %2682 = vmatpush2.bf16.msra.mxu0 0
      %2683 = vmatprep.subr.bf16.mxu0 0
      %2684 = vmatpush2.bf16.msra.mxu0 0
      %2685 = vmatprep.subr.bf16.mxu0 0
      %2686 = vmatpush2.bf16.msra.mxu0 0
      %2687 = vmatprep.subr.bf16.mxu0 0
      %2688 = vmatpush2.bf16.msra.mxu0 0
      %2689 = vmatprep.subr.bf16.mxu0 0
      %2690 = vmatpush2.bf16.msra.mxu0 0
      %2691 = vmatprep.subr.bf16.mxu0 0
      %2692 = vmatpush2.bf16.msra.mxu0 0
      %2693 = vmatprep.subr.bf16.mxu0 0
      %2694 = vmatpush2.bf16.msra.mxu0 0
      %2695 = vmatprep.subr.bf16.mxu0 0
      %2696 = vmatpush2.bf16.msra.mxu0 0
      %2697 = vmatprep.mubr.bf16.mxu0 0
      %2698 = vmatmul.mubr.bf16.gmra.mxu0 %v2607
      %v2699 = vpop.f32.mrf.mxu0
      %v2700 = vadd.f32 %v2647, %v2699
      %v2701 = vpop.f32.mrf.mxu0
      %v2702 = vadd.f32 %v2649, %v2701
      %v2703 = vpop.f32.mrf.mxu0
      %v2704 = vadd.f32 %v2651, %v2703
      %v2705 = vpop.f32.mrf.mxu0
      %v2706 = vadd.f32 %v2653, %v2705
      %2707 = vmatprep.mubr.bf16.mxu0 0
      %2708 = vmatmul.mubr.bf16.gmra.mxu0 %v2610
      %v2709 = vpop.f32.mrf.mxu0
      %v2710 = vadd.f32 %v2657, %v2709
      %v2711 = vpop.f32.mrf.mxu0
      %v2712 = vadd.f32 %v2659, %v2711
      %v2713 = vpop.f32.mrf.mxu0
      %v2714 = vadd.f32 %v2661, %v2713
      %v2715 = vpop.f32.mrf.mxu0
      %v2716 = vadd.f32 %v2663, %v2715
      %2717 = vdwg.mxu0
      %2718 = vmatprep.subr.bf16.mxu0 %v2492
      %2719 = vmatpush1.bf16.msra.mxu0 %v2491
      %2720 = vmatprep.subr.bf16.mxu0 %v2488
      %2721 = vmatpush1.bf16.msra.mxu0 %v2487
      %2722 = vmatprep.subr.bf16.mxu0 %v2484
      %2723 = vmatpush1.bf16.msra.mxu0 %v2483
      %2724 = vmatprep.subr.bf16.mxu0 %v2480
      %2725 = vmatpush1.bf16.msra.mxu0 %v2479
      %2726 = vmatprep.subr.bf16.mxu0 %v2476
      %2727 = vmatpush1.bf16.msra.mxu0 %v2475
      %2728 = vmatprep.subr.bf16.mxu0 %v2472
      %2729 = vmatpush1.bf16.msra.mxu0 %v2471
      %2730 = vmatprep.subr.bf16.mxu0 %v2468
      %2731 = vmatpush1.bf16.msra.mxu0 %v2467
      %2732 = vmatprep.subr.bf16.mxu0 %v2464
      %2733 = vmatpush1.bf16.msra.mxu0 %v2463
      %2734 = vmatprep.subr.bf16.mxu0 %v2524
      %2735 = vmatpush2.bf16.msra.mxu0 %v2523
      %2736 = vmatprep.subr.bf16.mxu0 %v2520
      %2737 = vmatpush2.bf16.msra.mxu0 %v2519
      %2738 = vmatprep.subr.bf16.mxu0 %v2516
      %2739 = vmatpush2.bf16.msra.mxu0 %v2515
      %2740 = vmatprep.subr.bf16.mxu0 %v2512
      %2741 = vmatpush2.bf16.msra.mxu0 %v2511
      %2742 = vmatprep.subr.bf16.mxu0 %v2508
      %2743 = vmatpush2.bf16.msra.mxu0 %v2507
      %2744 = vmatprep.subr.bf16.mxu0 %v2504
      %2745 = vmatpush2.bf16.msra.mxu0 %v2503
      %2746 = vmatprep.subr.bf16.mxu0 %v2500
      %2747 = vmatpush2.bf16.msra.mxu0 %v2499
      %2748 = vmatprep.subr.bf16.mxu0 %v2496
      %2749 = vmatpush2.bf16.msra.mxu0 %v2495
      %2750 = vmatprep.mubr.bf16.mxu0 %v2236
      %2751 = vmatmul.mubr.bf16.gmra.mxu0 %v2235
      %v2752 = vpop.f32.mrf.mxu0
      %v2753 = vadd.f32 %v2198, %v2752
      %v2754 = vpop.f32.mrf.mxu0
      %v2755 = vadd.f32 %v2198, %v2754
      %v2756 = vpop.f32.mrf.mxu0
      %v2757 = vadd.f32 %v2203, %v2756
      %v2758 = vpop.f32.mrf.mxu0
      %v2759 = vadd.f32 %v2203, %v2758
      %2760 = vmatprep.mubr.bf16.mxu0 %v2239
      %2761 = vmatmul.mubr.bf16.gmra.mxu0 %v2238
      %v2762 = vpop.f32.mrf.mxu0
      %v2763 = vadd.f32 %v2208, %v2762
      %v2764 = vpop.f32.mrf.mxu0
      %v2765 = vadd.f32 %v2208, %v2764
      %v2766 = vpop.f32.mrf.mxu0
      %v2767 = vadd.f32 %v2213, %v2766
      %v2768 = vpop.f32.mrf.mxu0
      %v2769 = vadd.f32 %v2213, %v2768
      %2770 = vdwg.mxu0
      %2771 = vmatprep.subr.bf16.mxu0 0
      %2772 = vmatpush1.bf16.msra.mxu0 0
      %2773 = vmatprep.subr.bf16.mxu0 0
      %2774 = vmatpush1.bf16.msra.mxu0 0
      %2775 = vmatprep.subr.bf16.mxu0 0
      %2776 = vmatpush1.bf16.msra.mxu0 0
      %2777 = vmatprep.subr.bf16.mxu0 0
      %2778 = vmatpush1.bf16.msra.mxu0 0
      %2779 = vmatprep.subr.bf16.mxu0 0
      %2780 = vmatpush1.bf16.msra.mxu0 0
      %2781 = vmatprep.subr.bf16.mxu0 0
      %2782 = vmatpush1.bf16.msra.mxu0 0
      %2783 = vmatprep.subr.bf16.mxu0 %v2532
      %2784 = vmatpush1.bf16.msra.mxu0 %v2531
      %2785 = vmatprep.subr.bf16.mxu0 %v2528
      %2786 = vmatpush1.bf16.msra.mxu0 %v2527
      %2787 = vmatprep.subr.bf16.mxu0 0
      %2788 = vmatpush2.bf16.msra.mxu0 0
      %2789 = vmatprep.subr.bf16.mxu0 0
      %2790 = vmatpush2.bf16.msra.mxu0 0
      %2791 = vmatprep.subr.bf16.mxu0 0
      %2792 = vmatpush2.bf16.msra.mxu0 0
      %2793 = vmatprep.subr.bf16.mxu0 0
      %2794 = vmatpush2.bf16.msra.mxu0 0
      %2795 = vmatprep.subr.bf16.mxu0 0
      %2796 = vmatpush2.bf16.msra.mxu0 0
      %2797 = vmatprep.subr.bf16.mxu0 0
      %2798 = vmatpush2.bf16.msra.mxu0 0
      %2799 = vmatprep.subr.bf16.mxu0 0
      %2800 = vmatpush2.bf16.msra.mxu0 0
      %2801 = vmatprep.subr.bf16.mxu0 0
      %2802 = vmatpush2.bf16.msra.mxu0 0
      %2803 = vmatprep.mubr.bf16.mxu0 0
      %2804 = vmatmul.mubr.bf16.gmra.mxu0 %v2607
      %v2805 = vpop.f32.mrf.mxu0
      %v2806 = vadd.f32 %v2753, %v2805
      %v2807 = vpop.f32.mrf.mxu0
      %v2808 = vadd.f32 %v2755, %v2807
      %v2809 = vpop.f32.mrf.mxu0
      %v2810 = vadd.f32 %v2757, %v2809
      %v2811 = vpop.f32.mrf.mxu0
      %v2812 = vadd.f32 %v2759, %v2811
      %2813 = vmatprep.mubr.bf16.mxu0 0
      %2814 = vmatmul.mubr.bf16.gmra.mxu0 %v2610
      %v2815 = vpop.f32.mrf.mxu0
      %v2816 = vadd.f32 %v2763, %v2815
      %v2817 = vpop.f32.mrf.mxu0
      %v2818 = vadd.f32 %v2765, %v2817
      %v2819 = vpop.f32.mrf.mxu0
      %v2820 = vadd.f32 %v2767, %v2819
      %v2821 = vpop.f32.mrf.mxu0
      %v2822 = vadd.f32 %v2769, %v2821
      %2823 = vdwg.mxu0
      %v2824 = vmax.f32 %v2700, 0.0
      %v2825 = vmax.f32 %v2702, 0.0
      %v2826 = vmax.f32 %v2806, 0.0
      %v2827 = vmax.f32 %v2808, 0.0
      %v2828 = vmax.f32 %v2704, 0.0
      %v2829 = vmax.f32 %v2706, 0.0
      %v2830 = vmax.f32 %v2810, 0.0
      %v2831 = vmax.f32 %v2812, 0.0
      %v2832 = vmax.f32 %v2710, 0.0
      %v2833 = vmax.f32 %v2712, 0.0
      %v2834 = vmax.f32 %v2816, 0.0
      %v2835 = vmax.f32 %v2818, 0.0
      %v2836 = vmax.f32 %v2714, 0.0
      %v2837 = vmax.f32 %v2716, 0.0
      %v2838 = vmax.f32 %v2820, 0.0
      %v2839 = vmax.f32 %v2822, 0.0
      %v2840 = vld [vmem:[%s5] sm:$0xf]
      %v2841 = vld [vmem:[%s5 + $0x4] sm:$0xf]
      %v2842 = vld [vmem:[%s5 + $0x8] sm:$0xf]
      %v2843 = vld [vmem:[%s5 + $0xc] sm:$0xf]
      %v2844 = vld [vmem:[%s5 + $0x10] sm:$0xf]
      %v2845 = vld [vmem:[%s5 + $0x14] sm:$0xf]
      %v2846 = vld [vmem:[%s5 + $0x18] sm:$0xf]
      %v2847 = vld [vmem:[%s5 + $0x1c] sm:$0xf]
      %v2848 = vld [vmem:[%s5 + $0x20] sm:$0xf]
      %v2849 = vld [vmem:[%s5 + $0x24] sm:$0xf]
      %v2850 = vld [vmem:[%s5 + $0x28] sm:$0xf]
      %v2851 = vld [vmem:[%s5 + $0x2c] sm:$0xf]
      %v2852 = vld [vmem:[%s5 + $0x30] sm:$0xf]
      %v2853 = vld [vmem:[%s5 + $0x34] sm:$0xf]
      %v2854 = vld [vmem:[%s5 + $0x38] sm:$0xf]
      %v2855 = vld [vmem:[%s5 + $0x3c] sm:$0xf]
      %v2856 = vpack.c.bf16 %v2828, %v2824
      %v2857 = vpack.c.bf16 %v2829, %v2825
      %v2858 = vpack.c.bf16 %v2830, %v2826
      %v2859 = vpack.c.bf16 %v2831, %v2827
      %v2860 = vpack.c.bf16 %v2836, %v2832
      %v2861 = vpack.c.bf16 %v2837, %v2833
      %v2862 = vpack.c.bf16 %v2838, %v2834
      %v2863 = vpack.c.bf16 %v2839, %v2835
      %v2864 = vld [vmem:[%s6] sm:$0xff]
      %v2865 = vld [vmem:[%s6 + $0x8] sm:$0xff]
      %v2866 = vld [vmem:[%s6 + $0x10] sm:$0xff]
      %v2867 = vld [vmem:[%s6 + $0x18] sm:$0xff]
      %v2868 = vld [vmem:[%s6 + $0x20] sm:$0xff]
      %v2869 = vld [vmem:[%s6 + $0x28] sm:$0xff]
      %v2870 = vld [vmem:[%s6 + $0x30] sm:$0xff]
      %v2871 = vld [vmem:[%s6 + $0x38] sm:$0xff]
      %v2872 = vld [vmem:[%s6 + $0x40] sm:$0xff]
      %v2873 = vld [vmem:[%s6 + $0x48] sm:$0xff]
      %v2874 = vld [vmem:[%s6 + $0x50] sm:$0xff]
      %v2875 = vld [vmem:[%s6 + $0x58] sm:$0xff]
      %v2876 = vld [vmem:[%s6 + $0x60] sm:$0xff]
      %v2877 = vld [vmem:[%s6 + $0x68] sm:$0xff]
      %v2878 = vld [vmem:[%s6 + $0x70] sm:$0xff]
      %v2879 = vld [vmem:[%s6 + $0x78] sm:$0xff]
      %2881 = vset.pattern.permute.xlu0 0
      %2882 = vperm.xlu0 %2881, %v2864
      %v2883 = vpop.permute.xlu0 %2882
      %2886 = vset.pattern.permute.xlu0 0
      %2887 = vperm.xlu0 %2886, %v2865
      %v2888 = vpop.permute.xlu0 %2887
      %2891 = vset.pattern.permute.xlu0 0
      %2892 = vperm.xlu0 %2891, %v2866
      %v2893 = vpop.permute.xlu0 %2892
      %2896 = vset.pattern.permute.xlu0 0
      %2897 = vperm.xlu0 %2896, %v2867
      %v2898 = vpop.permute.xlu0 %2897
      %2901 = vset.pattern.permute.xlu0 0
      %2902 = vperm.xlu0 %2901, %v2868
      %v2903 = vpop.permute.xlu0 %2902
      %2906 = vset.pattern.permute.xlu0 0
      %2907 = vperm.xlu0 %2906, %v2869
      %v2908 = vpop.permute.xlu0 %2907
      %2911 = vset.pattern.permute.xlu0 0
      %2912 = vperm.xlu0 %2911, %v2870
      %v2913 = vpop.permute.xlu0 %2912
      %2916 = vset.pattern.permute.xlu0 0
      %2917 = vperm.xlu0 %2916, %v2871
      %v2918 = vpop.permute.xlu0 %2917
      %2921 = vset.pattern.permute.xlu0 0
      %2922 = vperm.xlu0 %2921, %v2872
      %v2923 = vpop.permute.xlu0 %2922
      %2926 = vset.pattern.permute.xlu0 0
      %2927 = vperm.xlu0 %2926, %v2873
      %v2928 = vpop.permute.xlu0 %2927
      %2931 = vset.pattern.permute.xlu0 0
      %2932 = vperm.xlu0 %2931, %v2874
      %v2933 = vpop.permute.xlu0 %2932
      %2936 = vset.pattern.permute.xlu0 0
      %2937 = vperm.xlu0 %2936, %v2875
      %v2938 = vpop.permute.xlu0 %2937
      %2941 = vset.pattern.permute.xlu0 0
      %2942 = vperm.xlu0 %2941, %v2876
      %v2943 = vpop.permute.xlu0 %2942
      %2946 = vset.pattern.permute.xlu0 0
      %2947 = vperm.xlu0 %2946, %v2877
      %v2948 = vpop.permute.xlu0 %2947
      %2951 = vset.pattern.permute.xlu0 0
      %2952 = vperm.xlu0 %2951, %v2878
      %v2953 = vpop.permute.xlu0 %2952
      %2956 = vset.pattern.permute.xlu0 0
      %2957 = vperm.xlu0 %2956, %v2879
      %v2958 = vpop.permute.xlu0 %2957
      %v2976 = vunpack.c.l.b16 %v2840
      %v2977 = vunpack.c.l.b16 %v2841
      %v2978 = vunpack.c.l.b16 %v2842
      %v2979 = vunpack.c.l.b16 %v2843
      %v2980 = vunpack.c.l.b16 %v2844
      %v2981 = vunpack.c.l.b16 %v2845
      %v2982 = vunpack.c.l.b16 %v2846
      %v2983 = vunpack.c.l.b16 %v2847
      %v2984 = vunpack.c.l.b16 %v2848
      %v2985 = vunpack.c.l.b16 %v2849
      %v2986 = vunpack.c.l.b16 %v2850
      %v2987 = vunpack.c.l.b16 %v2851
      %v2988 = vunpack.c.l.b16 %v2852
      %v2989 = vunpack.c.l.b16 %v2853
      %v2990 = vunpack.c.l.b16 %v2854
      %v2991 = vunpack.c.l.b16 %v2855
      %v2992 = vpack.c.b16 %v2977, %v2976
      %v2993 = vpack.c.b16 %v2979, %v2978
      %v2994 = vpack.c.b16 %v2981, %v2980
      %v2995 = vpack.c.b16 %v2983, %v2982
      %v2996 = vpack.c.b16 %v2985, %v2984
      %v2997 = vpack.c.b16 %v2987, %v2986
      %v2998 = vpack.c.b16 %v2989, %v2988
      %v2999 = vpack.c.b16 %v2991, %v2990
      %v3001 = vsel %vm2605, %v2992, 0
      %v3004 = vsel %vm2605, %v2993, 0
      %v3007 = vsel %vm2605, %v2994, 0
      %v3010 = vsel %vm2605, %v2995, 0
      %v3013 = vsel %vm2605, %v2996, 0
      %v3016 = vsel %vm2605, %v2997, 0
      %v3019 = vsel %vm2605, %v2998, 0
      %v3022 = vsel %vm2605, %v2999, 0
      %3024 = vmatprep.subr.bf16.mxu0 0
      %3025 = vmatpush1.bf16.msra.mxu0 0
      %3026 = vmatprep.subr.bf16.mxu0 0
      %3027 = vmatpush1.bf16.msra.mxu0 0
      %3028 = vmatprep.subr.bf16.mxu0 0
      %3029 = vmatpush1.bf16.msra.mxu0 0
      %3030 = vmatprep.subr.bf16.mxu0 0
      %3031 = vmatpush1.bf16.msra.mxu0 0
      %3032 = vmatprep.subr.bf16.mxu0 0
      %3033 = vmatpush1.bf16.msra.mxu0 0
      %3034 = vmatprep.subr.bf16.mxu0 0
      %3035 = vmatpush1.bf16.msra.mxu0 0
      %3036 = vmatprep.subr.bf16.mxu0 %v2861
      %3037 = vmatpush1.bf16.msra.mxu0 %v2860
      %3038 = vmatprep.subr.bf16.mxu0 %v2857
      %3039 = vmatpush1.bf16.msra.mxu0 %v2856
      %3040 = vmatprep.subr.bf16.mxu0 0
      %3041 = vmatpush2.bf16.msra.mxu0 0
      %3042 = vmatprep.subr.bf16.mxu0 0
      %3043 = vmatpush2.bf16.msra.mxu0 0
      %3044 = vmatprep.subr.bf16.mxu0 0
      %3045 = vmatpush2.bf16.msra.mxu0 0
      %3046 = vmatprep.subr.bf16.mxu0 0
      %3047 = vmatpush2.bf16.msra.mxu0 0
      %3048 = vmatprep.subr.bf16.mxu0 0
      %3049 = vmatpush2.bf16.msra.mxu0 0
      %3050 = vmatprep.subr.bf16.mxu0 0
      %3051 = vmatpush2.bf16.msra.mxu0 0
      %3052 = vmatprep.subr.bf16.mxu0 0
      %3053 = vmatpush2.bf16.msra.mxu0 0
      %3054 = vmatprep.subr.bf16.mxu0 0
      %3055 = vmatpush2.bf16.msra.mxu0 0
      %3056 = vmatprep.mubr.bf16.mxu0 0
      %3057 = vmatmul.mubr.bf16.gmra.mxu0 %v3001
      %v3058 = vpop.f32.mrf.mxu0
      %v3059 = vadd.f32 %v2883, %v3058
      %v3060 = vpop.f32.mrf.mxu0
      %v3061 = vadd.f32 %v2883, %v3060
      %v3062 = vpop.f32.mrf.mxu0
      %v3063 = vadd.f32 %v2888, %v3062
      %v3064 = vpop.f32.mrf.mxu0
      %v3065 = vadd.f32 %v2888, %v3064
      %3066 = vmatprep.mubr.bf16.mxu0 0
      %3067 = vmatmul.mubr.bf16.gmra.mxu0 %v3004
      %v3068 = vpop.f32.mrf.mxu0
      %v3069 = vadd.f32 %v2893, %v3068
      %v3070 = vpop.f32.mrf.mxu0
      %v3071 = vadd.f32 %v2893, %v3070
      %v3072 = vpop.f32.mrf.mxu0
      %v3073 = vadd.f32 %v2898, %v3072
      %v3074 = vpop.f32.mrf.mxu0
      %v3075 = vadd.f32 %v2898, %v3074
      %3076 = vmatprep.mubr.bf16.mxu0 0
      %3077 = vmatmul.mubr.bf16.gmra.mxu0 %v3007
      %v3078 = vpop.f32.mrf.mxu0
      %v3079 = vadd.f32 %v2903, %v3078
      %v3080 = vpop.f32.mrf.mxu0
      %v3081 = vadd.f32 %v2903, %v3080
      %v3082 = vpop.f32.mrf.mxu0
      %v3083 = vadd.f32 %v2908, %v3082
      %v3084 = vpop.f32.mrf.mxu0
      %v3085 = vadd.f32 %v2908, %v3084
      %3086 = vmatprep.mubr.bf16.mxu0 0
      %3087 = vmatmul.mubr.bf16.gmra.mxu0 %v3010
      %v3088 = vpop.f32.mrf.mxu0
      %v3089 = vadd.f32 %v2913, %v3088
      %v3090 = vpop.f32.mrf.mxu0
      %v3091 = vadd.f32 %v2913, %v3090
      %v3092 = vpop.f32.mrf.mxu0
      %v3093 = vadd.f32 %v2918, %v3092
      %v3094 = vpop.f32.mrf.mxu0
      %v3095 = vadd.f32 %v2918, %v3094
      %3096 = vmatprep.mubr.bf16.mxu0 0
      %3097 = vmatmul.mubr.bf16.gmra.mxu0 %v3013
      %v3098 = vpop.f32.mrf.mxu0
      %v3099 = vadd.f32 %v2923, %v3098
      %v3100 = vpop.f32.mrf.mxu0
      %v3101 = vadd.f32 %v2923, %v3100
      %v3102 = vpop.f32.mrf.mxu0
      %v3103 = vadd.f32 %v2928, %v3102
      %v3104 = vpop.f32.mrf.mxu0
      %v3105 = vadd.f32 %v2928, %v3104
      %3106 = vmatprep.mubr.bf16.mxu0 0
      %3107 = vmatmul.mubr.bf16.gmra.mxu0 %v3016
      %v3108 = vpop.f32.mrf.mxu0
      %v3109 = vadd.f32 %v2933, %v3108
      %v3110 = vpop.f32.mrf.mxu0
      %v3111 = vadd.f32 %v2933, %v3110
      %v3112 = vpop.f32.mrf.mxu0
      %v3113 = vadd.f32 %v2938, %v3112
      %v3114 = vpop.f32.mrf.mxu0
      %v3115 = vadd.f32 %v2938, %v3114
      %3116 = vmatprep.mubr.bf16.mxu0 0
      %3117 = vmatmul.mubr.bf16.gmra.mxu0 %v3019
      %v3118 = vpop.f32.mrf.mxu0
      %v3119 = vadd.f32 %v2943, %v3118
      %v3120 = vpop.f32.mrf.mxu0
      %v3121 = vadd.f32 %v2943, %v3120
      %v3122 = vpop.f32.mrf.mxu0
      %v3123 = vadd.f32 %v2948, %v3122
      %v3124 = vpop.f32.mrf.mxu0
      %v3125 = vadd.f32 %v2948, %v3124
      %3126 = vmatprep.mubr.bf16.mxu0 0
      %3127 = vmatmul.mubr.bf16.gmra.mxu0 %v3022
      %v3128 = vpop.f32.mrf.mxu0
      %v3129 = vadd.f32 %v2953, %v3128
      %v3130 = vpop.f32.mrf.mxu0
      %v3131 = vadd.f32 %v2953, %v3130
      %v3132 = vpop.f32.mrf.mxu0
      %v3133 = vadd.f32 %v2958, %v3132
      %v3134 = vpop.f32.mrf.mxu0
      %v3135 = vadd.f32 %v2958, %v3134
      %3136 = vdwg.mxu0
      %3137 = vmatprep.subr.bf16.mxu0 0
      %3138 = vmatpush1.bf16.msra.mxu0 0
      %3139 = vmatprep.subr.bf16.mxu0 0
      %3140 = vmatpush1.bf16.msra.mxu0 0
      %3141 = vmatprep.subr.bf16.mxu0 0
      %3142 = vmatpush1.bf16.msra.mxu0 0
      %3143 = vmatprep.subr.bf16.mxu0 0
      %3144 = vmatpush1.bf16.msra.mxu0 0
      %3145 = vmatprep.subr.bf16.mxu0 0
      %3146 = vmatpush1.bf16.msra.mxu0 0
      %3147 = vmatprep.subr.bf16.mxu0 0
      %3148 = vmatpush1.bf16.msra.mxu0 0
      %3149 = vmatprep.subr.bf16.mxu0 %v2863
      %3150 = vmatpush1.bf16.msra.mxu0 %v2862
      %3151 = vmatprep.subr.bf16.mxu0 %v2859
      %3152 = vmatpush1.bf16.msra.mxu0 %v2858
      %3153 = vmatprep.subr.bf16.mxu0 0
      %3154 = vmatpush2.bf16.msra.mxu0 0
      %3155 = vmatprep.subr.bf16.mxu0 0
      %3156 = vmatpush2.bf16.msra.mxu0 0
      %3157 = vmatprep.subr.bf16.mxu0 0
      %3158 = vmatpush2.bf16.msra.mxu0 0
      %3159 = vmatprep.subr.bf16.mxu0 0
      %3160 = vmatpush2.bf16.msra.mxu0 0
      %3161 = vmatprep.subr.bf16.mxu0 0
      %3162 = vmatpush2.bf16.msra.mxu0 0
      %3163 = vmatprep.subr.bf16.mxu0 0
      %3164 = vmatpush2.bf16.msra.mxu0 0
      %3165 = vmatprep.subr.bf16.mxu0 0
      %3166 = vmatpush2.bf16.msra.mxu0 0
      %3167 = vmatprep.subr.bf16.mxu0 0
      %3168 = vmatpush2.bf16.msra.mxu0 0
      %3169 = vmatprep.mubr.bf16.mxu0 0
      %3170 = vmatmul.mubr.bf16.gmra.mxu0 %v3001
      %v3171 = vpop.f32.mrf.mxu0
      %v3172 = vadd.f32 %v2883, %v3171
      %v3173 = vpop.f32.mrf.mxu0
      %v3174 = vadd.f32 %v2883, %v3173
      %v3175 = vpop.f32.mrf.mxu0
      %v3176 = vadd.f32 %v2888, %v3175
      %v3177 = vpop.f32.mrf.mxu0
      %v3178 = vadd.f32 %v2888, %v3177
      %3179 = vmatprep.mubr.bf16.mxu0 0
      %3180 = vmatmul.mubr.bf16.gmra.mxu0 %v3004
      %v3181 = vpop.f32.mrf.mxu0
      %v3182 = vadd.f32 %v2893, %v3181
      %v3183 = vpop.f32.mrf.mxu0
      %v3184 = vadd.f32 %v2893, %v3183
      %v3185 = vpop.f32.mrf.mxu0
      %v3186 = vadd.f32 %v2898, %v3185
      %v3187 = vpop.f32.mrf.mxu0
      %v3188 = vadd.f32 %v2898, %v3187
      %3189 = vmatprep.mubr.bf16.mxu0 0
      %3190 = vmatmul.mubr.bf16.gmra.mxu0 %v3007
      %v3191 = vpop.f32.mrf.mxu0
      %v3192 = vadd.f32 %v2903, %v3191
      %v3193 = vpop.f32.mrf.mxu0
      %v3194 = vadd.f32 %v2903, %v3193
      %v3195 = vpop.f32.mrf.mxu0
      %v3196 = vadd.f32 %v2908, %v3195
      %v3197 = vpop.f32.mrf.mxu0
      %v3198 = vadd.f32 %v2908, %v3197
      %3199 = vmatprep.mubr.bf16.mxu0 0
      %3200 = vmatmul.mubr.bf16.gmra.mxu0 %v3010
      %v3201 = vpop.f32.mrf.mxu0
      %v3202 = vadd.f32 %v2913, %v3201
      %v3203 = vpop.f32.mrf.mxu0
      %v3204 = vadd.f32 %v2913, %v3203
      %v3205 = vpop.f32.mrf.mxu0
      %v3206 = vadd.f32 %v2918, %v3205
      %v3207 = vpop.f32.mrf.mxu0
      %v3208 = vadd.f32 %v2918, %v3207
      %3209 = vmatprep.mubr.bf16.mxu0 0
      %3210 = vmatmul.mubr.bf16.gmra.mxu0 %v3013
      %v3211 = vpop.f32.mrf.mxu0
      %v3212 = vadd.f32 %v2923, %v3211
      %v3213 = vpop.f32.mrf.mxu0
      %v3214 = vadd.f32 %v2923, %v3213
      %v3215 = vpop.f32.mrf.mxu0
      %v3216 = vadd.f32 %v2928, %v3215
      %v3217 = vpop.f32.mrf.mxu0
      %v3218 = vadd.f32 %v2928, %v3217
      %3219 = vmatprep.mubr.bf16.mxu0 0
      %3220 = vmatmul.mubr.bf16.gmra.mxu0 %v3016
      %v3221 = vpop.f32.mrf.mxu0
      %v3222 = vadd.f32 %v2933, %v3221
      %v3223 = vpop.f32.mrf.mxu0
      %v3224 = vadd.f32 %v2933, %v3223
      %v3225 = vpop.f32.mrf.mxu0
      %v3226 = vadd.f32 %v2938, %v3225
      %v3227 = vpop.f32.mrf.mxu0
      %v3228 = vadd.f32 %v2938, %v3227
      %3229 = vmatprep.mubr.bf16.mxu0 0
      %3230 = vmatmul.mubr.bf16.gmra.mxu0 %v3019
      %v3231 = vpop.f32.mrf.mxu0
      %v3232 = vadd.f32 %v2943, %v3231
      %v3233 = vpop.f32.mrf.mxu0
      %v3234 = vadd.f32 %v2943, %v3233
      %v3235 = vpop.f32.mrf.mxu0
      %v3236 = vadd.f32 %v2948, %v3235
      %v3237 = vpop.f32.mrf.mxu0
      %v3238 = vadd.f32 %v2948, %v3237
      %3239 = vmatprep.mubr.bf16.mxu0 0
      %3240 = vmatmul.mubr.bf16.gmra.mxu0 %v3022
      %v3241 = vpop.f32.mrf.mxu0
      %v3242 = vadd.f32 %v2953, %v3241
      %v3243 = vpop.f32.mrf.mxu0
      %v3244 = vadd.f32 %v2953, %v3243
      %v3245 = vpop.f32.mrf.mxu0
      %v3246 = vadd.f32 %v2958, %v3245
      %v3247 = vpop.f32.mrf.mxu0
      %v3248 = vadd.f32 %v2958, %v3247
      %3249 = vdwg.mxu0
      %v3250 = vld [vmem:[%s381] sm:$0xff]
      %v3251 = vld [vmem:[%s381 + $0x8] sm:$0xff]
      %v3252 = vld [vmem:[%s381 + $0x10] sm:$0xff]
      %v3253 = vld [vmem:[%s381 + $0x18] sm:$0xff]
      %v3254 = vld [vmem:[%s381 + $0x20] sm:$0xff]
      %v3255 = vld [vmem:[%s381 + $0x28] sm:$0xff]
      %v3256 = vld [vmem:[%s381 + $0x30] sm:$0xff]
      %v3257 = vld [vmem:[%s381 + $0x38] sm:$0xff]
      %v3258 = vld [vmem:[%s381 + $0x40] sm:$0xff]
      %v3259 = vld [vmem:[%s381 + $0x48] sm:$0xff]
      %v3260 = vld [vmem:[%s381 + $0x50] sm:$0xff]
      %v3261 = vld [vmem:[%s381 + $0x58] sm:$0xff]
      %v3262 = vld [vmem:[%s381 + $0x60] sm:$0xff]
      %v3263 = vld [vmem:[%s381 + $0x68] sm:$0xff]
      %v3264 = vld [vmem:[%s381 + $0x70] sm:$0xff]
      %v3265 = vld [vmem:[%s381 + $0x78] sm:$0xff]
      %v3266 = vld [vmem:[%s381 + $0x80] sm:$0xff]
      %v3267 = vld [vmem:[%s381 + $0x88] sm:$0xff]
      %v3268 = vld [vmem:[%s381 + $0x90] sm:$0xff]
      %v3269 = vld [vmem:[%s381 + $0x98] sm:$0xff]
      %v3270 = vld [vmem:[%s381 + $0xa0] sm:$0xff]
      %v3271 = vld [vmem:[%s381 + $0xa8] sm:$0xff]
      %v3272 = vld [vmem:[%s381 + $0xb0] sm:$0xff]
      %v3273 = vld [vmem:[%s381 + $0xb8] sm:$0xff]
      %v3274 = vld [vmem:[%s381 + $0xc0] sm:$0xff]
      %v3275 = vld [vmem:[%s381 + $0xc8] sm:$0xff]
      %v3276 = vld [vmem:[%s381 + $0xd0] sm:$0xff]
      %v3277 = vld [vmem:[%s381 + $0xd8] sm:$0xff]
      %v3278 = vld [vmem:[%s381 + $0xe0] sm:$0xff]
      %v3279 = vld [vmem:[%s381 + $0xe8] sm:$0xff]
      %v3280 = vld [vmem:[%s381 + $0xf0] sm:$0xff]
      %v3281 = vld [vmem:[%s381 + $0xf8] sm:$0xff]
      %v3282 = vunpack.c.l.bf16 %v3250
      %v3283 = vunpack.c.h.bf16 %v3250
      %v3284 = vunpack.c.l.bf16 %v3251
      %v3285 = vunpack.c.h.bf16 %v3251
      %v3286 = vunpack.c.l.bf16 %v3252
      %v3287 = vunpack.c.h.bf16 %v3252
      %v3288 = vunpack.c.l.bf16 %v3253
      %v3289 = vunpack.c.h.bf16 %v3253
      %v3290 = vunpack.c.l.bf16 %v3254
      %v3291 = vunpack.c.h.bf16 %v3254
      %v3292 = vunpack.c.l.bf16 %v3255
      %v3293 = vunpack.c.h.bf16 %v3255
      %v3294 = vunpack.c.l.bf16 %v3256
      %v3295 = vunpack.c.h.bf16 %v3256
      %v3296 = vunpack.c.l.bf16 %v3257
      %v3297 = vunpack.c.h.bf16 %v3257
      %v3298 = vunpack.c.l.bf16 %v3258
      %v3299 = vunpack.c.h.bf16 %v3258
      %v3300 = vunpack.c.l.bf16 %v3259
      %v3301 = vunpack.c.h.bf16 %v3259
      %v3302 = vunpack.c.l.bf16 %v3260
      %v3303 = vunpack.c.h.bf16 %v3260
      %v3304 = vunpack.c.l.bf16 %v3261
      %v3305 = vunpack.c.h.bf16 %v3261
      %v3306 = vunpack.c.l.bf16 %v3262
      %v3307 = vunpack.c.h.bf16 %v3262
      %v3308 = vunpack.c.l.bf16 %v3263
      %v3309 = vunpack.c.h.bf16 %v3263
      %v3310 = vunpack.c.l.bf16 %v3264
      %v3311 = vunpack.c.h.bf16 %v3264
      %v3312 = vunpack.c.l.bf16 %v3265
      %v3313 = vunpack.c.h.bf16 %v3265
      %v3314 = vunpack.c.l.bf16 %v3266
      %v3315 = vunpack.c.h.bf16 %v3266
      %v3316 = vunpack.c.l.bf16 %v3267
      %v3317 = vunpack.c.h.bf16 %v3267
      %v3318 = vunpack.c.l.bf16 %v3268
      %v3319 = vunpack.c.h.bf16 %v3268
      %v3320 = vunpack.c.l.bf16 %v3269
      %v3321 = vunpack.c.h.bf16 %v3269
      %v3322 = vunpack.c.l.bf16 %v3270
      %v3323 = vunpack.c.h.bf16 %v3270
      %v3324 = vunpack.c.l.bf16 %v3271
      %v3325 = vunpack.c.h.bf16 %v3271
      %v3326 = vunpack.c.l.bf16 %v3272
      %v3327 = vunpack.c.h.bf16 %v3272
      %v3328 = vunpack.c.l.bf16 %v3273
      %v3329 = vunpack.c.h.bf16 %v3273
      %v3330 = vunpack.c.l.bf16 %v3274
      %v3331 = vunpack.c.h.bf16 %v3274
      %v3332 = vunpack.c.l.bf16 %v3275
      %v3333 = vunpack.c.h.bf16 %v3275
      %v3334 = vunpack.c.l.bf16 %v3276
      %v3335 = vunpack.c.h.bf16 %v3276
      %v3336 = vunpack.c.l.bf16 %v3277
      %v3337 = vunpack.c.h.bf16 %v3277
      %v3338 = vunpack.c.l.bf16 %v3278
      %v3339 = vunpack.c.h.bf16 %v3278
      %v3340 = vunpack.c.l.bf16 %v3279
      %v3341 = vunpack.c.h.bf16 %v3279
      %v3342 = vunpack.c.l.bf16 %v3280
      %v3343 = vunpack.c.h.bf16 %v3280
      %v3344 = vunpack.c.l.bf16 %v3281
      %v3345 = vunpack.c.h.bf16 %v3281
      %v3346 = vadd.f32 %v3059, %v3282
      %v3347 = vadd.f32 %v3061, %v3283
      %v3348 = vadd.f32 %v3172, %v3284
      %v3349 = vadd.f32 %v3174, %v3285
      %v3350 = vadd.f32 %v3063, %v3286
      %v3351 = vadd.f32 %v3065, %v3287
      %v3352 = vadd.f32 %v3176, %v3288
      %v3353 = vadd.f32 %v3178, %v3289
      %v3354 = vadd.f32 %v3069, %v3290
      %v3355 = vadd.f32 %v3071, %v3291
      %v3356 = vadd.f32 %v3182, %v3292
      %v3357 = vadd.f32 %v3184, %v3293
      %v3358 = vadd.f32 %v3073, %v3294
      %v3359 = vadd.f32 %v3075, %v3295
      %v3360 = vadd.f32 %v3186, %v3296
      %v3361 = vadd.f32 %v3188, %v3297
      %v3362 = vadd.f32 %v3079, %v3298
      %v3363 = vadd.f32 %v3081, %v3299
      %v3364 = vadd.f32 %v3192, %v3300
      %v3365 = vadd.f32 %v3194, %v3301
      %v3366 = vadd.f32 %v3083, %v3302
      %v3367 = vadd.f32 %v3085, %v3303
      %v3368 = vadd.f32 %v3196, %v3304
      %v3369 = vadd.f32 %v3198, %v3305
      %v3370 = vadd.f32 %v3089, %v3306
      %v3371 = vadd.f32 %v3091, %v3307
      %v3372 = vadd.f32 %v3202, %v3308
      %v3373 = vadd.f32 %v3204, %v3309
      %v3374 = vadd.f32 %v3093, %v3310
      %v3375 = vadd.f32 %v3095, %v3311
      %v3376 = vadd.f32 %v3206, %v3312
      %v3377 = vadd.f32 %v3208, %v3313
      %v3378 = vadd.f32 %v3099, %v3314
      %v3379 = vadd.f32 %v3101, %v3315
      %v3380 = vadd.f32 %v3212, %v3316
      %v3381 = vadd.f32 %v3214, %v3317
      %v3382 = vadd.f32 %v3103, %v3318
      %v3383 = vadd.f32 %v3105, %v3319
      %v3384 = vadd.f32 %v3216, %v3320
      %v3385 = vadd.f32 %v3218, %v3321
      %v3386 = vadd.f32 %v3109, %v3322
      %v3387 = vadd.f32 %v3111, %v3323
      %v3388 = vadd.f32 %v3222, %v3324
      %v3389 = vadd.f32 %v3224, %v3325
      %v3390 = vadd.f32 %v3113, %v3326
      %v3391 = vadd.f32 %v3115, %v3327
      %v3392 = vadd.f32 %v3226, %v3328
      %v3393 = vadd.f32 %v3228, %v3329
      %v3394 = vadd.f32 %v3119, %v3330
      %v3395 = vadd.f32 %v3121, %v3331
      %v3396 = vadd.f32 %v3232, %v3332
      %v3397 = vadd.f32 %v3234, %v3333
      %v3398 = vadd.f32 %v3123, %v3334
      %v3399 = vadd.f32 %v3125, %v3335
      %v3400 = vadd.f32 %v3236, %v3336
      %v3401 = vadd.f32 %v3238, %v3337
      %v3402 = vadd.f32 %v3129, %v3338
      %v3403 = vadd.f32 %v3131, %v3339
      %v3404 = vadd.f32 %v3242, %v3340
      %v3405 = vadd.f32 %v3244, %v3341
      %v3406 = vadd.f32 %v3133, %v3342
      %v3407 = vadd.f32 %v3135, %v3343
      %v3408 = vadd.f32 %v3246, %v3344
      %v3409 = vadd.f32 %v3248, %v3345
      %v3410 = vmax.f32 %v3346, 0.0
      %v3411 = vmax.f32 %v3347, 0.0
      %v3412 = vmax.f32 %v3348, 0.0
      %v3413 = vmax.f32 %v3349, 0.0
      %v3414 = vmax.f32 %v3350, 0.0
      %v3415 = vmax.f32 %v3351, 0.0
      %v3416 = vmax.f32 %v3352, 0.0
      %v3417 = vmax.f32 %v3353, 0.0
      %v3418 = vmax.f32 %v3354, 0.0
      %v3419 = vmax.f32 %v3355, 0.0
      %v3420 = vmax.f32 %v3356, 0.0
      %v3421 = vmax.f32 %v3357, 0.0
      %v3422 = vmax.f32 %v3358, 0.0
      %v3423 = vmax.f32 %v3359, 0.0
      %v3424 = vmax.f32 %v3360, 0.0
      %v3425 = vmax.f32 %v3361, 0.0
      %v3426 = vmax.f32 %v3362, 0.0
      %v3427 = vmax.f32 %v3363, 0.0
      %v3428 = vmax.f32 %v3364, 0.0
      %v3429 = vmax.f32 %v3365, 0.0
      %v3430 = vmax.f32 %v3366, 0.0
      %v3431 = vmax.f32 %v3367, 0.0
      %v3432 = vmax.f32 %v3368, 0.0
      %v3433 = vmax.f32 %v3369, 0.0
      %v3434 = vmax.f32 %v3370, 0.0
      %v3435 = vmax.f32 %v3371, 0.0
      %v3436 = vmax.f32 %v3372, 0.0
      %v3437 = vmax.f32 %v3373, 0.0
      %v3438 = vmax.f32 %v3374, 0.0
      %v3439 = vmax.f32 %v3375, 0.0
      %v3440 = vmax.f32 %v3376, 0.0
      %v3441 = vmax.f32 %v3377, 0.0
      %v3442 = vmax.f32 %v3378, 0.0
      %v3443 = vmax.f32 %v3379, 0.0
      %v3444 = vmax.f32 %v3380, 0.0
      %v3445 = vmax.f32 %v3381, 0.0
      %v3446 = vmax.f32 %v3382, 0.0
      %v3447 = vmax.f32 %v3383, 0.0
      %v3448 = vmax.f32 %v3384, 0.0
      %v3449 = vmax.f32 %v3385, 0.0
      %v3450 = vmax.f32 %v3386, 0.0
      %v3451 = vmax.f32 %v3387, 0.0
      %v3452 = vmax.f32 %v3388, 0.0
      %v3453 = vmax.f32 %v3389, 0.0
      %v3454 = vmax.f32 %v3390, 0.0
      %v3455 = vmax.f32 %v3391, 0.0
      %v3456 = vmax.f32 %v3392, 0.0
      %v3457 = vmax.f32 %v3393, 0.0
      %v3458 = vmax.f32 %v3394, 0.0
      %v3459 = vmax.f32 %v3395, 0.0
      %v3460 = vmax.f32 %v3396, 0.0
      %v3461 = vmax.f32 %v3397, 0.0
      %v3462 = vmax.f32 %v3398, 0.0
      %v3463 = vmax.f32 %v3399, 0.0
      %v3464 = vmax.f32 %v3400, 0.0
      %v3465 = vmax.f32 %v3401, 0.0
      %v3466 = vmax.f32 %v3402, 0.0
      %v3467 = vmax.f32 %v3403, 0.0
      %v3468 = vmax.f32 %v3404, 0.0
      %v3469 = vmax.f32 %v3405, 0.0
      %v3470 = vmax.f32 %v3406, 0.0
      %v3471 = vmax.f32 %v3407, 0.0
      %v3472 = vmax.f32 %v3408, 0.0
      %v3473 = vmax.f32 %v3409, 0.0
      %v3474 = vpack.c.bf16 %v3414, %v3410
      %v3475 = vpack.c.bf16 %v3415, %v3411
      %v3476 = vpack.c.bf16 %v3416, %v3412
      %v3477 = vpack.c.bf16 %v3417, %v3413
      %v3478 = vpack.c.bf16 %v3422, %v3418
      %v3479 = vpack.c.bf16 %v3423, %v3419
      %v3480 = vpack.c.bf16 %v3424, %v3420
      %v3481 = vpack.c.bf16 %v3425, %v3421
      %v3482 = vpack.c.bf16 %v3430, %v3426
      %v3483 = vpack.c.bf16 %v3431, %v3427
      %v3484 = vpack.c.bf16 %v3432, %v3428
      %v3485 = vpack.c.bf16 %v3433, %v3429
      %v3486 = vpack.c.bf16 %v3438, %v3434
      %v3487 = vpack.c.bf16 %v3439, %v3435
      %v3488 = vpack.c.bf16 %v3440, %v3436
      %v3489 = vpack.c.bf16 %v3441, %v3437
      %v3490 = vpack.c.bf16 %v3446, %v3442
      %v3491 = vpack.c.bf16 %v3447, %v3443
      %v3492 = vpack.c.bf16 %v3448, %v3444
      %v3493 = vpack.c.bf16 %v3449, %v3445
      %v3494 = vpack.c.bf16 %v3454, %v3450
      %v3495 = vpack.c.bf16 %v3455, %v3451
      %v3496 = vpack.c.bf16 %v3456, %v3452
      %v3497 = vpack.c.bf16 %v3457, %v3453
      %v3498 = vpack.c.bf16 %v3462, %v3458
      %v3499 = vpack.c.bf16 %v3463, %v3459
      %v3500 = vpack.c.bf16 %v3464, %v3460
      %v3501 = vpack.c.bf16 %v3465, %v3461
      %v3502 = vpack.c.bf16 %v3470, %v3466
      %v3503 = vpack.c.bf16 %v3471, %v3467
      %v3504 = vpack.c.bf16 %v3472, %v3468
      %v3505 = vpack.c.bf16 %v3473, %v3469
      %v3538 = vunpack.c.l.b16 %v3474
      %v3539 = vunpack.c.l.b16 %v3475
      %v3540 = vunpack.c.l.b16 %v3476
      %v3541 = vunpack.c.l.b16 %v3477
      %v3542 = vunpack.c.h.b16 %v3474
      %v3543 = vunpack.c.h.b16 %v3475
      %v3544 = vunpack.c.h.b16 %v3476
      %v3545 = vunpack.c.h.b16 %v3477
      %v3546 = vunpack.c.l.b16 %v3478
      %v3547 = vunpack.c.l.b16 %v3479
      %v3548 = vunpack.c.l.b16 %v3480
      %v3549 = vunpack.c.l.b16 %v3481
      %v3550 = vunpack.c.h.b16 %v3478
      %v3551 = vunpack.c.h.b16 %v3479
      %v3552 = vunpack.c.h.b16 %v3480
      %v3553 = vunpack.c.h.b16 %v3481
      %v3554 = vunpack.c.l.b16 %v3482
      %v3555 = vunpack.c.l.b16 %v3483
      %v3556 = vunpack.c.l.b16 %v3484
      %v3557 = vunpack.c.l.b16 %v3485
      %v3558 = vunpack.c.h.b16 %v3482
      %v3559 = vunpack.c.h.b16 %v3483
      %v3560 = vunpack.c.h.b16 %v3484
      %v3561 = vunpack.c.h.b16 %v3485
      %v3562 = vunpack.c.l.b16 %v3486
      %v3563 = vunpack.c.l.b16 %v3487
      %v3564 = vunpack.c.l.b16 %v3488
      %v3565 = vunpack.c.l.b16 %v3489
      %v3566 = vunpack.c.h.b16 %v3486
      %v3567 = vunpack.c.h.b16 %v3487
      %v3568 = vunpack.c.h.b16 %v3488
      %v3569 = vunpack.c.h.b16 %v3489
      %v3570 = vunpack.c.l.b16 %v3490
      %v3571 = vunpack.c.l.b16 %v3491
      %v3572 = vunpack.c.l.b16 %v3492
      %v3573 = vunpack.c.l.b16 %v3493
      %v3574 = vunpack.c.h.b16 %v3490
      %v3575 = vunpack.c.h.b16 %v3491
      %v3576 = vunpack.c.h.b16 %v3492
      %v3577 = vunpack.c.h.b16 %v3493
      %v3578 = vunpack.c.l.b16 %v3494
      %v3579 = vunpack.c.l.b16 %v3495
      %v3580 = vunpack.c.l.b16 %v3496
      %v3581 = vunpack.c.l.b16 %v3497
      %v3582 = vunpack.c.h.b16 %v3494
      %v3583 = vunpack.c.h.b16 %v3495
      %v3584 = vunpack.c.h.b16 %v3496
      %v3585 = vunpack.c.h.b16 %v3497
      %v3586 = vunpack.c.l.b16 %v3498
      %v3587 = vunpack.c.l.b16 %v3499
      %v3588 = vunpack.c.l.b16 %v3500
      %v3589 = vunpack.c.l.b16 %v3501
      %v3590 = vunpack.c.h.b16 %v3498
      %v3591 = vunpack.c.h.b16 %v3499
      %v3592 = vunpack.c.h.b16 %v3500
      %v3593 = vunpack.c.h.b16 %v3501
      %v3594 = vunpack.c.l.b16 %v3502
      %v3595 = vunpack.c.l.b16 %v3503
      %v3596 = vunpack.c.l.b16 %v3504
      %v3597 = vunpack.c.l.b16 %v3505
      %v3598 = vunpack.c.h.b16 %v3502
      %v3599 = vunpack.c.h.b16 %v3503
      %v3600 = vunpack.c.h.b16 %v3504
      %v3601 = vunpack.c.h.b16 %v3505
      %v3602 = vpack.c.b16 %v3539, %v3538
      %v3603 = vpack.c.b16 %v3541, %v3540
      %v3604 = vpack.c.b16 %v3543, %v3542
      %v3605 = vpack.c.b16 %v3545, %v3544
      %v3606 = vpack.c.b16 %v3547, %v3546
      %v3607 = vpack.c.b16 %v3549, %v3548
      %v3608 = vpack.c.b16 %v3551, %v3550
      %v3609 = vpack.c.b16 %v3553, %v3552
      %v3610 = vpack.c.b16 %v3555, %v3554
      %v3611 = vpack.c.b16 %v3557, %v3556
      %v3612 = vpack.c.b16 %v3559, %v3558
      %v3613 = vpack.c.b16 %v3561, %v3560
      %v3614 = vpack.c.b16 %v3563, %v3562
      %v3615 = vpack.c.b16 %v3565, %v3564
      %v3616 = vpack.c.b16 %v3567, %v3566
      %v3617 = vpack.c.b16 %v3569, %v3568
      %v3618 = vpack.c.b16 %v3571, %v3570
      %v3619 = vpack.c.b16 %v3573, %v3572
      %v3620 = vpack.c.b16 %v3575, %v3574
      %v3621 = vpack.c.b16 %v3577, %v3576
      %v3622 = vpack.c.b16 %v3579, %v3578
      %v3623 = vpack.c.b16 %v3581, %v3580
      %v3624 = vpack.c.b16 %v3583, %v3582
      %v3625 = vpack.c.b16 %v3585, %v3584
      %v3626 = vpack.c.b16 %v3587, %v3586
      %v3627 = vpack.c.b16 %v3589, %v3588
      %v3628 = vpack.c.b16 %v3591, %v3590
      %v3629 = vpack.c.b16 %v3593, %v3592
      %v3630 = vpack.c.b16 %v3595, %v3594
      %v3631 = vpack.c.b16 %v3597, %v3596
      %v3632 = vpack.c.b16 %v3599, %v3598
      %v3633 = vpack.c.b16 %v3601, %v3600
      %3666 = vst [vmem:[%s386] sm:$0xff] %v3602
      %3667 = vst [vmem:[%s386 + $0x8] sm:$0xff] %v3603
      %3668 = vst [vmem:[%s386 + $0x10] sm:$0xff] %v3604
      %3669 = vst [vmem:[%s386 + $0x18] sm:$0xff] %v3605
      %3670 = vst [vmem:[%s386 + $0x20] sm:$0xff] %v3606
      %3671 = vst [vmem:[%s386 + $0x28] sm:$0xff] %v3607
      %3672 = vst [vmem:[%s386 + $0x30] sm:$0xff] %v3608
      %3673 = vst [vmem:[%s386 + $0x38] sm:$0xff] %v3609
      %3674 = vst [vmem:[%s386 + $0x40] sm:$0xff] %v3610
      %3675 = vst [vmem:[%s386 + $0x48] sm:$0xff] %v3611
      %3676 = vst [vmem:[%s386 + $0x50] sm:$0xff] %v3612
      %3677 = vst [vmem:[%s386 + $0x58] sm:$0xff] %v3613
      %3678 = vst [vmem:[%s386 + $0x60] sm:$0xff] %v3614
      %3679 = vst [vmem:[%s386 + $0x68] sm:$0xff] %v3615
      %3680 = vst [vmem:[%s386 + $0x70] sm:$0xff] %v3616
      %3681 = vst [vmem:[%s386 + $0x78] sm:$0xff] %v3617
      %3682 = vst [vmem:[%s386 + $0x80] sm:$0xff] %v3618
      %3683 = vst [vmem:[%s386 + $0x88] sm:$0xff] %v3619
      %3684 = vst [vmem:[%s386 + $0x90] sm:$0xff] %v3620
      %3685 = vst [vmem:[%s386 + $0x98] sm:$0xff] %v3621
      %3686 = vst [vmem:[%s386 + $0xa0] sm:$0xff] %v3622
      %3687 = vst [vmem:[%s386 + $0xa8] sm:$0xff] %v3623
      %3688 = vst [vmem:[%s386 + $0xb0] sm:$0xff] %v3624
      %3689 = vst [vmem:[%s386 + $0xb8] sm:$0xff] %v3625
      %3690 = vst [vmem:[%s386 + $0xc0] sm:$0xff] %v3626
      %3691 = vst [vmem:[%s386 + $0xc8] sm:$0xff] %v3627
      %3692 = vst [vmem:[%s386 + $0xd0] sm:$0xff] %v3628
      %3693 = vst [vmem:[%s386 + $0xd8] sm:$0xff] %v3629
      %3694 = vst [vmem:[%s386 + $0xe0] sm:$0xff] %v3630
      %3695 = vst [vmem:[%s386 + $0xe8] sm:$0xff] %v3631
      %3696 = vst [vmem:[%s386 + $0xf0] sm:$0xff] %v3632
      %3697 = vst [vmem:[%s386 + $0xf8] sm:$0xff] %v3633
      %p3698 = scmp.lt.s32.totalorder %s22, 1
      %s3699 = scalar_select %p3698, %s22, 1
      %s3700 = smul.addr %s3699, 64
      %s3701 = smul.addr %s3700, 4
      %s3702 = scalar_lea.vmem %s11, %s3701
      // Predicated region
      $region65: #{res_bottleneck_forward.1} parent=63 // pred_check
        %p3703 = pneg %p276
      $region66: #{res_bottleneck_forward.1} parent=63 // pred_check_branch
        %3705 = sbr.rel (%p3703) target = $region68
      $region67: #{res_bottleneck_forward.1} parent=63 // pred_region
        _
      $region68: #{res_bottleneck_forward.1} parent=63 // pred_fallthru
        _
    $region64: #{res_bottleneck_forward.1} parent=5 // pred_fallthru
      _
    %p3706 = scmp.le.s32.totalorder 2, %s17
    // Predicated region
    $region69: #{res_bottleneck_forward.1} parent=5 // pred_check
      %p3707 = pneg %p3706
    $region70: #{res_bottleneck_forward.1} parent=5 // pred_check_branch
      %3709 = sbr.rel (%p3707) target = $region72
    $region71: #{res_bottleneck_forward.1} parent=5 // pred_region
      %s3710 = ssub.s32 %s17, 2
      // Predicated region
      $region73: #{res_bottleneck_forward.1} parent=71 // pred_check
        %p3711 = pneg %p282
      $region74: #{res_bottleneck_forward.1} parent=71 // pred_check_branch
        %3713 = sbr.rel (%p3711) target = $region76
      $region75: #{res_bottleneck_forward.1} parent=71 // pred_region
        %p3714 = scmp.lt.s32.totalorder %s23, 1
        %s3715 = scalar_select %p3714, %s23, 1
        %s3716 = smul.addr %s3715, 64
        %s3717 = smul.addr %s3716, 4
        %s3718 = scalar_lea.vmem %s11, %s3717
      $region76: #{res_bottleneck_forward.1} parent=71 // pred_fallthru
        _
    $region72: #{res_bottleneck_forward.1} parent=5 // pred_fallthru
      _
  $region6: #{res_bottleneck_forward.1} parent=0 // loop_footer
    %s21 = sadd.s32 1, %s17
  $region7: #{res_bottleneck_forward.1} parent=0 // loop_footer_branch
    %16 = sbr.rel target = $region3
  $region8: #{res_bottleneck_forward.1} parent=0 // loop_exit
    _

</llo_original>
